<compile_context>
chip_gen: v7x
topology: tpu7x:2x2x1
jax: 0.10.0
libtpu: 0.0.40
codegen_flags: <defaults>
</compile_context>

<pallas_src>
import functools

import jax
import jax.numpy as jnp
from jax.experimental import pallas as pl
from jax.experimental.pallas import tpu as pltpu

LANE = 128


def _cdiv(a, b):
    return -(-a // b)


def _round_up(x, m):
    return _cdiv(x, m) * m


# -----------------------------------------------------------------------------
# Pallas kernel: fused (matmul -> +bias -> ReLU)^L -> max over each group.
# BatchNorm is folded into the weights/bias on the host (w' = w * scale), so
# the epilogue is a single add+ReLU.  Matmuls run bf16 with f32 accumulation.
# -----------------------------------------------------------------------------
def _mlp_maxpool_kernel(n_layers, tile_groups, group_size, x_ref, *refs):
    o_ref = refs[2 * n_layers]
    h = x_ref[...]                                      # bf16 (rows, c_in)
    for li in range(n_layers):
        w = refs[2 * li][...]                           # bf16 (c_in, c_out), BN folded
        b = refs[2 * li + 1][...]                       # f32  (1,    c_out)
        k_dim = w.shape[0]
        if li == 0 and k_dim <= 8:
            # Tiny-K first layer (K=3 fills only 3 of 128/256 MXU contraction
            # rows): VPU broadcast-FMA chain instead of a near-empty systolic
            # pass; the VALU slot has ample slack in this kernel.
            hf = h.astype(jnp.float32)
            wf = w.astype(jnp.float32)
            acc = hf[:, 0:1] * wf[0:1, :]
            for k in range(1, k_dim):
                acc = acc + hf[:, k:k + 1] * wf[k:k + 1, :]
        else:
            acc = jnp.dot(h, w, preferred_element_type=jnp.float32)
        act = jnp.maximum(acc + b, 0.0)                 # f32 epilogue
        h = act.astype(jnp.bfloat16) if li + 1 < n_layers else act
    c_out = h.shape[-1]
    # group_size is a multiple of 8 at every call site and c_out is a multiple
    # of 128 (lane-padded), so this reshape is tile-aligned and the axis-1 max
    # lowers to an XLU sublane reduce (no relayout copy).
    o_ref[...] = jnp.max(h.reshape(tile_groups, group_size, c_out), axis=1)


def _vmem_bytes(tile_groups, group_size, c_in, layer_params):
    """Per-step VMEM footprint, counting lane padding to 128, default
    double-buffering of every operand, and concurrently-live activations."""
    rows = tile_groups * group_size
    total = 2 * rows * _round_up(c_in, LANE) * 2         # bf16 input, 2 buffers
    peak_act = 0
    prev_c = c_in
    for w, b in layer_params:
        c_out = w.shape[1]
        # f32 accumulator + previous bf16 activation can be live together.
        live = rows * _round_up(c_out, LANE) * 4 + rows * _round_up(prev_c, LANE) * 2
        peak_act = max(peak_act, live)
        total += 2 * (_round_up(w.shape[0], 8) * _round_up(c_out, LANE) * 2
                      + _round_up(b.shape[0], 8) * _round_up(c_out, LANE) * 4)
        prev_c = c_out
    total += peak_act
    c_last = _round_up(layer_params[-1][0].shape[1], LANE)
    total += 2 * tile_groups * c_last * 4                # f32 output, 2 buffers
    return total


def _vmem_caps():
    """(tile-selection budget, hard cap for vmem_limit_bytes), per generation."""
    try:
        cap = int(pltpu.get_tpu_info().vmem_capacity_bytes)
    except Exception:
        cap = 64 << 20                      # conservative: v7x has 64 MiB / core
    budget = min(cap // 2, 64 << 20)        # 32 MiB on v7x, 64 MiB on v5e/v6e
    limit_cap = min((cap * 3) // 4, 96 << 20)   # 48 MiB on v7x, 96 MiB on v5e/v6e
    return budget, limit_cap


def _choose_tile_groups(n_groups, group_size, c_in, layer_params, vmem_budget,
                        target_bytes=2 << 20):
    """Largest group-tile s.t. the per-step bf16 input slab is ~target_bytes
    (amortizes per-step overhead), VMEM fits the generation budget, and >=2
    grid steps remain when there is enough work (v7x megacore)."""
    tg = _cdiv(target_bytes, max(group_size * c_in * 2, 1))
    tg = min(tg, n_groups)
    if n_groups >= 16:
        tg = min(tg, max(n_groups // 2, 1))   # keep >=2 steps for 2 TCs on v7x
    tg = max(tg, 1)
    while tg > 1 and _vmem_bytes(tg, group_size, c_in, layer_params) > vmem_budget:
        tg = max(tg // 2, 1)
    if tg < n_groups:
        # Output block's sublane dim must be a multiple of 8 (or full extent).
        tg = min(max((tg // 8) * 8, 8), n_groups)
        if tg % 8 != 0 and tg != n_groups:
            tg = n_groups
    return max(tg, 1)


def mlp_maxpool(x_flat, layer_params, group_size, tile_groups=None):
    """x_flat: (n_groups*group_size, C_in) f32/bf16 -> (n_groups, C_out) f32."""
    rows, c_in = x_flat.shape
    assert rows % group_size == 0
    n_groups = rows // group_size
    n_layers = len(layer_params)

    # Lane-dense output: pad the last folded weight/bias to a multiple of 128
    # output columns so the output block stores with full-lane (unmasked) vst;
    # the extra MXU columns are free at these widths and sliced off below.
    layer_params = list(layer_params)
    w_last, b_last = layer_params[-1]
    c_out = w_last.shape[1]
    c_out_pad = _round_up(c_out, LANE)
    if c_out_pad != c_out:
        w_last = jnp.pad(w_last, ((0, 0), (0, c_out_pad - c_out)))
        b_last = jnp.pad(b_last, ((0, 0), (0, c_out_pad - c_out)))
        layer_params[-1] = (w_last, b_last)

    vmem_budget, vmem_limit_cap = _vmem_caps()
    if tile_groups is None:
        tile_groups = _choose_tile_groups(n_groups, group_size, c_in,
                                          layer_params, vmem_budget)

    # Pad the group axis so the grid divides evenly; padded groups produce
    # finite junk (ReLU(bias)) rows that are sliced off right below.
    n_groups_pad = _cdiv(n_groups, tile_groups) * tile_groups
    pad_rows = (n_groups_pad - n_groups) * group_size
    if pad_rows:
        x_flat = jnp.pad(x_flat, ((0, pad_rows), (0, 0)))
    # bf16 activations halve HBM traffic of the dominant grouped-input read
    # (callers already hand the grouped tensor over in bf16, written once).
    x_bf16 = x_flat if x_flat.dtype == jnp.bfloat16 else x_flat.astype(jnp.bfloat16)

    tile_rows = tile_groups * group_size
    kernel = functools.partial(_mlp_maxpool_kernel, n_layers, tile_groups,
                               group_size)

    in_specs = [pl.BlockSpec((tile_rows, c_in), lambda i: (i, 0))]
    args = [x_bf16]
    # TODO(synk): mark the constant weight/bias specs pipeline_mode=pl.Buffered(1)
    # to reclaim their second pipeline buffer once that knob is load-bearing here.
    for (w, b) in layer_params:
        in_specs.append(pl.BlockSpec(w.shape, lambda i: (0, 0)))
        args.append(w)                                   # bf16, BN scale folded
        in_specs.append(pl.BlockSpec(b.shape, lambda i: (0, 0)))
        args.append(b)                                   # f32 bias

    est = _vmem_bytes(tile_groups, group_size, c_in, layer_params)
    vmem_limit = int(min(vmem_limit_cap,
                         max(est + est // 4 + (4 << 20), 32 << 20)))

    rows_pad = n_groups_pad * group_size
    flops = 0
    bytes_accessed = rows_pad * c_in * 2 + n_groups_pad * c_out_pad * 4
    for (w, b) in layer_params:
        flops += 2 * rows_pad * w.shape[0] * w.shape[1]
        bytes_accessed += w.size * 2 + b.size * 4

    out = pl.pallas_call(
        kernel,
        grid=(n_groups_pad // tile_groups,),
        in_specs=in_specs,
        out_specs=pl.BlockSpec((tile_groups, c_out_pad), lambda i: (i, 0)),
        out_shape=jax.ShapeDtypeStruct((n_groups_pad, c_out_pad), jnp.float32),
        compiler_params=pltpu.CompilerParams(
            dimension_semantics=("parallel",),
            vmem_limit_bytes=vmem_limit),
        cost_estimate=pl.CostEstimate(flops=flops, transcendentals=0,
                                      bytes_accessed=bytes_accessed),
    )(*args)
    # Keep the un-padding slice adjacent to the kernel call: padded groups and
    # padded output lanes hold junk that must never escape this function.
    return out[:n_groups, :c_out]


# -----------------------------------------------------------------------------
# JAX glue: furthest point sampling, ball query, gathers
# TODO(synk): data-dependent gather / FPS left in plain JAX; a fully fused
# version would prefetch indices via PrefetchScalarGridSpec and DMA-gather the
# per-tile rows with memory_space=pl.ANY + make_async_copy (paged-attn style).
# -----------------------------------------------------------------------------
def furthest_point_sample(xyz, npoint):
    """xyz: (B, N, 3) -> (B, npoint) int32 (matches mmcv FPS semantics)."""
    N = xyz.shape[1]

    def one(pts):
        def body(j, state):
            idx, dists, farthest = state
            idx = idx.at[j].set(farthest)
            cur = pts[farthest]
            d2 = jnp.sum((pts - cur) ** 2, axis=-1)
            dists = jnp.minimum(dists, d2)
            farthest = jnp.argmax(dists).astype(jnp.int32)
            return idx, dists, farthest

        idx0 = jnp.zeros((npoint,), jnp.int32)
        d0 = jnp.full((N,), 1e10, jnp.float32)
        idx, _, _ = jax.lax.fori_loop(0, npoint, body,
                                      (idx0, d0, jnp.int32(0)))
        return idx

    return jax.vmap(one)(xyz)


def ball_query(xyz, new_xyz, radius, nsample):
    """Matches mmcv ball_query: first nsample indices with d2 < r^2, padded
    with the first found index (or 0 if none).  Uses top-k, not a full sort."""
    N = xyz.shape[1]
    d2 = jnp.sum((new_xyz[:, :, None, :] - xyz[:, None, :, :]) ** 2, -1)
    mask = d2 < radius * radius
    cand = jnp.where(mask, jnp.arange(N, dtype=jnp.int32)[None, None, :],
                     jnp.int32(N))
    neg_topk, _ = jax.lax.top_k(-cand, nsample)   # k smallest candidates
    idx = -neg_topk                               # ascending, padded with N
    first = idx[..., :1]
    idx = jnp.where(idx >= N, first, idx)
    idx = jnp.where(idx >= N, 0, idx)
    return idx.astype(jnp.int32)


def batched_index(arr, idx):
    """arr: (B, N, C), idx: (B, K) -> (B, K, C)."""
    return jax.vmap(lambda a, i: a[i])(arr, idx)


def sa_module(xyz, feats, npoint, radius, nsample, mlp_params):
    """PointSAModule (single-scale, use_xyz=True, normalize_xyz=True, max-pool)."""
    B = xyz.shape[0]
    fps_idx = furthest_point_sample(xyz, npoint)                    # (B, P)
    new_xyz = batched_index(xyz, fps_idx)                           # (B, P, 3)
    idx = ball_query(xyz, new_xyz, radius, nsample)                 # (B, P, S)
    flat_idx = idx.reshape(B, npoint * nsample)
    # TODO(synk): fuse this gather + normalize + concat into the Pallas kernel
    # (scalar-prefetched indices + pl.ANY xyz/feats + DMA gather) to avoid
    # materializing the grouped tensor in HBM at all.
    grouped_xyz = batched_index(xyz, flat_idx).reshape(B, npoint, nsample, 3)
    diff = (grouped_xyz - new_xyz[:, :, None, :]) / radius          # normalize_xyz
    diff = diff.astype(jnp.bfloat16)        # grouped tensor written once, in bf16
    if feats is not None:
        gfeat = batched_index(feats.astype(jnp.bfloat16), flat_idx)
        gfeat = gfeat.reshape(B, npoint, nsample, -1)
        g = jnp.concatenate([diff, gfeat], axis=-1)                 # use_xyz
    else:
        g = diff
    c_in = g.shape[-1]
    new_feat = mlp_maxpool(g.reshape(B * npoint * nsample, c_in),
                           mlp_params, group_size=nsample)
    return new_xyz, new_feat.reshape(B, npoint, -1), fps_idx


# -----------------------------------------------------------------------------
# Parameter init (deterministic, folds BatchNorm scale+bias into conv weights)
# -----------------------------------------------------------------------------
def init_mlp_params(key, channels, eps=1e-3):
    params = []
    for i in range(len(channels) - 1):
        key, k_w, k_g, k_b = jax.random.split(key, 4)
        c_in, c_out = channels[i], channels[i + 1]
        w = 0.1 * jax.random.normal(k_w, (c_in, c_out), jnp.float32)
        gamma = 1.0 + 0.1 * jax.random.normal(k_g, (c_out,), jnp.float32)
        beta = 0.1 * jax.random.normal(k_b, (c_out,), jnp.float32)
        mean = jnp.zeros((c_out,), jnp.float32)
        var = jnp.ones((c_out,), jnp.float32)
        scale = gamma / jnp.sqrt(var + eps)
        bias = beta - mean * scale
        # Fold the BN scale into the conv weight: (x @ W) * s == x @ (W * s).
        w_folded = (w * scale[None, :]).astype(jnp.bfloat16)
        params.append((w_folded, bias.reshape(1, c_out).astype(jnp.float32)))
    return key, params


def build_pointnet2_params(key, in_channels, sa_channels, fa_out=1024):
    sa_params = []
    sa_in = in_channels - 3
    for chans in sa_channels:
        mlp = [sa_in + 3] + list(chans)   # use_xyz=True adds 3 input channels
        key, p = init_mlp_params(key, mlp)
        sa_params.append(p)
        sa_in = chans[-1]
    key, fa_params = init_mlp_params(key, [sa_in + 3, fa_out])
    return sa_params, fa_params


# -----------------------------------------------------------------------------
# Full forward
# -----------------------------------------------------------------------------
def pointnet2_forward(points, sa_params, fa_params, num_points, radius,
                      num_samples):
    xyz = points[..., 0:3]
    feats = points[..., 3:] if points.shape[-1] > 3 else None  # channel-last
    B, N = xyz.shape[:2]
    indices = jnp.tile(jnp.arange(N, dtype=jnp.int32)[None, :], (B, 1))

    sa_xyz, sa_feat, sa_idx = [xyz], [feats], [indices]
    for i in range(len(num_points)):
        cur_xyz, cur_feat, cur_idx = sa_module(
            sa_xyz[i], sa_feat[i], num_points[i], radius[i], num_samples[i],
            sa_params[i])
        sa_xyz.append(cur_xyz)
        sa_feat.append(cur_feat)
        sa_idx.append(jnp.take_along_axis(sa_idx[-1], cur_idx, axis=1))

    # FA module: Conv1d(.., 1024, 1, bias=False) + BN + ReLU + AdaptiveMaxPool1d(1)
    # TODO(synk): on v7x this single-tile call uses one TensorCore; a 2-D grid
    # splitting the pooled axis with a partial-max accumulator would use both.
    fa_in = jnp.concatenate([sa_xyz[-1], sa_feat[-1]], axis=-1)   # (B, P, 3+C)
    B_, P, C = fa_in.shape
    feat = mlp_maxpool(fa_in.reshape(B_ * P, C), fa_params,
                       group_size=P)                              # (B, 1024)
    return feat[..., None]                                        # (B, 1024, 1)


if __name__ == "__main__":
    # Small configuration consistent with the module's constructor args.
    B, N = 2, 128
    in_channels = 3
    num_points = (64, 32, 16)
    radius = (0.3, 0.5, 0.7)
    num_samples = (8, 8, 8)
    sa_channels = ((16, 16, 32), (32, 32, 64), (64, 64, 64))

    key = jax.random.PRNGKey(0)
    key, k_pts = jax.random.split(key)
    points = jax.random.uniform(k_pts, (B, N, in_channels), jnp.float32)

    sa_params, fa_params = build_pointnet2_params(
        jax.random.PRNGKey(1), in_channels, sa_channels, fa_out=1024)

    fwd = jax.jit(functools.partial(
        pointnet2_forward,
        sa_params=sa_params, fa_params=fa_params,
        num_points=num_points, radius=radius, num_samples=num_samples))

    feat = fwd(points)
    jax.block_until_ready(feat)
    assert feat.shape == (B, 1024, 1), feat.shape
    assert bool(jnp.all(jnp.isfinite(feat)))
    print("KERNEL_OK")
</pallas_src>

<mosaic_0001>
module attributes {stable_mosaic.version = 11 : i64} {
  func.func @_mlp_maxpool_kernel(%arg0: i32, %arg1: memref<512x3xbf16, #tpu.memory_space<vmem>>, %arg2: memref<3x16xbf16, #tpu.memory_space<vmem>>, %arg3: memref<1x16xf32, #tpu.memory_space<vmem>>, %arg4: memref<16x16xbf16, #tpu.memory_space<vmem>>, %arg5: memref<1x16xf32, #tpu.memory_space<vmem>>, %arg6: memref<16x128xbf16, #tpu.memory_space<vmem>>, %arg7: memref<1x128xf32, #tpu.memory_space<vmem>>, %arg8: memref<64x128xf32, #tpu.memory_space<vmem>>) attributes {dimension_semantics = [#tpu.dimension_semantics<parallel>], iteration_bounds = array<i64: 2>, scalar_prefetch = 0 : i64, scratch_operands = 0 : i64, tpu.core_type = #tpu.core_type<tc>, window_params = [{transform_indices = @transform_0, window_bounds = array<i64: 512, 3>}, {pipeline_mode = #tpu.pipeline_mode<synchronous>, transform_indices = @transform_1, window_bounds = array<i64: 3, 16>}, {pipeline_mode = #tpu.pipeline_mode<synchronous>, transform_indices = @transform_2, window_bounds = array<i64: 1, 16>}, {pipeline_mode = #tpu.pipeline_mode<synchronous>, transform_indices = @transform_3, window_bounds = array<i64: 16, 16>}, {pipeline_mode = #tpu.pipeline_mode<synchronous>, transform_indices = @transform_4, window_bounds = array<i64: 1, 16>}, {pipeline_mode = #tpu.pipeline_mode<synchronous>, transform_indices = @transform_5, window_bounds = array<i64: 16, 128>}, {pipeline_mode = #tpu.pipeline_mode<synchronous>, transform_indices = @transform_6, window_bounds = array<i64: 1, 128>}, {transform_indices = @transform_7, window_bounds = array<i64: 64, 128>}]} {
    %c0 = arith.constant 0 : index
    %c0_0 = arith.constant 0 : index
    %0 = vector.load %arg1[%c0, %c0_0] : memref<512x3xbf16, #tpu.memory_space<vmem>>, vector<512x3xbf16>
    %c0_1 = arith.constant 0 : index
    %c0_2 = arith.constant 0 : index
    %1 = vector.load %arg2[%c0_1, %c0_2] : memref<3x16xbf16, #tpu.memory_space<vmem>>, vector<3x16xbf16>
    %c0_3 = arith.constant 0 : index
    %c0_4 = arith.constant 0 : index
    %2 = vector.load %arg3[%c0_3, %c0_4] : memref<1x16xf32, #tpu.memory_space<vmem>>, vector<1x16xf32>
    %3 = arith.extf %0 : vector<512x3xbf16> to vector<512x3xf32>
    %4 = arith.extf %1 : vector<3x16xbf16> to vector<3x16xf32>
    %5 = vector.extract_strided_slice %3 {offsets = [0, 0], sizes = [512, 1], strides = [1, 1]} : vector<512x3xf32> to vector<512x1xf32>
    %6 = vector.extract_strided_slice %4 {offsets = [0, 0], sizes = [1, 16], strides = [1, 1]} : vector<3x16xf32> to vector<1x16xf32>
    %7 = vector.broadcast %5 : vector<512x1xf32> to vector<512x16xf32>
    %8 = vector.broadcast %6 : vector<1x16xf32> to vector<512x16xf32>
    %9 = arith.mulf %7, %8 : vector<512x16xf32>
    %10 = vector.extract_strided_slice %3 {offsets = [0, 1], sizes = [512, 1], strides = [1, 1]} : vector<512x3xf32> to vector<512x1xf32>
    %11 = vector.extract_strided_slice %4 {offsets = [1, 0], sizes = [1, 16], strides = [1, 1]} : vector<3x16xf32> to vector<1x16xf32>
    %12 = vector.broadcast %10 : vector<512x1xf32> to vector<512x16xf32>
    %13 = vector.broadcast %11 : vector<1x16xf32> to vector<512x16xf32>
    %14 = arith.mulf %12, %13 : vector<512x16xf32>
    %15 = arith.addf %9, %14 : vector<512x16xf32>
    %16 = vector.extract_strided_slice %3 {offsets = [0, 2], sizes = [512, 1], strides = [1, 1]} : vector<512x3xf32> to vector<512x1xf32>
    %17 = vector.extract_strided_slice %4 {offsets = [2, 0], sizes = [1, 16], strides = [1, 1]} : vector<3x16xf32> to vector<1x16xf32>
    %18 = vector.broadcast %16 : vector<512x1xf32> to vector<512x16xf32>
    %19 = vector.broadcast %17 : vector<1x16xf32> to vector<512x16xf32>
    %20 = arith.mulf %18, %19 : vector<512x16xf32>
    %21 = arith.addf %15, %20 : vector<512x16xf32>
    %22 = vector.broadcast %2 : vector<1x16xf32> to vector<512x16xf32>
    %23 = arith.addf %21, %22 : vector<512x16xf32>
    %cst = arith.constant 0.000000e+00 : f32
    %24 = vector.broadcast %cst : f32 to vector<512x16xf32>
    %25 = arith.maximumf %23, %24 : vector<512x16xf32>
    %26 = arith.truncf %25 : vector<512x16xf32> to vector<512x16xbf16>
    %c0_5 = arith.constant 0 : index
    %c0_6 = arith.constant 0 : index
    %27 = vector.load %arg4[%c0_5, %c0_6] : memref<16x16xbf16, #tpu.memory_space<vmem>>, vector<16x16xbf16>
    %c0_7 = arith.constant 0 : index
    %c0_8 = arith.constant 0 : index
    %28 = vector.load %arg5[%c0_7, %c0_8] : memref<1x16xf32, #tpu.memory_space<vmem>>, vector<1x16xf32>
    %cst_9 = arith.constant dense<0.000000e+00> : vector<512x16xf32>
    %29 = tpu.matmul %26, %27, %cst_9 {dimension_numbers = #tpu.dot_dimension_numbers<[1], [0], [0], [1], [0, 0, 1, 1], [], []>} : vector<512x16xbf16>, vector<16x16xbf16>, vector<512x16xf32> -> vector<512x16xf32>
    %30 = vector.broadcast %28 : vector<1x16xf32> to vector<512x16xf32>
    %31 = arith.addf %29, %30 : vector<512x16xf32>
    %cst_10 = arith.constant 0.000000e+00 : f32
    %32 = vector.broadcast %cst_10 : f32 to vector<512x16xf32>
    %33 = arith.maximumf %31, %32 : vector<512x16xf32>
    %34 = arith.truncf %33 : vector<512x16xf32> to vector<512x16xbf16>
    %c0_11 = arith.constant 0 : index
    %c0_12 = arith.constant 0 : index
    %35 = vector.load %arg6[%c0_11, %c0_12] : memref<16x128xbf16, #tpu.memory_space<vmem>>, vector<16x128xbf16>
    %c0_13 = arith.constant 0 : index
    %c0_14 = arith.constant 0 : index
    %36 = vector.load %arg7[%c0_13, %c0_14] : memref<1x128xf32, #tpu.memory_space<vmem>>, vector<1x128xf32>
    %cst_15 = arith.constant dense<0.000000e+00> : vector<512x128xf32>
    %37 = tpu.matmul %34, %35, %cst_15 {dimension_numbers = #tpu.dot_dimension_numbers<[1], [0], [0], [1], [0, 0, 1, 1], [], []>} : vector<512x16xbf16>, vector<16x128xbf16>, vector<512x128xf32> -> vector<512x128xf32>
    %38 = vector.broadcast %36 : vector<1x128xf32> to vector<512x128xf32>
    %39 = arith.addf %37, %38 : vector<512x128xf32>
    %cst_16 = arith.constant 0.000000e+00 : f32
    %40 = vector.broadcast %cst_16 : f32 to vector<512x128xf32>
    %41 = arith.maximumf %39, %40 : vector<512x128xf32>
    %42 = vector.shape_cast %41 : vector<512x128xf32> to vector<64x8x128xf32>
    %cst_17 = arith.constant dense<0xFF800000> : vector<64x128xf32>
    %43 = vector.multi_reduction <maximumf>, %42, %cst_17 [1] : vector<64x8x128xf32> to vector<64x128xf32>
    %c0_18 = arith.constant 0 : index
    %c0_19 = arith.constant 0 : index
    %44 = vector.load %arg8[%c0_18, %c0_19] : memref<64x128xf32, #tpu.memory_space<vmem>>, vector<64x128xf32>
    tpu.vector_store %arg8[%c0_18, %c0_19], %43 {strides = array<i32>} : memref<64x128xf32, #tpu.memory_space<vmem>>, vector<64x128xf32>,
    return
  }
  func.func @transform_0(%arg0: i32) -> (i32, i32) {
    %c0_i32 = arith.constant 0 : i32
    %c0_i32_0 = arith.constant 0 : i32
    return %arg0, %c0_i32 : i32, i32
  }
  func.func @transform_1(%arg0: i32) -> (i32, i32) {
    %c0_i32 = arith.constant 0 : i32
    %c0_i32_0 = arith.constant 0 : i32
    %c0_i32_1 = arith.constant 0 : i32
    return %c0_i32, %c0_i32_0 : i32, i32
  }
  func.func @transform_2(%arg0: i32) -> (i32, i32) {
    %c0_i32 = arith.constant 0 : i32
    %c0_i32_0 = arith.constant 0 : i32
    %c0_i32_1 = arith.constant 0 : i32
    return %c0_i32, %c0_i32_0 : i32, i32
  }
  func.func @transform_3(%arg0: i32) -> (i32, i32) {
    %c0_i32 = arith.constant 0 : i32
    %c0_i32_0 = arith.constant 0 : i32
    %c0_i32_1 = arith.constant 0 : i32
    return %c0_i32, %c0_i32_0 : i32, i32
  }
  func.func @transform_4(%arg0: i32) -> (i32, i32) {
    %c0_i32 = arith.constant 0 : i32
    %c0_i32_0 = arith.constant 0 : i32
    %c0_i32_1 = arith.constant 0 : i32
    return %c0_i32, %c0_i32_0 : i32, i32
  }
  func.func @transform_5(%arg0: i32) -> (i32, i32) {
    %c0_i32 = arith.constant 0 : i32
    %c0_i32_0 = arith.constant 0 : i32
    %c0_i32_1 = arith.constant 0 : i32
    return %c0_i32, %c0_i32_0 : i32, i32
  }
  func.func @transform_6(%arg0: i32) -> (i32, i32) {
    %c0_i32 = arith.constant 0 : i32
    %c0_i32_0 = arith.constant 0 : i32
    %c0_i32_1 = arith.constant 0 : i32
    return %c0_i32, %c0_i32_0 : i32, i32
  }
  func.func @transform_7(%arg0: i32) -> (i32, i32) {
    %c0_i32 = arith.constant 0 : i32
    %c0_i32_0 = arith.constant 0 : i32
    return %arg0, %c0_i32 : i32, i32
  }
}

module attributes {stable_mosaic.version = 11 : i64} {
  func.func @_mlp_maxpool_kernel(%arg0: i32, %arg1: memref<256x35xbf16, #tpu.memory_space<vmem>>, %arg2: memref<35x32xbf16, #tpu.memory_space<vmem>>, %arg3: memref<1x32xf32, #tpu.memory_space<vmem>>, %arg4: memref<32x32xbf16, #tpu.memory_space<vmem>>, %arg5: memref<1x32xf32, #tpu.memory_space<vmem>>, %arg6: memref<32x128xbf16, #tpu.memory_space<vmem>>, %arg7: memref<1x128xf32, #tpu.memory_space<vmem>>, %arg8: memref<32x128xf32, #tpu.memory_space<vmem>>) attributes {dimension_semantics = [#tpu.dimension_semantics<parallel>], iteration_bounds = array<i64: 2>, scalar_prefetch = 0 : i64, scratch_operands = 0 : i64, tpu.core_type = #tpu.core_type<tc>, window_params = [{transform_indices = @transform_0, window_bounds = array<i64: 256, 35>}, {pipeline_mode = #tpu.pipeline_mode<synchronous>, transform_indices = @transform_1, window_bounds = array<i64: 35, 32>}, {pipeline_mode = #tpu.pipeline_mode<synchronous>, transform_indices = @transform_2, window_bounds = array<i64: 1, 32>}, {pipeline_mode = #tpu.pipeline_mode<synchronous>, transform_indices = @transform_3, window_bounds = array<i64: 32, 32>}, {pipeline_mode = #tpu.pipeline_mode<synchronous>, transform_indices = @transform_4, window_bounds = array<i64: 1, 32>}, {pipeline_mode = #tpu.pipeline_mode<synchronous>, transform_indices = @transform_5, window_bounds = array<i64: 32, 128>}, {pipeline_mode = #tpu.pipeline_mode<synchronous>, transform_indices = @transform_6, window_bounds = array<i64: 1, 128>}, {transform_indices = @transform_7, window_bounds = array<i64: 32, 128>}]} {
    %c0 = arith.constant 0 : index
    %c0_0 = arith.constant 0 : index
    %0 = vector.load %arg1[%c0, %c0_0] : memref<256x35xbf16, #tpu.memory_space<vmem>>, vector<256x35xbf16>
    %c0_1 = arith.constant 0 : index
    %c0_2 = arith.constant 0 : index
    %1 = vector.load %arg2[%c0_1, %c0_2] : memref<35x32xbf16, #tpu.memory_space<vmem>>, vector<35x32xbf16>
    %c0_3 = arith.constant 0 : index
    %c0_4 = arith.constant 0 : index
    %2 = vector.load %arg3[%c0_3, %c0_4] : memref<1x32xf32, #tpu.memory_space<vmem>>, vector<1x32xf32>
    %cst = arith.constant dense<0.000000e+00> : vector<256x32xf32>
    %3 = tpu.matmul %0, %1, %cst {dimension_numbers = #tpu.dot_dimension_numbers<[1], [0], [0], [1], [0, 0, 1, 1], [], []>} : vector<256x35xbf16>, vector<35x32xbf16>, vector<256x32xf32> -> vector<256x32xf32>
    %4 = vector.broadcast %2 : vector<1x32xf32> to vector<256x32xf32>
    %5 = arith.addf %3, %4 : vector<256x32xf32>
    %cst_5 = arith.constant 0.000000e+00 : f32
    %6 = vector.broadcast %cst_5 : f32 to vector<256x32xf32>
    %7 = arith.maximumf %5, %6 : vector<256x32xf32>
    %8 = arith.truncf %7 : vector<256x32xf32> to vector<256x32xbf16>
    %c0_6 = arith.constant 0 : index
    %c0_7 = arith.constant 0 : index
    %9 = vector.load %arg4[%c0_6, %c0_7] : memref<32x32xbf16, #tpu.memory_space<vmem>>, vector<32x32xbf16>
    %c0_8 = arith.constant 0 : index
    %c0_9 = arith.constant 0 : index
    %10 = vector.load %arg5[%c0_8, %c0_9] : memref<1x32xf32, #tpu.memory_space<vmem>>, vector<1x32xf32>
    %cst_10 = arith.constant dense<0.000000e+00> : vector<256x32xf32>
    %11 = tpu.matmul %8, %9, %cst_10 {dimension_numbers = #tpu.dot_dimension_numbers<[1], [0], [0], [1], [0, 0, 1, 1], [], []>} : vector<256x32xbf16>, vector<32x32xbf16>, vector<256x32xf32> -> vector<256x32xf32>
    %12 = vector.broadcast %10 : vector<1x32xf32> to vector<256x32xf32>
    %13 = arith.addf %11, %12 : vector<256x32xf32>
    %cst_11 = arith.constant 0.000000e+00 : f32
    %14 = vector.broadcast %cst_11 : f32 to vector<256x32xf32>
    %15 = arith.maximumf %13, %14 : vector<256x32xf32>
    %16 = arith.truncf %15 : vector<256x32xf32> to vector<256x32xbf16>
    %c0_12 = arith.constant 0 : index
    %c0_13 = arith.constant 0 : index
    %17 = vector.load %arg6[%c0_12, %c0_13] : memref<32x128xbf16, #tpu.memory_space<vmem>>, vector<32x128xbf16>
    %c0_14 = arith.constant 0 : index
    %c0_15 = arith.constant 0 : index
    %18 = vector.load %arg7[%c0_14, %c0_15] : memref<1x128xf32, #tpu.memory_space<vmem>>, vector<1x128xf32>
    %cst_16 = arith.constant dense<0.000000e+00> : vector<256x128xf32>
    %19 = tpu.matmul %16, %17, %cst_16 {dimension_numbers = #tpu.dot_dimension_numbers<[1], [0], [0], [1], [0, 0, 1, 1], [], []>} : vector<256x32xbf16>, vector<32x128xbf16>, vector<256x128xf32> -> vector<256x128xf32>
    %20 = vector.broadcast %18 : vector<1x128xf32> to vector<256x128xf32>
    %21 = arith.addf %19, %20 : vector<256x128xf32>
    %cst_17 = arith.constant 0.000000e+00 : f32
    %22 = vector.broadcast %cst_17 : f32 to vector<256x128xf32>
    %23 = arith.maximumf %21, %22 : vector<256x128xf32>
    %24 = vector.shape_cast %23 : vector<256x128xf32> to vector<32x8x128xf32>
    %cst_18 = arith.constant dense<0xFF800000> : vector<32x128xf32>
    %25 = vector.multi_reduction <maximumf>, %24, %cst_18 [1] : vector<32x8x128xf32> to vector<32x128xf32>
    %c0_19 = arith.constant 0 : index
    %c0_20 = arith.constant 0 : index
    %26 = vector.load %arg8[%c0_19, %c0_20] : memref<32x128xf32, #tpu.memory_space<vmem>>, vector<32x128xf32>
    tpu.vector_store %arg8[%c0_19, %c0_20], %25 {strides = array<i32>} : memref<32x128xf32, #tpu.memory_space<vmem>>, vector<32x128xf32>,
    return
  }
  func.func @transform_0(%arg0: i32) -> (i32, i32) {
    %c0_i32 = arith.constant 0 : i32
    %c0_i32_0 = arith.constant 0 : i32
    return %arg0, %c0_i32 : i32, i32
  }
  func.func @transform_1(%arg0: i32) -> (i32, i32) {
    %c0_i32 = arith.constant 0 : i32
    %c0_i32_0 = arith.constant 0 : i32
    %c0_i32_1 = arith.constant 0 : i32
    return %c0_i32, %c0_i32_0 : i32, i32
  }
  func.func @transform_2(%arg0: i32) -> (i32, i32) {
    %c0_i32 = arith.constant 0 : i32
    %c0_i32_0 = arith.constant 0 : i32
    %c0_i32_1 = arith.constant 0 : i32
    return %c0_i32, %c0_i32_0 : i32, i32
  }
  func.func @transform_3(%arg0: i32) -> (i32, i32) {
    %c0_i32 = arith.constant 0 : i32
    %c0_i32_0 = arith.constant 0 : i32
    %c0_i32_1 = arith.constant 0 : i32
    return %c0_i32, %c0_i32_0 : i32, i32
  }
  func.func @transform_4(%arg0: i32) -> (i32, i32) {
    %c0_i32 = arith.constant 0 : i32
    %c0_i32_0 = arith.constant 0 : i32
    %c0_i32_1 = arith.constant 0 : i32
    return %c0_i32, %c0_i32_0 : i32, i32
  }
  func.func @transform_5(%arg0: i32) -> (i32, i32) {
    %c0_i32 = arith.constant 0 : i32
    %c0_i32_0 = arith.constant 0 : i32
    %c0_i32_1 = arith.constant 0 : i32
    return %c0_i32, %c0_i32_0 : i32, i32
  }
  func.func @transform_6(%arg0: i32) -> (i32, i32) {
    %c0_i32 = arith.constant 0 : i32
    %c0_i32_0 = arith.constant 0 : i32
    %c0_i32_1 = arith.constant 0 : i32
    return %c0_i32, %c0_i32_0 : i32, i32
  }
  func.func @transform_7(%arg0: i32) -> (i32, i32) {
    %c0_i32 = arith.constant 0 : i32
    %c0_i32_0 = arith.constant 0 : i32
    return %arg0, %c0_i32 : i32, i32
  }
}

module attributes {stable_mosaic.version = 11 : i64} {
  func.func @_mlp_maxpool_kernel(%arg0: i32, %arg1: memref<128x67xbf16, #tpu.memory_space<vmem>>, %arg2: memref<67x64xbf16, #tpu.memory_space<vmem>>, %arg3: memref<1x64xf32, #tpu.memory_space<vmem>>, %arg4: memref<64x64xbf16, #tpu.memory_space<vmem>>, %arg5: memref<1x64xf32, #tpu.memory_space<vmem>>, %arg6: memref<64x128xbf16, #tpu.memory_space<vmem>>, %arg7: memref<1x128xf32, #tpu.memory_space<vmem>>, %arg8: memref<16x128xf32, #tpu.memory_space<vmem>>) attributes {dimension_semantics = [#tpu.dimension_semantics<parallel>], iteration_bounds = array<i64: 2>, scalar_prefetch = 0 : i64, scratch_operands = 0 : i64, tpu.core_type = #tpu.core_type<tc>, window_params = [{transform_indices = @transform_0, window_bounds = array<i64: 128, 67>}, {pipeline_mode = #tpu.pipeline_mode<synchronous>, transform_indices = @transform_1, window_bounds = array<i64: 67, 64>}, {pipeline_mode = #tpu.pipeline_mode<synchronous>, transform_indices = @transform_2, window_bounds = array<i64: 1, 64>}, {pipeline_mode = #tpu.pipeline_mode<synchronous>, transform_indices = @transform_3, window_bounds = array<i64: 64, 64>}, {pipeline_mode = #tpu.pipeline_mode<synchronous>, transform_indices = @transform_4, window_bounds = array<i64: 1, 64>}, {pipeline_mode = #tpu.pipeline_mode<synchronous>, transform_indices = @transform_5, window_bounds = array<i64: 64, 128>}, {pipeline_mode = #tpu.pipeline_mode<synchronous>, transform_indices = @transform_6, window_bounds = array<i64: 1, 128>}, {transform_indices = @transform_7, window_bounds = array<i64: 16, 128>}]} {
    %c0 = arith.constant 0 : index
    %c0_0 = arith.constant 0 : index
    %0 = vector.load %arg1[%c0, %c0_0] : memref<128x67xbf16, #tpu.memory_space<vmem>>, vector<128x67xbf16>
    %c0_1 = arith.constant 0 : index
    %c0_2 = arith.constant 0 : index
    %1 = vector.load %arg2[%c0_1, %c0_2] : memref<67x64xbf16, #tpu.memory_space<vmem>>, vector<67x64xbf16>
    %c0_3 = arith.constant 0 : index
    %c0_4 = arith.constant 0 : index
    %2 = vector.load %arg3[%c0_3, %c0_4] : memref<1x64xf32, #tpu.memory_space<vmem>>, vector<1x64xf32>
    %cst = arith.constant dense<0.000000e+00> : vector<128x64xf32>
    %3 = tpu.matmul %0, %1, %cst {dimension_numbers = #tpu.dot_dimension_numbers<[1], [0], [0], [1], [0, 0, 1, 1], [], []>} : vector<128x67xbf16>, vector<67x64xbf16>, vector<128x64xf32> -> vector<128x64xf32>
    %4 = vector.broadcast %2 : vector<1x64xf32> to vector<128x64xf32>
    %5 = arith.addf %3, %4 : vector<128x64xf32>
    %cst_5 = arith.constant 0.000000e+00 : f32
    %6 = vector.broadcast %cst_5 : f32 to vector<128x64xf32>
    %7 = arith.maximumf %5, %6 : vector<128x64xf32>
    %8 = arith.truncf %7 : vector<128x64xf32> to vector<128x64xbf16>
    %c0_6 = arith.constant 0 : index
    %c0_7 = arith.constant 0 : index
    %9 = vector.load %arg4[%c0_6, %c0_7] : memref<64x64xbf16, #tpu.memory_space<vmem>>, vector<64x64xbf16>
    %c0_8 = arith.constant 0 : index
    %c0_9 = arith.constant 0 : index
    %10 = vector.load %arg5[%c0_8, %c0_9] : memref<1x64xf32, #tpu.memory_space<vmem>>, vector<1x64xf32>
    %cst_10 = arith.constant dense<0.000000e+00> : vector<128x64xf32>
    %11 = tpu.matmul %8, %9, %cst_10 {dimension_numbers = #tpu.dot_dimension_numbers<[1], [0], [0], [1], [0, 0, 1, 1], [], []>} : vector<128x64xbf16>, vector<64x64xbf16>, vector<128x64xf32> -> vector<128x64xf32>
    %12 = vector.broadcast %10 : vector<1x64xf32> to vector<128x64xf32>
    %13 = arith.addf %11, %12 : vector<128x64xf32>
    %cst_11 = arith.constant 0.000000e+00 : f32
    %14 = vector.broadcast %cst_11 : f32 to vector<128x64xf32>
    %15 = arith.maximumf %13, %14 : vector<128x64xf32>
    %16 = arith.truncf %15 : vector<128x64xf32> to vector<128x64xbf16>
    %c0_12 = arith.constant 0 : index
    %c0_13 = arith.constant 0 : index
    %17 = vector.load %arg6[%c0_12, %c0_13] : memref<64x128xbf16, #tpu.memory_space<vmem>>, vector<64x128xbf16>
    %c0_14 = arith.constant 0 : index
    %c0_15 = arith.constant 0 : index
    %18 = vector.load %arg7[%c0_14, %c0_15] : memref<1x128xf32, #tpu.memory_space<vmem>>, vector<1x128xf32>
    %cst_16 = arith.constant dense<0.000000e+00> : vector<128x128xf32>
    %19 = tpu.matmul %16, %17, %cst_16 {dimension_numbers = #tpu.dot_dimension_numbers<[1], [0], [0], [1], [0, 0, 1, 1], [], []>} : vector<128x64xbf16>, vector<64x128xbf16>, vector<128x128xf32> -> vector<128x128xf32>
    %20 = vector.broadcast %18 : vector<1x128xf32> to vector<128x128xf32>
    %21 = arith.addf %19, %20 : vector<128x128xf32>
    %cst_17 = arith.constant 0.000000e+00 : f32
    %22 = vector.broadcast %cst_17 : f32 to vector<128x128xf32>
    %23 = arith.maximumf %21, %22 : vector<128x128xf32>
    %24 = vector.shape_cast %23 : vector<128x128xf32> to vector<16x8x128xf32>
    %cst_18 = arith.constant dense<0xFF800000> : vector<16x128xf32>
    %25 = vector.multi_reduction <maximumf>, %24, %cst_18 [1] : vector<16x8x128xf32> to vector<16x128xf32>
    %c0_19 = arith.constant 0 : index
    %c0_20 = arith.constant 0 : index
    %26 = vector.load %arg8[%c0_19, %c0_20] : memref<16x128xf32, #tpu.memory_space<vmem>>, vector<16x128xf32>
    tpu.vector_store %arg8[%c0_19, %c0_20], %25 {strides = array<i32>} : memref<16x128xf32, #tpu.memory_space<vmem>>, vector<16x128xf32>,
    return
  }
  func.func @transform_0(%arg0: i32) -> (i32, i32) {
    %c0_i32 = arith.constant 0 : i32
    %c0_i32_0 = arith.constant 0 : i32
    return %arg0, %c0_i32 : i32, i32
  }
  func.func @transform_1(%arg0: i32) -> (i32, i32) {
    %c0_i32 = arith.constant 0 : i32
    %c0_i32_0 = arith.constant 0 : i32
    %c0_i32_1 = arith.constant 0 : i32
    return %c0_i32, %c0_i32_0 : i32, i32
  }
  func.func @transform_2(%arg0: i32) -> (i32, i32) {
    %c0_i32 = arith.constant 0 : i32
    %c0_i32_0 = arith.constant 0 : i32
    %c0_i32_1 = arith.constant 0 : i32
    return %c0_i32, %c0_i32_0 : i32, i32
  }
  func.func @transform_3(%arg0: i32) -> (i32, i32) {
    %c0_i32 = arith.constant 0 : i32
    %c0_i32_0 = arith.constant 0 : i32
    %c0_i32_1 = arith.constant 0 : i32
    return %c0_i32, %c0_i32_0 : i32, i32
  }
  func.func @transform_4(%arg0: i32) -> (i32, i32) {
    %c0_i32 = arith.constant 0 : i32
    %c0_i32_0 = arith.constant 0 : i32
    %c0_i32_1 = arith.constant 0 : i32
    return %c0_i32, %c0_i32_0 : i32, i32
  }
  func.func @transform_5(%arg0: i32) -> (i32, i32) {
    %c0_i32 = arith.constant 0 : i32
    %c0_i32_0 = arith.constant 0 : i32
    %c0_i32_1 = arith.constant 0 : i32
    return %c0_i32, %c0_i32_0 : i32, i32
  }
  func.func @transform_6(%arg0: i32) -> (i32, i32) {
    %c0_i32 = arith.constant 0 : i32
    %c0_i32_0 = arith.constant 0 : i32
    %c0_i32_1 = arith.constant 0 : i32
    return %c0_i32, %c0_i32_0 : i32, i32
  }
  func.func @transform_7(%arg0: i32) -> (i32, i32) {
    %c0_i32 = arith.constant 0 : i32
    %c0_i32_0 = arith.constant 0 : i32
    return %arg0, %c0_i32 : i32, i32
  }
}

module attributes {stable_mosaic.version = 11 : i64} {
  func.func @_mlp_maxpool_kernel(%arg0: i32, %arg1: memref<32x67xbf16, #tpu.memory_space<vmem>>, %arg2: memref<67x1024xbf16, #tpu.memory_space<vmem>>, %arg3: memref<1x1024xf32, #tpu.memory_space<vmem>>, %arg4: memref<2x1024xf32, #tpu.memory_space<vmem>>) attributes {dimension_semantics = [#tpu.dimension_semantics<parallel>], iteration_bounds = array<i64: 1>, scalar_prefetch = 0 : i64, scratch_operands = 0 : i64, tpu.core_type = #tpu.core_type<tc>, window_params = [{transform_indices = @transform_0, window_bounds = array<i64: 32, 67>}, {pipeline_mode = #tpu.pipeline_mode<synchronous>, transform_indices = @transform_1, window_bounds = array<i64: 67, 1024>}, {pipeline_mode = #tpu.pipeline_mode<synchronous>, transform_indices = @transform_2, window_bounds = array<i64: 1, 1024>}, {transform_indices = @transform_3, window_bounds = array<i64: 2, 1024>}]} {
    %c0 = arith.constant 0 : index
    %c0_0 = arith.constant 0 : index
    %0 = vector.load %arg1[%c0, %c0_0] : memref<32x67xbf16, #tpu.memory_space<vmem>>, vector<32x67xbf16>
    %c0_1 = arith.constant 0 : index
    %c0_2 = arith.constant 0 : index
    %1 = vector.load %arg2[%c0_1, %c0_2] : memref<67x1024xbf16, #tpu.memory_space<vmem>>, vector<67x1024xbf16>
    %c0_3 = arith.constant 0 : index
    %c0_4 = arith.constant 0 : index
    %2 = vector.load %arg3[%c0_3, %c0_4] : memref<1x1024xf32, #tpu.memory_space<vmem>>, vector<1x1024xf32>
    %cst = arith.constant dense<0.000000e+00> : vector<32x1024xf32>
    %3 = tpu.matmul %0, %1, %cst {dimension_numbers = #tpu.dot_dimension_numbers<[1], [0], [0], [1], [0, 0, 1, 1], [], []>} : vector<32x67xbf16>, vector<67x1024xbf16>, vector<32x1024xf32> -> vector<32x1024xf32>
    %4 = vector.broadcast %2 : vector<1x1024xf32> to vector<32x1024xf32>
    %5 = arith.addf %3, %4 : vector<32x1024xf32>
    %cst_5 = arith.constant 0.000000e+00 : f32
    %6 = vector.broadcast %cst_5 : f32 to vector<32x1024xf32>
    %7 = arith.maximumf %5, %6 : vector<32x1024xf32>
    %8 = vector.shape_cast %7 : vector<32x1024xf32> to vector<2x16x1024xf32>
    %cst_6 = arith.constant dense<0xFF800000> : vector<2x1024xf32>
    %9 = vector.multi_reduction <maximumf>, %8, %cst_6 [1] : vector<2x16x1024xf32> to vector<2x1024xf32>
    %c0_7 = arith.constant 0 : index
    %c0_8 = arith.constant 0 : index
    %10 = vector.load %arg4[%c0_7, %c0_8] : memref<2x1024xf32, #tpu.memory_space<vmem>>, vector<2x1024xf32>
    tpu.vector_store %arg4[%c0_7, %c0_8], %9 {strides = array<i32>} : memref<2x1024xf32, #tpu.memory_space<vmem>>, vector<2x1024xf32>,
    return
  }
  func.func @transform_0(%arg0: i32) -> (i32, i32) {
    %c0_i32 = arith.constant 0 : i32
    %c0_i32_0 = arith.constant 0 : i32
    return %arg0, %c0_i32 : i32, i32
  }
  func.func @transform_1(%arg0: i32) -> (i32, i32) {
    %c0_i32 = arith.constant 0 : i32
    %c0_i32_0 = arith.constant 0 : i32
    %c0_i32_1 = arith.constant 0 : i32
    return %c0_i32, %c0_i32_0 : i32, i32
  }
  func.func @transform_2(%arg0: i32) -> (i32, i32) {
    %c0_i32 = arith.constant 0 : i32
    %c0_i32_0 = arith.constant 0 : i32
    %c0_i32_1 = arith.constant 0 : i32
    return %c0_i32, %c0_i32_0 : i32, i32
  }
  func.func @transform_3(%arg0: i32) -> (i32, i32) {
    %c0_i32 = arith.constant 0 : i32
    %c0_i32_0 = arith.constant 0 : i32
    return %arg0, %c0_i32 : i32, i32
  }
}

</mosaic_0001>

<llo_original>
// kernel: custom-call.22
$region0: #{custom-call.22}
  %s0 = inlined_call_operand.vmem [shape: f32[2,128], index: 0, kind: output, shape index: {}]

// kernel: custom-call.23
$region0: #{custom-call.23}
  %s0 = inlined_call_operand.vmem [shape: f32[2,64], index: 0, kind: output, shape index: {}]

// kernel: pointnet2_forward.4
$region0: #{pointnet2_forward.4}
  #allocation0 [shape = 'u32[]', space=smem, size = 0x4, offset = 0x4, fixed_abs, tag = 'smem constant byte address 0x4 - core index']
  #allocation1 [shape = 'u32[144,128]{1,0:T(1,128)}', space=vmem, size = 0x12000, scoped, tag = 'internal scratch']
  %s0 = inlined_call_operand.vmem [shape: bf16[1024,3], index: 0, kind: input, shape index: {}]
  %s1 = inlined_call_operand.vmem [shape: bf16[3,16], index: 1, kind: input, shape index: {}]
  %s2 = inlined_call_operand.vmem [shape: f32[1,16], index: 2, kind: input, shape index: {}]
  %s3 = inlined_call_operand.vmem [shape: bf16[16,16], index: 3, kind: input, shape index: {}]
  %s4 = inlined_call_operand.vmem [shape: f32[1,16], index: 4, kind: input, shape index: {}]
  %s5 = inlined_call_operand.vmem [shape: bf16[16,128], index: 5, kind: input, shape index: {}]
  %s6 = inlined_call_operand.vmem [shape: f32[1,128], index: 6, kind: input, shape index: {}]
  %s7 = inlined_call_operand.vmem [shape: f32[128,128], index: 7, kind: output, shape index: {}]
  %s8 = sld [smem:[#allocation0]]
  $region61: #{pointnet2_forward.4} parent=0
    _
  %s10 = ssub.s32 1, %s8
  %s11 = scalar_select 0, %s10, %s8
  loop: start=0, step=1, limit=4
  $region2: #{pointnet2_forward.4} parent=0 // loop_pre_header
    _
  $region3: #{pointnet2_forward.4} parent=0 // loop_header
    %s13 = sphi 0, %s17
    %p14 = scmp.ge.s32.totalorder %s13, 4
    %s23 = sphi 0, %s25
    %s26 = sphi 0, %s23
    %s27 = sphi 0, %s26
    %s43 = sphi 0, %s27
    %s47 = sphi 0, %s47
    %s49 = sphi 0, %s47
    %s50 = sphi 0, %s49
    %s64 = sphi 0, %s50
    %s68 = sphi 0, %s68
    %s70 = sphi 0, %s68
    %s71 = sphi 0, %s70
    %s85 = sphi 0, %s71
    %s89 = sphi 0, %s89
    %s91 = sphi 0, %s89
    %s92 = sphi 0, %s91
    %s106 = sphi 0, %s92
    %s110 = sphi 0, %s110
    %s112 = sphi 0, %s110
    %s113 = sphi 0, %s112
    %s127 = sphi 0, %s113
    %s131 = sphi 0, %s131
    %s133 = sphi 0, %s131
    %s134 = sphi 0, %s133
    %s148 = sphi 0, %s134
    %s152 = sphi 0, %s152
    %s154 = sphi 0, %s152
    %s155 = sphi 0, %s154
    %s169 = sphi 0, %s155
    %s175 = sphi 0, %s177
    %s178 = sphi 0, %s175
    %s179 = sphi 0, %s178
    %s195 = sphi 0, %s179
  $region4: #{pointnet2_forward.4} parent=0 // loop_header_branch
    %16 = sbr.rel (%p14) target = $region8
  $region5: #{pointnet2_forward.4} parent=0 // loop_body
    %s18 = ssub.s32 %s13, 1
    %s19 = ssub.s32 %s13, 2
    %s20 = sadd.s32 %s13, 1
    %s21 = ssub.s32 %s13, %s20
    %p22 = scmp.eq.s32.totalorder %s21, 0
    %s24 = sadd.s32 %s23, 1
    %s25 = scalar_select %p22, %s23, %s24
    %p28 = pneg %p22
    %p29 = scmp.eq.s32.totalorder %s13, 1
    %p30 = por %p28, %p29
    %p31 = scmp.ne.s32.totalorder %s23, %s26
    %p32 = scmp.eq.s32.totalorder %s13, 0
    %p33 = por %p31, %p32
    %p34 = scmp.ne.s32.totalorder %s23, %s26
    %p35 = scmp.eq.s32.totalorder %s18, 1
    %p36 = por %p34, %p35
    %p37 = scmp.ne.s32.totalorder %s26, %s27
    %p38 = scmp.eq.s32.totalorder %s18, 0
    %p39 = por %p37, %p38
    %p40 = scmp.ne.s32.totalorder %s26, %s27
    %p41 = scmp.eq.s32.totalorder %s19, 1
    %p42 = por %p40, %p41
    %p44 = scmp.ne.s32.totalorder %s27, %s43
    %p45 = scmp.eq.s32.totalorder %s19, 0
    %p46 = por %p44, %p45
    %s48 = sadd.s32 %s47, 1
    %p51 = scmp.eq.s32.totalorder %s13, 1
    %p52 = scmp.ne.s32.totalorder %s47, %s49
    %p53 = scmp.eq.s32.totalorder %s13, 0
    %p54 = por %p52, %p53
    %p55 = scmp.ne.s32.totalorder %s47, %s49
    %p56 = scmp.eq.s32.totalorder %s18, 1
    %p57 = por %p55, %p56
    %p58 = scmp.ne.s32.totalorder %s49, %s50
    %p59 = scmp.eq.s32.totalorder %s18, 0
    %p60 = por %p58, %p59
    %p61 = scmp.ne.s32.totalorder %s49, %s50
    %p62 = scmp.eq.s32.totalorder %s19, 1
    %p63 = por %p61, %p62
    %p65 = scmp.ne.s32.totalorder %s50, %s64
    %p66 = scmp.eq.s32.totalorder %s19, 0
    %p67 = por %p65, %p66
    %s69 = sadd.s32 %s68, 1
    %p72 = scmp.eq.s32.totalorder %s13, 1
    %p73 = scmp.ne.s32.totalorder %s68, %s70
    %p74 = scmp.eq.s32.totalorder %s13, 0
    %p75 = por %p73, %p74
    %p76 = scmp.ne.s32.totalorder %s68, %s70
    %p77 = scmp.eq.s32.totalorder %s18, 1
    %p78 = por %p76, %p77
    %p79 = scmp.ne.s32.totalorder %s70, %s71
    %p80 = scmp.eq.s32.totalorder %s18, 0
    %p81 = por %p79, %p80
    %p82 = scmp.ne.s32.totalorder %s70, %s71
    %p83 = scmp.eq.s32.totalorder %s19, 1
    %p84 = por %p82, %p83
    %p86 = scmp.ne.s32.totalorder %s71, %s85
    %p87 = scmp.eq.s32.totalorder %s19, 0
    %p88 = por %p86, %p87
    %s90 = sadd.s32 %s89, 1
    %p93 = scmp.eq.s32.totalorder %s13, 1
    %p94 = scmp.ne.s32.totalorder %s89, %s91
    %p95 = scmp.eq.s32.totalorder %s13, 0
    %p96 = por %p94, %p95
    %p97 = scmp.ne.s32.totalorder %s89, %s91
    %p98 = scmp.eq.s32.totalorder %s18, 1
    %p99 = por %p97, %p98
    %p100 = scmp.ne.s32.totalorder %s91, %s92
    %p101 = scmp.eq.s32.totalorder %s18, 0
    %p102 = por %p100, %p101
    %p103 = scmp.ne.s32.totalorder %s91, %s92
    %p104 = scmp.eq.s32.totalorder %s19, 1
    %p105 = por %p103, %p104
    %p107 = scmp.ne.s32.totalorder %s92, %s106
    %p108 = scmp.eq.s32.totalorder %s19, 0
    %p109 = por %p107, %p108
    %s111 = sadd.s32 %s110, 1
    %p114 = scmp.eq.s32.totalorder %s13, 1
    %p115 = scmp.ne.s32.totalorder %s110, %s112
    %p116 = scmp.eq.s32.totalorder %s13, 0
    %p117 = por %p115, %p116
    %p118 = scmp.ne.s32.totalorder %s110, %s112
    %p119 = scmp.eq.s32.totalorder %s18, 1
    %p120 = por %p118, %p119
    %p121 = scmp.ne.s32.totalorder %s112, %s113
    %p122 = scmp.eq.s32.totalorder %s18, 0
    %p123 = por %p121, %p122
    %p124 = scmp.ne.s32.totalorder %s112, %s113
    %p125 = scmp.eq.s32.totalorder %s19, 1
    %p126 = por %p124, %p125
    %p128 = scmp.ne.s32.totalorder %s113, %s127
    %p129 = scmp.eq.s32.totalorder %s19, 0
    %p130 = por %p128, %p129
    %s132 = sadd.s32 %s131, 1
    %p135 = scmp.eq.s32.totalorder %s13, 1
    %p136 = scmp.ne.s32.totalorder %s131, %s133
    %p137 = scmp.eq.s32.totalorder %s13, 0
    %p138 = por %p136, %p137
    %p139 = scmp.ne.s32.totalorder %s131, %s133
    %p140 = scmp.eq.s32.totalorder %s18, 1
    %p141 = por %p139, %p140
    %p142 = scmp.ne.s32.totalorder %s133, %s134
    %p143 = scmp.eq.s32.totalorder %s18, 0
    %p144 = por %p142, %p143
    %p145 = scmp.ne.s32.totalorder %s133, %s134
    %p146 = scmp.eq.s32.totalorder %s19, 1
    %p147 = por %p145, %p146
    %p149 = scmp.ne.s32.totalorder %s134, %s148
    %p150 = scmp.eq.s32.totalorder %s19, 0
    %p151 = por %p149, %p150
    %s153 = sadd.s32 %s152, 1
    %p156 = scmp.eq.s32.totalorder %s13, 1
    %p157 = scmp.ne.s32.totalorder %s152, %s154
    %p158 = scmp.eq.s32.totalorder %s13, 0
    %p159 = por %p157, %p158
    %p160 = scmp.ne.s32.totalorder %s152, %s154
    %p161 = scmp.eq.s32.totalorder %s18, 1
    %p162 = por %p160, %p161
    %p163 = scmp.ne.s32.totalorder %s154, %s155
    %p164 = scmp.eq.s32.totalorder %s18, 0
    %p165 = por %p163, %p164
    %p166 = scmp.ne.s32.totalorder %s154, %s155
    %p167 = scmp.eq.s32.totalorder %s19, 1
    %p168 = por %p166, %p167
    %p170 = scmp.ne.s32.totalorder %s155, %s169
    %p171 = scmp.eq.s32.totalorder %s19, 0
    %p172 = por %p170, %p171
    %s173 = ssub.s32 %s13, %s20
    %p174 = scmp.eq.s32.totalorder %s173, 0
    %s176 = sadd.s32 %s175, 1
    %s177 = scalar_select %p174, %s175, %s176
    %p180 = pneg %p174
    %p181 = scmp.eq.s32.totalorder %s13, 1
    %p182 = por %p180, %p181
    %p183 = scmp.ne.s32.totalorder %s175, %s178
    %p184 = scmp.eq.s32.totalorder %s13, 0
    %p185 = por %p183, %p184
    %p186 = scmp.ne.s32.totalorder %s175, %s178
    %p187 = scmp.eq.s32.totalorder %s18, 1
    %p188 = por %p186, %p187
    %p189 = scmp.ne.s32.totalorder %s178, %s179
    %p190 = scmp.eq.s32.totalorder %s18, 0
    %p191 = por %p189, %p190
    %p192 = scmp.ne.s32.totalorder %s178, %s179
    %p193 = scmp.eq.s32.totalorder %s19, 1
    %p194 = por %p192, %p193
    %p196 = scmp.ne.s32.totalorder %s179, %s195
    %p197 = scmp.eq.s32.totalorder %s19, 0
    %p198 = por %p196, %p197
    %p199 = scmp.le.s32.totalorder 1, %s13
    %p200 = scmp.lt.s32.totalorder %s13, 3
    %p201 = pnand %p199, %p200
    %p202 = pneg %p201
    // Predicated region
    $region9: #{pointnet2_forward.4} parent=5 // pred_check
      _
    $region10: #{pointnet2_forward.4} parent=5 // pred_check_branch
      %204 = sbr.rel (%p201) target = $region12
    $region11: #{pointnet2_forward.4} parent=5 // pred_region
      %s205 = ssub.s32 %s13, 1
      // Predicated region
      $region13: #{pointnet2_forward.4} parent=11 // pred_check
        %p206 = pneg %p60
      $region14: #{pointnet2_forward.4} parent=11 // pred_check_branch
        %208 = sbr.rel (%p206) target = $region16
      $region15: #{pointnet2_forward.4} parent=11 // pred_region
        _
      $region16: #{pointnet2_forward.4} parent=11 // pred_fallthru
        _
      // Predicated region
      $region17: #{pointnet2_forward.4} parent=11 // pred_check
        %p209 = pneg %p81
      $region18: #{pointnet2_forward.4} parent=11 // pred_check_branch
        %211 = sbr.rel (%p209) target = $region20
      $region19: #{pointnet2_forward.4} parent=11 // pred_region
        _
      $region20: #{pointnet2_forward.4} parent=11 // pred_fallthru
        _
      // Predicated region
      $region21: #{pointnet2_forward.4} parent=11 // pred_check
        %p212 = pneg %p102
      $region22: #{pointnet2_forward.4} parent=11 // pred_check_branch
        %214 = sbr.rel (%p212) target = $region24
      $region23: #{pointnet2_forward.4} parent=11 // pred_region
        _
      $region24: #{pointnet2_forward.4} parent=11 // pred_fallthru
        _
      // Predicated region
      $region25: #{pointnet2_forward.4} parent=11 // pred_check
        %p215 = pneg %p123
      $region26: #{pointnet2_forward.4} parent=11 // pred_check_branch
        %217 = sbr.rel (%p215) target = $region28
      $region27: #{pointnet2_forward.4} parent=11 // pred_region
        _
      $region28: #{pointnet2_forward.4} parent=11 // pred_fallthru
        _
      // Predicated region
      $region29: #{pointnet2_forward.4} parent=11 // pred_check
        %p218 = pneg %p144
      $region30: #{pointnet2_forward.4} parent=11 // pred_check_branch
        %220 = sbr.rel (%p218) target = $region32
      $region31: #{pointnet2_forward.4} parent=11 // pred_region
        _
      $region32: #{pointnet2_forward.4} parent=11 // pred_fallthru
        _
      // Predicated region
      $region33: #{pointnet2_forward.4} parent=11 // pred_check
        %p221 = pneg %p165
      $region34: #{pointnet2_forward.4} parent=11 // pred_check_branch
        %223 = sbr.rel (%p221) target = $region36
      $region35: #{pointnet2_forward.4} parent=11 // pred_region
        _
      $region36: #{pointnet2_forward.4} parent=11 // pred_fallthru
        _
    $region12: #{pointnet2_forward.4} parent=5 // pred_fallthru
      _
    %p224 = scmp.lt.s32.totalorder %s13, 2
    // Predicated region
    $region37: #{pointnet2_forward.4} parent=5 // pred_check
      %p225 = pneg %p224
    $region38: #{pointnet2_forward.4} parent=5 // pred_check_branch
      %227 = sbr.rel (%p225) target = $region40
    $region39: #{pointnet2_forward.4} parent=5 // pred_region
      // Predicated region
      $region41: #{pointnet2_forward.4} parent=39 // pred_check
        %p228 = pneg %p33
      $region42: #{pointnet2_forward.4} parent=39 // pred_check_branch
        %230 = sbr.rel (%p228) target = $region44
      $region43: #{pointnet2_forward.4} parent=39 // pred_region
        %s231 = smul.u32 64, %s13
        %p232 = scmp.lt.s32.totalorder %s231, 127
        %s233 = scalar_select %p232, %s231, 127
        %s234 = smul.addr %s233, 4
        %s235 = scalar_lea.vmem %s0, %s234
        %s236 = smul.u32 64, %s13
      $region44: #{pointnet2_forward.4} parent=39 // pred_fallthru
        _
    $region40: #{pointnet2_forward.4} parent=5 // pred_fallthru
      _
    %p237 = scmp.le.s32.totalorder 1, %s13
    %p238 = scmp.lt.s32.totalorder %s13, 3
    %p239 = pnand %p237, %p238
    %p240 = pneg %p239
    // Predicated region
    $region45: #{pointnet2_forward.4} parent=5 // pred_check
      _
    $region46: #{pointnet2_forward.4} parent=5 // pred_check_branch
      %242 = sbr.rel (%p239) target = $region48
    $region47: #{pointnet2_forward.4} parent=5 // pred_region
      %s243 = ssub.s32 %s13, 1
      %s244 = smul.u32 64, %s18
      %p245 = scmp.lt.s32.totalorder %s244, 127
      %s246 = scalar_select %p245, %s244, 127
      %s247 = smul.addr %s246, 4
      %s248 = scalar_lea.vmem %s0, %s247
      %p249 = pneg %p39
      %p250 = pneg %p36
      %p251 = pneg %p60
      %p252 = pneg %p57
      %p253 = pneg %p81
      %p254 = pneg %p78
      %p255 = pneg %p102
      %p256 = pneg %p99
      %p257 = pneg %p123
      %p258 = pneg %p120
      %p259 = pneg %p144
      %p260 = pneg %p141
      %p261 = pneg %p165
      %p262 = pneg %p162
      %p263 = pneg %p191
      %p264 = pneg %p188
      %s265 = smul.u32 8, %s18
      %p266 = scmp.lt.s32.totalorder %s265, 15
      %s267 = scalar_select %p266, %s265, 15
      %s268 = smul.addr %s267, 8
      %s269 = scalar_lea.vmem %s7, %s268
      %s270 = smul.u32 64, %s18
      %p271 = scmp.lt.s32.totalorder %s270, 127
      %s272 = scalar_select %p271, %s270, 127
      %s273 = smul.addr %s272, 4
      %s274 = scalar_lea.vmem %s0, %s273
      %s275 = smul.u32 64, %s18
      %s276 = smul.u32 8, %s18
      %p277 = scmp.lt.s32.totalorder %s276, 15
      %s278 = scalar_select %p277, %s276, 15
      %s279 = smul.addr %s278, 8
      %s280 = scalar_lea.vmem %s7, %s279
      %s281 = smul.u32 8, %s18
      %v283 = vld [vmem:[%s274] sm:$0xf]
      %v284 = vld [vmem:[%s274 + $0x4] sm:$0xf]
      %v285 = vld [vmem:[%s274 + $0x8] sm:$0xf]
      %v286 = vld [vmem:[%s274 + $0xc] sm:$0xf]
      %v287 = vld [vmem:[%s274 + $0x10] sm:$0xf]
      %v288 = vld [vmem:[%s274 + $0x14] sm:$0xf]
      %v289 = vld [vmem:[%s274 + $0x18] sm:$0xf]
      %v290 = vld [vmem:[%s274 + $0x1c] sm:$0xf]
      %v291 = vld [vmem:[%s274 + $0x20] sm:$0xf]
      %v292 = vld [vmem:[%s274 + $0x24] sm:$0xf]
      %v293 = vld [vmem:[%s274 + $0x28] sm:$0xf]
      %v294 = vld [vmem:[%s274 + $0x2c] sm:$0xf]
      %v295 = vld [vmem:[%s274 + $0x30] sm:$0xf]
      %v296 = vld [vmem:[%s274 + $0x34] sm:$0xf]
      %v297 = vld [vmem:[%s274 + $0x38] sm:$0xf]
      %v298 = vld [vmem:[%s274 + $0x3c] sm:$0xf]
      %v299 = vld [vmem:[%s274 + $0x40] sm:$0xf]
      %v300 = vld [vmem:[%s274 + $0x44] sm:$0xf]
      %v301 = vld [vmem:[%s274 + $0x48] sm:$0xf]
      %v302 = vld [vmem:[%s274 + $0x4c] sm:$0xf]
      %v303 = vld [vmem:[%s274 + $0x50] sm:$0xf]
      %v304 = vld [vmem:[%s274 + $0x54] sm:$0xf]
      %v305 = vld [vmem:[%s274 + $0x58] sm:$0xf]
      %v306 = vld [vmem:[%s274 + $0x5c] sm:$0xf]
      %v307 = vld [vmem:[%s274 + $0x60] sm:$0xf]
      %v308 = vld [vmem:[%s274 + $0x64] sm:$0xf]
      %v309 = vld [vmem:[%s274 + $0x68] sm:$0xf]
      %v310 = vld [vmem:[%s274 + $0x6c] sm:$0xf]
      %v311 = vld [vmem:[%s274 + $0x70] sm:$0xf]
      %v312 = vld [vmem:[%s274 + $0x74] sm:$0xf]
      %v313 = vld [vmem:[%s274 + $0x78] sm:$0xf]
      %v314 = vld [vmem:[%s274 + $0x7c] sm:$0xf]
      %v315 = vld [vmem:[%s274 + $0x80] sm:$0xf]
      %v316 = vld [vmem:[%s274 + $0x84] sm:$0xf]
      %v317 = vld [vmem:[%s274 + $0x88] sm:$0xf]
      %v318 = vld [vmem:[%s274 + $0x8c] sm:$0xf]
      %v319 = vld [vmem:[%s274 + $0x90] sm:$0xf]
      %v320 = vld [vmem:[%s274 + $0x94] sm:$0xf]
      %v321 = vld [vmem:[%s274 + $0x98] sm:$0xf]
      %v322 = vld [vmem:[%s274 + $0x9c] sm:$0xf]
      %v323 = vld [vmem:[%s274 + $0xa0] sm:$0xf]
      %v324 = vld [vmem:[%s274 + $0xa4] sm:$0xf]
      %v325 = vld [vmem:[%s274 + $0xa8] sm:$0xf]
      %v326 = vld [vmem:[%s274 + $0xac] sm:$0xf]
      %v327 = vld [vmem:[%s274 + $0xb0] sm:$0xf]
      %v328 = vld [vmem:[%s274 + $0xb4] sm:$0xf]
      %v329 = vld [vmem:[%s274 + $0xb8] sm:$0xf]
      %v330 = vld [vmem:[%s274 + $0xbc] sm:$0xf]
      %v331 = vld [vmem:[%s274 + $0xc0] sm:$0xf]
      %v332 = vld [vmem:[%s274 + $0xc4] sm:$0xf]
      %v333 = vld [vmem:[%s274 + $0xc8] sm:$0xf]
      %v334 = vld [vmem:[%s274 + $0xcc] sm:$0xf]
      %v335 = vld [vmem:[%s274 + $0xd0] sm:$0xf]
      %v336 = vld [vmem:[%s274 + $0xd4] sm:$0xf]
      %v337 = vld [vmem:[%s274 + $0xd8] sm:$0xf]
      %v338 = vld [vmem:[%s274 + $0xdc] sm:$0xf]
      %v339 = vld [vmem:[%s274 + $0xe0] sm:$0xf]
      %v340 = vld [vmem:[%s274 + $0xe4] sm:$0xf]
      %v341 = vld [vmem:[%s274 + $0xe8] sm:$0xf]
      %v342 = vld [vmem:[%s274 + $0xec] sm:$0xf]
      %v343 = vld [vmem:[%s274 + $0xf0] sm:$0xf]
      %v344 = vld [vmem:[%s274 + $0xf4] sm:$0xf]
      %v345 = vld [vmem:[%s274 + $0xf8] sm:$0xf]
      %v346 = vld [vmem:[%s274 + $0xfc] sm:$0xf]
      %v347 = vld [vmem:[%s1] sm:$0x3]
      %v348 = vld [vmem:[%s2] sm:$0x1]
      %v349 = vunpack.c.l.bf16 %v283
      %v350 = vunpack.c.l.bf16 %v284
      %v351 = vunpack.c.l.bf16 %v285
      %v352 = vunpack.c.l.bf16 %v286
      %v353 = vunpack.c.l.bf16 %v287
      %v354 = vunpack.c.l.bf16 %v288
      %v355 = vunpack.c.l.bf16 %v289
      %v356 = vunpack.c.l.bf16 %v290
      %v357 = vunpack.c.l.bf16 %v291
      %v358 = vunpack.c.l.bf16 %v292
      %v359 = vunpack.c.l.bf16 %v293
      %v360 = vunpack.c.l.bf16 %v294
      %v361 = vunpack.c.l.bf16 %v295
      %v362 = vunpack.c.l.bf16 %v296
      %v363 = vunpack.c.l.bf16 %v297
      %v364 = vunpack.c.l.bf16 %v298
      %v365 = vunpack.c.l.bf16 %v299
      %v366 = vunpack.c.l.bf16 %v300
      %v367 = vunpack.c.l.bf16 %v301
      %v368 = vunpack.c.l.bf16 %v302
      %v369 = vunpack.c.l.bf16 %v303
      %v370 = vunpack.c.l.bf16 %v304
      %v371 = vunpack.c.l.bf16 %v305
      %v372 = vunpack.c.l.bf16 %v306
      %v373 = vunpack.c.l.bf16 %v307
      %v374 = vunpack.c.l.bf16 %v308
      %v375 = vunpack.c.l.bf16 %v309
      %v376 = vunpack.c.l.bf16 %v310
      %v377 = vunpack.c.l.bf16 %v311
      %v378 = vunpack.c.l.bf16 %v312
      %v379 = vunpack.c.l.bf16 %v313
      %v380 = vunpack.c.l.bf16 %v314
      %v381 = vunpack.c.l.bf16 %v315
      %v382 = vunpack.c.l.bf16 %v316
      %v383 = vunpack.c.l.bf16 %v317
      %v384 = vunpack.c.l.bf16 %v318
      %v385 = vunpack.c.l.bf16 %v319
      %v386 = vunpack.c.l.bf16 %v320
      %v387 = vunpack.c.l.bf16 %v321
      %v388 = vunpack.c.l.bf16 %v322
      %v389 = vunpack.c.l.bf16 %v323
      %v390 = vunpack.c.l.bf16 %v324
      %v391 = vunpack.c.l.bf16 %v325
      %v392 = vunpack.c.l.bf16 %v326
      %v393 = vunpack.c.l.bf16 %v327
      %v394 = vunpack.c.l.bf16 %v328
      %v395 = vunpack.c.l.bf16 %v329
      %v396 = vunpack.c.l.bf16 %v330
      %v397 = vunpack.c.l.bf16 %v331
      %v398 = vunpack.c.l.bf16 %v332
      %v399 = vunpack.c.l.bf16 %v333
      %v400 = vunpack.c.l.bf16 %v334
      %v401 = vunpack.c.l.bf16 %v335
      %v402 = vunpack.c.l.bf16 %v336
      %v403 = vunpack.c.l.bf16 %v337
      %v404 = vunpack.c.l.bf16 %v338
      %v405 = vunpack.c.l.bf16 %v339
      %v406 = vunpack.c.l.bf16 %v340
      %v407 = vunpack.c.l.bf16 %v341
      %v408 = vunpack.c.l.bf16 %v342
      %v409 = vunpack.c.l.bf16 %v343
      %v410 = vunpack.c.l.bf16 %v344
      %v411 = vunpack.c.l.bf16 %v345
      %v412 = vunpack.c.l.bf16 %v346
      %v413 = vunpack.c.l.bf16 %v347
      %415 = vset.pattern.permute.xlu0 0
      %416 = vperm.xlu0 %415, %v349
      %v417 = vpop.permute.xlu0 %416
      %420 = vset.pattern.permute.xlu0 0
      %421 = vperm.xlu0 %420, %v350
      %v422 = vpop.permute.xlu0 %421
      %425 = vset.pattern.permute.xlu0 0
      %426 = vperm.xlu0 %425, %v351
      %v427 = vpop.permute.xlu0 %426
      %430 = vset.pattern.permute.xlu0 0
      %431 = vperm.xlu0 %430, %v352
      %v432 = vpop.permute.xlu0 %431
      %435 = vset.pattern.permute.xlu0 0
      %436 = vperm.xlu0 %435, %v353
      %v437 = vpop.permute.xlu0 %436
      %440 = vset.pattern.permute.xlu0 0
      %441 = vperm.xlu0 %440, %v354
      %v442 = vpop.permute.xlu0 %441
      %445 = vset.pattern.permute.xlu0 0
      %446 = vperm.xlu0 %445, %v355
      %v447 = vpop.permute.xlu0 %446
      %450 = vset.pattern.permute.xlu0 0
      %451 = vperm.xlu0 %450, %v356
      %v452 = vpop.permute.xlu0 %451
      %455 = vset.pattern.permute.xlu0 0
      %456 = vperm.xlu0 %455, %v357
      %v457 = vpop.permute.xlu0 %456
      %460 = vset.pattern.permute.xlu0 0
      %461 = vperm.xlu0 %460, %v358
      %v462 = vpop.permute.xlu0 %461
      %465 = vset.pattern.permute.xlu0 0
      %466 = vperm.xlu0 %465, %v359
      %v467 = vpop.permute.xlu0 %466
      %470 = vset.pattern.permute.xlu0 0
      %471 = vperm.xlu0 %470, %v360
      %v472 = vpop.permute.xlu0 %471
      %475 = vset.pattern.permute.xlu0 0
      %476 = vperm.xlu0 %475, %v361
      %v477 = vpop.permute.xlu0 %476
      %480 = vset.pattern.permute.xlu0 0
      %481 = vperm.xlu0 %480, %v362
      %v482 = vpop.permute.xlu0 %481
      %485 = vset.pattern.permute.xlu0 0
      %486 = vperm.xlu0 %485, %v363
      %v487 = vpop.permute.xlu0 %486
      %490 = vset.pattern.permute.xlu0 0
      %491 = vperm.xlu0 %490, %v364
      %v492 = vpop.permute.xlu0 %491
      %495 = vset.pattern.permute.xlu0 0
      %496 = vperm.xlu0 %495, %v365
      %v497 = vpop.permute.xlu0 %496
      %500 = vset.pattern.permute.xlu0 0
      %501 = vperm.xlu0 %500, %v366
      %v502 = vpop.permute.xlu0 %501
      %505 = vset.pattern.permute.xlu0 0
      %506 = vperm.xlu0 %505, %v367
      %v507 = vpop.permute.xlu0 %506
      %510 = vset.pattern.permute.xlu0 0
      %511 = vperm.xlu0 %510, %v368
      %v512 = vpop.permute.xlu0 %511
      %515 = vset.pattern.permute.xlu0 0
      %516 = vperm.xlu0 %515, %v369
      %v517 = vpop.permute.xlu0 %516
      %520 = vset.pattern.permute.xlu0 0
      %521 = vperm.xlu0 %520, %v370
      %v522 = vpop.permute.xlu0 %521
      %525 = vset.pattern.permute.xlu0 0
      %526 = vperm.xlu0 %525, %v371
      %v527 = vpop.permute.xlu0 %526
      %530 = vset.pattern.permute.xlu0 0
      %531 = vperm.xlu0 %530, %v372
      %v532 = vpop.permute.xlu0 %531
      %535 = vset.pattern.permute.xlu0 0
      %536 = vperm.xlu0 %535, %v373
      %v537 = vpop.permute.xlu0 %536
      %540 = vset.pattern.permute.xlu0 0
      %541 = vperm.xlu0 %540, %v374
      %v542 = vpop.permute.xlu0 %541
      %545 = vset.pattern.permute.xlu0 0
      %546 = vperm.xlu0 %545, %v375
      %v547 = vpop.permute.xlu0 %546
      %550 = vset.pattern.permute.xlu0 0
      %551 = vperm.xlu0 %550, %v376
      %v552 = vpop.permute.xlu0 %551
      %555 = vset.pattern.permute.xlu0 0
      %556 = vperm.xlu0 %555, %v377
      %v557 = vpop.permute.xlu0 %556
      %560 = vset.pattern.permute.xlu0 0
      %561 = vperm.xlu0 %560, %v378
      %v562 = vpop.permute.xlu0 %561
      %565 = vset.pattern.permute.xlu0 0
      %566 = vperm.xlu0 %565, %v379
      %v567 = vpop.permute.xlu0 %566
      %570 = vset.pattern.permute.xlu0 0
      %571 = vperm.xlu0 %570, %v380
      %v572 = vpop.permute.xlu0 %571
      %575 = vset.pattern.permute.xlu0 0
      %576 = vperm.xlu0 %575, %v381
      %v577 = vpop.permute.xlu0 %576
      %580 = vset.pattern.permute.xlu0 0
      %581 = vperm.xlu0 %580, %v382
      %v582 = vpop.permute.xlu0 %581
      %585 = vset.pattern.permute.xlu0 0
      %586 = vperm.xlu0 %585, %v383
      %v587 = vpop.permute.xlu0 %586
      %590 = vset.pattern.permute.xlu0 0
      %591 = vperm.xlu0 %590, %v384
      %v592 = vpop.permute.xlu0 %591
      %595 = vset.pattern.permute.xlu0 0
      %596 = vperm.xlu0 %595, %v385
      %v597 = vpop.permute.xlu0 %596
      %600 = vset.pattern.permute.xlu0 0
      %601 = vperm.xlu0 %600, %v386
      %v602 = vpop.permute.xlu0 %601
      %605 = vset.pattern.permute.xlu0 0
      %606 = vperm.xlu0 %605, %v387
      %v607 = vpop.permute.xlu0 %606
      %610 = vset.pattern.permute.xlu0 0
      %611 = vperm.xlu0 %610, %v388
      %v612 = vpop.permute.xlu0 %611
      %615 = vset.pattern.permute.xlu0 0
      %616 = vperm.xlu0 %615, %v389
      %v617 = vpop.permute.xlu0 %616
      %620 = vset.pattern.permute.xlu0 0
      %621 = vperm.xlu0 %620, %v390
      %v622 = vpop.permute.xlu0 %621
      %625 = vset.pattern.permute.xlu0 0
      %626 = vperm.xlu0 %625, %v391
      %v627 = vpop.permute.xlu0 %626
      %630 = vset.pattern.permute.xlu0 0
      %631 = vperm.xlu0 %630, %v392
      %v632 = vpop.permute.xlu0 %631
      %635 = vset.pattern.permute.xlu0 0
      %636 = vperm.xlu0 %635, %v393
      %v637 = vpop.permute.xlu0 %636
      %640 = vset.pattern.permute.xlu0 0
      %641 = vperm.xlu0 %640, %v394
      %v642 = vpop.permute.xlu0 %641
      %645 = vset.pattern.permute.xlu0 0
      %646 = vperm.xlu0 %645, %v395
      %v647 = vpop.permute.xlu0 %646
      %650 = vset.pattern.permute.xlu0 0
      %651 = vperm.xlu0 %650, %v396
      %v652 = vpop.permute.xlu0 %651
      %655 = vset.pattern.permute.xlu0 0
      %656 = vperm.xlu0 %655, %v397
      %v657 = vpop.permute.xlu0 %656
      %660 = vset.pattern.permute.xlu0 0
      %661 = vperm.xlu0 %660, %v398
      %v662 = vpop.permute.xlu0 %661
      %665 = vset.pattern.permute.xlu0 0
      %666 = vperm.xlu0 %665, %v399
      %v667 = vpop.permute.xlu0 %666
      %670 = vset.pattern.permute.xlu0 0
      %671 = vperm.xlu0 %670, %v400
      %v672 = vpop.permute.xlu0 %671
      %675 = vset.pattern.permute.xlu0 0
      %676 = vperm.xlu0 %675, %v401
      %v677 = vpop.permute.xlu0 %676
      %680 = vset.pattern.permute.xlu0 0
      %681 = vperm.xlu0 %680, %v402
      %v682 = vpop.permute.xlu0 %681
      %685 = vset.pattern.permute.xlu0 0
      %686 = vperm.xlu0 %685, %v403
      %v687 = vpop.permute.xlu0 %686
      %690 = vset.pattern.permute.xlu0 0
      %691 = vperm.xlu0 %690, %v404
      %v692 = vpop.permute.xlu0 %691
      %695 = vset.pattern.permute.xlu0 0
      %696 = vperm.xlu0 %695, %v405
      %v697 = vpop.permute.xlu0 %696
      %700 = vset.pattern.permute.xlu0 0
      %701 = vperm.xlu0 %700, %v406
      %v702 = vpop.permute.xlu0 %701
      %705 = vset.pattern.permute.xlu0 0
      %706 = vperm.xlu0 %705, %v407
      %v707 = vpop.permute.xlu0 %706
      %710 = vset.pattern.permute.xlu0 0
      %711 = vperm.xlu0 %710, %v408
      %v712 = vpop.permute.xlu0 %711
      %715 = vset.pattern.permute.xlu0 0
      %716 = vperm.xlu0 %715, %v409
      %v717 = vpop.permute.xlu0 %716
      %720 = vset.pattern.permute.xlu0 0
      %721 = vperm.xlu0 %720, %v410
      %v722 = vpop.permute.xlu0 %721
      %725 = vset.pattern.permute.xlu0 0
      %726 = vperm.xlu0 %725, %v411
      %v727 = vpop.permute.xlu0 %726
      %730 = vset.pattern.permute.xlu0 0
      %731 = vperm.xlu0 %730, %v412
      %v732 = vpop.permute.xlu0 %731
      %v734 = vlaneseq
      %v735 = vshrl.u32 %v734, 7
      %v736 = vsub.s32 0, %v735
      %v737 = vrot.slane %v413, %v736
      %v738 = vmul.f32 %v417, %v737
      %v739 = vmul.f32 %v422, %v737
      %v740 = vmul.f32 %v427, %v737
      %v741 = vmul.f32 %v432, %v737
      %v742 = vmul.f32 %v437, %v737
      %v743 = vmul.f32 %v442, %v737
      %v744 = vmul.f32 %v447, %v737
      %v745 = vmul.f32 %v452, %v737
      %v746 = vmul.f32 %v457, %v737
      %v747 = vmul.f32 %v462, %v737
      %v748 = vmul.f32 %v467, %v737
      %v749 = vmul.f32 %v472, %v737
      %v750 = vmul.f32 %v477, %v737
      %v751 = vmul.f32 %v482, %v737
      %v752 = vmul.f32 %v487, %v737
      %v753 = vmul.f32 %v492, %v737
      %v754 = vmul.f32 %v497, %v737
      %v755 = vmul.f32 %v502, %v737
      %v756 = vmul.f32 %v507, %v737
      %v757 = vmul.f32 %v512, %v737
      %v758 = vmul.f32 %v517, %v737
      %v759 = vmul.f32 %v522, %v737
      %v760 = vmul.f32 %v527, %v737
      %v761 = vmul.f32 %v532, %v737
      %v762 = vmul.f32 %v537, %v737
      %v763 = vmul.f32 %v542, %v737
      %v764 = vmul.f32 %v547, %v737
      %v765 = vmul.f32 %v552, %v737
      %v766 = vmul.f32 %v557, %v737
      %v767 = vmul.f32 %v562, %v737
      %v768 = vmul.f32 %v567, %v737
      %v769 = vmul.f32 %v572, %v737
      %v770 = vmul.f32 %v577, %v737
      %v771 = vmul.f32 %v582, %v737
      %v772 = vmul.f32 %v587, %v737
      %v773 = vmul.f32 %v592, %v737
      %v774 = vmul.f32 %v597, %v737
      %v775 = vmul.f32 %v602, %v737
      %v776 = vmul.f32 %v607, %v737
      %v777 = vmul.f32 %v612, %v737
      %v778 = vmul.f32 %v617, %v737
      %v779 = vmul.f32 %v622, %v737
      %v780 = vmul.f32 %v627, %v737
      %v781 = vmul.f32 %v632, %v737
      %v782 = vmul.f32 %v637, %v737
      %v783 = vmul.f32 %v642, %v737
      %v784 = vmul.f32 %v647, %v737
      %v785 = vmul.f32 %v652, %v737
      %v786 = vmul.f32 %v657, %v737
      %v787 = vmul.f32 %v662, %v737
      %v788 = vmul.f32 %v667, %v737
      %v789 = vmul.f32 %v672, %v737
      %v790 = vmul.f32 %v677, %v737
      %v791 = vmul.f32 %v682, %v737
      %v792 = vmul.f32 %v687, %v737
      %v793 = vmul.f32 %v692, %v737
      %v794 = vmul.f32 %v697, %v737
      %v795 = vmul.f32 %v702, %v737
      %v796 = vmul.f32 %v707, %v737
      %v797 = vmul.f32 %v712, %v737
      %v798 = vmul.f32 %v717, %v737
      %v799 = vmul.f32 %v722, %v737
      %v800 = vmul.f32 %v727, %v737
      %v801 = vmul.f32 %v732, %v737
      %802 = vset.pattern.permute.xlu0 1
      %803 = vperm.xlu0 %802, %v349
      %v804 = vpop.permute.xlu0 %803
      %806 = vset.pattern.permute.xlu0 1
      %807 = vperm.xlu0 %806, %v350
      %v808 = vpop.permute.xlu0 %807
      %810 = vset.pattern.permute.xlu0 1
      %811 = vperm.xlu0 %810, %v351
      %v812 = vpop.permute.xlu0 %811
      %814 = vset.pattern.permute.xlu0 1
      %815 = vperm.xlu0 %814, %v352
      %v816 = vpop.permute.xlu0 %815
      %818 = vset.pattern.permute.xlu0 1
      %819 = vperm.xlu0 %818, %v353
      %v820 = vpop.permute.xlu0 %819
      %822 = vset.pattern.permute.xlu0 1
      %823 = vperm.xlu0 %822, %v354
      %v824 = vpop.permute.xlu0 %823
      %826 = vset.pattern.permute.xlu0 1
      %827 = vperm.xlu0 %826, %v355
      %v828 = vpop.permute.xlu0 %827
      %830 = vset.pattern.permute.xlu0 1
      %831 = vperm.xlu0 %830, %v356
      %v832 = vpop.permute.xlu0 %831
      %834 = vset.pattern.permute.xlu0 1
      %835 = vperm.xlu0 %834, %v357
      %v836 = vpop.permute.xlu0 %835
      %838 = vset.pattern.permute.xlu0 1
      %839 = vperm.xlu0 %838, %v358
      %v840 = vpop.permute.xlu0 %839
      %842 = vset.pattern.permute.xlu0 1
      %843 = vperm.xlu0 %842, %v359
      %v844 = vpop.permute.xlu0 %843
      %846 = vset.pattern.permute.xlu0 1
      %847 = vperm.xlu0 %846, %v360
      %v848 = vpop.permute.xlu0 %847
      %850 = vset.pattern.permute.xlu0 1
      %851 = vperm.xlu0 %850, %v361
      %v852 = vpop.permute.xlu0 %851
      %854 = vset.pattern.permute.xlu0 1
      %855 = vperm.xlu0 %854, %v362
      %v856 = vpop.permute.xlu0 %855
      %858 = vset.pattern.permute.xlu0 1
      %859 = vperm.xlu0 %858, %v363
      %v860 = vpop.permute.xlu0 %859
      %862 = vset.pattern.permute.xlu0 1
      %863 = vperm.xlu0 %862, %v364
      %v864 = vpop.permute.xlu0 %863
      %866 = vset.pattern.permute.xlu0 1
      %867 = vperm.xlu0 %866, %v365
      %v868 = vpop.permute.xlu0 %867
      %870 = vset.pattern.permute.xlu0 1
      %871 = vperm.xlu0 %870, %v366
      %v872 = vpop.permute.xlu0 %871
      %874 = vset.pattern.permute.xlu0 1
      %875 = vperm.xlu0 %874, %v367
      %v876 = vpop.permute.xlu0 %875
      %878 = vset.pattern.permute.xlu0 1
      %879 = vperm.xlu0 %878, %v368
      %v880 = vpop.permute.xlu0 %879
      %882 = vset.pattern.permute.xlu0 1
      %883 = vperm.xlu0 %882, %v369
      %v884 = vpop.permute.xlu0 %883
      %886 = vset.pattern.permute.xlu0 1
      %887 = vperm.xlu0 %886, %v370
      %v888 = vpop.permute.xlu0 %887
      %890 = vset.pattern.permute.xlu0 1
      %891 = vperm.xlu0 %890, %v371
      %v892 = vpop.permute.xlu0 %891
      %894 = vset.pattern.permute.xlu0 1
      %895 = vperm.xlu0 %894, %v372
      %v896 = vpop.permute.xlu0 %895
      %898 = vset.pattern.permute.xlu0 1
      %899 = vperm.xlu0 %898, %v373
      %v900 = vpop.permute.xlu0 %899
      %902 = vset.pattern.permute.xlu0 1
      %903 = vperm.xlu0 %902, %v374
      %v904 = vpop.permute.xlu0 %903
      %906 = vset.pattern.permute.xlu0 1
      %907 = vperm.xlu0 %906, %v375
      %v908 = vpop.permute.xlu0 %907
      %910 = vset.pattern.permute.xlu0 1
      %911 = vperm.xlu0 %910, %v376
      %v912 = vpop.permute.xlu0 %911
      %914 = vset.pattern.permute.xlu0 1
      %915 = vperm.xlu0 %914, %v377
      %v916 = vpop.permute.xlu0 %915
      %918 = vset.pattern.permute.xlu0 1
      %919 = vperm.xlu0 %918, %v378
      %v920 = vpop.permute.xlu0 %919
      %922 = vset.pattern.permute.xlu0 1
      %923 = vperm.xlu0 %922, %v379
      %v924 = vpop.permute.xlu0 %923
      %926 = vset.pattern.permute.xlu0 1
      %927 = vperm.xlu0 %926, %v380
      %v928 = vpop.permute.xlu0 %927
      %930 = vset.pattern.permute.xlu0 1
      %931 = vperm.xlu0 %930, %v381
      %v932 = vpop.permute.xlu0 %931
      %934 = vset.pattern.permute.xlu0 1
      %935 = vperm.xlu0 %934, %v382
      %v936 = vpop.permute.xlu0 %935
      %938 = vset.pattern.permute.xlu0 1
      %939 = vperm.xlu0 %938, %v383
      %v940 = vpop.permute.xlu0 %939
      %942 = vset.pattern.permute.xlu0 1
      %943 = vperm.xlu0 %942, %v384
      %v944 = vpop.permute.xlu0 %943
      %946 = vset.pattern.permute.xlu0 1
      %947 = vperm.xlu0 %946, %v385
      %v948 = vpop.permute.xlu0 %947
      %950 = vset.pattern.permute.xlu0 1
      %951 = vperm.xlu0 %950, %v386
      %v952 = vpop.permute.xlu0 %951
      %954 = vset.pattern.permute.xlu0 1
      %955 = vperm.xlu0 %954, %v387
      %v956 = vpop.permute.xlu0 %955
      %958 = vset.pattern.permute.xlu0 1
      %959 = vperm.xlu0 %958, %v388
      %v960 = vpop.permute.xlu0 %959
      %962 = vset.pattern.permute.xlu0 1
      %963 = vperm.xlu0 %962, %v389
      %v964 = vpop.permute.xlu0 %963
      %966 = vset.pattern.permute.xlu0 1
      %967 = vperm.xlu0 %966, %v390
      %v968 = vpop.permute.xlu0 %967
      %970 = vset.pattern.permute.xlu0 1
      %971 = vperm.xlu0 %970, %v391
      %v972 = vpop.permute.xlu0 %971
      %974 = vset.pattern.permute.xlu0 1
      %975 = vperm.xlu0 %974, %v392
      %v976 = vpop.permute.xlu0 %975
      %978 = vset.pattern.permute.xlu0 1
      %979 = vperm.xlu0 %978, %v393
      %v980 = vpop.permute.xlu0 %979
      %982 = vset.pattern.permute.xlu0 1
      %983 = vperm.xlu0 %982, %v394
      %v984 = vpop.permute.xlu0 %983
      %986 = vset.pattern.permute.xlu0 1
      %987 = vperm.xlu0 %986, %v395
      %v988 = vpop.permute.xlu0 %987
      %990 = vset.pattern.permute.xlu0 1
      %991 = vperm.xlu0 %990, %v396
      %v992 = vpop.permute.xlu0 %991
      %994 = vset.pattern.permute.xlu0 1
      %995 = vperm.xlu0 %994, %v397
      %v996 = vpop.permute.xlu0 %995
      %998 = vset.pattern.permute.xlu0 1
      %999 = vperm.xlu0 %998, %v398
      %v1000 = vpop.permute.xlu0 %999
      %1002 = vset.pattern.permute.xlu0 1
      %1003 = vperm.xlu0 %1002, %v399
      %v1004 = vpop.permute.xlu0 %1003
      %1006 = vset.pattern.permute.xlu0 1
      %1007 = vperm.xlu0 %1006, %v400
      %v1008 = vpop.permute.xlu0 %1007
      %1010 = vset.pattern.permute.xlu0 1
      %1011 = vperm.xlu0 %1010, %v401
      %v1012 = vpop.permute.xlu0 %1011
      %1014 = vset.pattern.permute.xlu0 1
      %1015 = vperm.xlu0 %1014, %v402
      %v1016 = vpop.permute.xlu0 %1015
      %1018 = vset.pattern.permute.xlu0 1
      %1019 = vperm.xlu0 %1018, %v403
      %v1020 = vpop.permute.xlu0 %1019
      %1022 = vset.pattern.permute.xlu0 1
      %1023 = vperm.xlu0 %1022, %v404
      %v1024 = vpop.permute.xlu0 %1023
      %1026 = vset.pattern.permute.xlu0 1
      %1027 = vperm.xlu0 %1026, %v405
      %v1028 = vpop.permute.xlu0 %1027
      %1030 = vset.pattern.permute.xlu0 1
      %1031 = vperm.xlu0 %1030, %v406
      %v1032 = vpop.permute.xlu0 %1031
      %1034 = vset.pattern.permute.xlu0 1
      %1035 = vperm.xlu0 %1034, %v407
      %v1036 = vpop.permute.xlu0 %1035
      %1038 = vset.pattern.permute.xlu0 1
      %1039 = vperm.xlu0 %1038, %v408
      %v1040 = vpop.permute.xlu0 %1039
      %1042 = vset.pattern.permute.xlu0 1
      %1043 = vperm.xlu0 %1042, %v409
      %v1044 = vpop.permute.xlu0 %1043
      %1046 = vset.pattern.permute.xlu0 1
      %1047 = vperm.xlu0 %1046, %v410
      %v1048 = vpop.permute.xlu0 %1047
      %1050 = vset.pattern.permute.xlu0 1
      %1051 = vperm.xlu0 %1050, %v411
      %v1052 = vpop.permute.xlu0 %1051
      %1054 = vset.pattern.permute.xlu0 1
      %1055 = vperm.xlu0 %1054, %v412
      %v1056 = vpop.permute.xlu0 %1055
      %v1058 = vlaneseq
      %v1059 = vshrl.u32 %v1058, 7
      %v1060 = vsub.s32 1, %v1059
      %v1061 = vrot.slane %v413, %v1060
      %v1062 = vmul.f32 %v804, %v1061
      %v1063 = vmul.f32 %v808, %v1061
      %v1064 = vmul.f32 %v812, %v1061
      %v1065 = vmul.f32 %v816, %v1061
      %v1066 = vmul.f32 %v820, %v1061
      %v1067 = vmul.f32 %v824, %v1061
      %v1068 = vmul.f32 %v828, %v1061
      %v1069 = vmul.f32 %v832, %v1061
      %v1070 = vmul.f32 %v836, %v1061
      %v1071 = vmul.f32 %v840, %v1061
      %v1072 = vmul.f32 %v844, %v1061
      %v1073 = vmul.f32 %v848, %v1061
      %v1074 = vmul.f32 %v852, %v1061
      %v1075 = vmul.f32 %v856, %v1061
      %v1076 = vmul.f32 %v860, %v1061
      %v1077 = vmul.f32 %v864, %v1061
      %v1078 = vmul.f32 %v868, %v1061
      %v1079 = vmul.f32 %v872, %v1061
      %v1080 = vmul.f32 %v876, %v1061
      %v1081 = vmul.f32 %v880, %v1061
      %v1082 = vmul.f32 %v884, %v1061
      %v1083 = vmul.f32 %v888, %v1061
      %v1084 = vmul.f32 %v892, %v1061
      %v1085 = vmul.f32 %v896, %v1061
      %v1086 = vmul.f32 %v900, %v1061
      %v1087 = vmul.f32 %v904, %v1061
      %v1088 = vmul.f32 %v908, %v1061
      %v1089 = vmul.f32 %v912, %v1061
      %v1090 = vmul.f32 %v916, %v1061
      %v1091 = vmul.f32 %v920, %v1061
      %v1092 = vmul.f32 %v924, %v1061
      %v1093 = vmul.f32 %v928, %v1061
      %v1094 = vmul.f32 %v932, %v1061
      %v1095 = vmul.f32 %v936, %v1061
      %v1096 = vmul.f32 %v940, %v1061
      %v1097 = vmul.f32 %v944, %v1061
      %v1098 = vmul.f32 %v948, %v1061
      %v1099 = vmul.f32 %v952, %v1061
      %v1100 = vmul.f32 %v956, %v1061
      %v1101 = vmul.f32 %v960, %v1061
      %v1102 = vmul.f32 %v964, %v1061
      %v1103 = vmul.f32 %v968, %v1061
      %v1104 = vmul.f32 %v972, %v1061
      %v1105 = vmul.f32 %v976, %v1061
      %v1106 = vmul.f32 %v980, %v1061
      %v1107 = vmul.f32 %v984, %v1061
      %v1108 = vmul.f32 %v988, %v1061
      %v1109 = vmul.f32 %v992, %v1061
      %v1110 = vmul.f32 %v996, %v1061
      %v1111 = vmul.f32 %v1000, %v1061
      %v1112 = vmul.f32 %v1004, %v1061
      %v1113 = vmul.f32 %v1008, %v1061
      %v1114 = vmul.f32 %v1012, %v1061
      %v1115 = vmul.f32 %v1016, %v1061
      %v1116 = vmul.f32 %v1020, %v1061
      %v1117 = vmul.f32 %v1024, %v1061
      %v1118 = vmul.f32 %v1028, %v1061
      %v1119 = vmul.f32 %v1032, %v1061
      %v1120 = vmul.f32 %v1036, %v1061
      %v1121 = vmul.f32 %v1040, %v1061
      %v1122 = vmul.f32 %v1044, %v1061
      %v1123 = vmul.f32 %v1048, %v1061
      %v1124 = vmul.f32 %v1052, %v1061
      %v1125 = vmul.f32 %v1056, %v1061
      %v1126 = vadd.f32 %v738, %v1062
      %v1127 = vadd.f32 %v739, %v1063
      %v1128 = vadd.f32 %v740, %v1064
      %v1129 = vadd.f32 %v741, %v1065
      %v1130 = vadd.f32 %v742, %v1066
      %v1131 = vadd.f32 %v743, %v1067
      %v1132 = vadd.f32 %v744, %v1068
      %v1133 = vadd.f32 %v745, %v1069
      %v1134 = vadd.f32 %v746, %v1070
      %v1135 = vadd.f32 %v747, %v1071
      %v1136 = vadd.f32 %v748, %v1072
      %v1137 = vadd.f32 %v749, %v1073
      %v1138 = vadd.f32 %v750, %v1074
      %v1139 = vadd.f32 %v751, %v1075
      %v1140 = vadd.f32 %v752, %v1076
      %v1141 = vadd.f32 %v753, %v1077
      %v1142 = vadd.f32 %v754, %v1078
      %v1143 = vadd.f32 %v755, %v1079
      %v1144 = vadd.f32 %v756, %v1080
      %v1145 = vadd.f32 %v757, %v1081
      %v1146 = vadd.f32 %v758, %v1082
      %v1147 = vadd.f32 %v759, %v1083
      %v1148 = vadd.f32 %v760, %v1084
      %v1149 = vadd.f32 %v761, %v1085
      %v1150 = vadd.f32 %v762, %v1086
      %v1151 = vadd.f32 %v763, %v1087
      %v1152 = vadd.f32 %v764, %v1088
      %v1153 = vadd.f32 %v765, %v1089
      %v1154 = vadd.f32 %v766, %v1090
      %v1155 = vadd.f32 %v767, %v1091
      %v1156 = vadd.f32 %v768, %v1092
      %v1157 = vadd.f32 %v769, %v1093
      %v1158 = vadd.f32 %v770, %v1094
      %v1159 = vadd.f32 %v771, %v1095
      %v1160 = vadd.f32 %v772, %v1096
      %v1161 = vadd.f32 %v773, %v1097
      %v1162 = vadd.f32 %v774, %v1098
      %v1163 = vadd.f32 %v775, %v1099
      %v1164 = vadd.f32 %v776, %v1100
      %v1165 = vadd.f32 %v777, %v1101
      %v1166 = vadd.f32 %v778, %v1102
      %v1167 = vadd.f32 %v779, %v1103
      %v1168 = vadd.f32 %v780, %v1104
      %v1169 = vadd.f32 %v781, %v1105
      %v1170 = vadd.f32 %v782, %v1106
      %v1171 = vadd.f32 %v783, %v1107
      %v1172 = vadd.f32 %v784, %v1108
      %v1173 = vadd.f32 %v785, %v1109
      %v1174 = vadd.f32 %v786, %v1110
      %v1175 = vadd.f32 %v787, %v1111
      %v1176 = vadd.f32 %v788, %v1112
      %v1177 = vadd.f32 %v789, %v1113
      %v1178 = vadd.f32 %v790, %v1114
      %v1179 = vadd.f32 %v791, %v1115
      %v1180 = vadd.f32 %v792, %v1116
      %v1181 = vadd.f32 %v793, %v1117
      %v1182 = vadd.f32 %v794, %v1118
      %v1183 = vadd.f32 %v795, %v1119
      %v1184 = vadd.f32 %v796, %v1120
      %v1185 = vadd.f32 %v797, %v1121
      %v1186 = vadd.f32 %v798, %v1122
      %v1187 = vadd.f32 %v799, %v1123
      %v1188 = vadd.f32 %v800, %v1124
      %v1189 = vadd.f32 %v801, %v1125
      %1190 = vset.pattern.permute.xlu0 2
      %1191 = vperm.xlu0 %1190, %v349
      %v1192 = vpop.permute.xlu0 %1191
      %1194 = vset.pattern.permute.xlu0 2
      %1195 = vperm.xlu0 %1194, %v350
      %v1196 = vpop.permute.xlu0 %1195
      %1198 = vset.pattern.permute.xlu0 2
      %1199 = vperm.xlu0 %1198, %v351
      %v1200 = vpop.permute.xlu0 %1199
      %1202 = vset.pattern.permute.xlu0 2
      %1203 = vperm.xlu0 %1202, %v352
      %v1204 = vpop.permute.xlu0 %1203
      %1206 = vset.pattern.permute.xlu0 2
      %1207 = vperm.xlu0 %1206, %v353
      %v1208 = vpop.permute.xlu0 %1207
      %1210 = vset.pattern.permute.xlu0 2
      %1211 = vperm.xlu0 %1210, %v354
      %v1212 = vpop.permute.xlu0 %1211
      %1214 = vset.pattern.permute.xlu0 2
      %1215 = vperm.xlu0 %1214, %v355
      %v1216 = vpop.permute.xlu0 %1215
      %1218 = vset.pattern.permute.xlu0 2
      %1219 = vperm.xlu0 %1218, %v356
      %v1220 = vpop.permute.xlu0 %1219
      %1222 = vset.pattern.permute.xlu0 2
      %1223 = vperm.xlu0 %1222, %v357
      %v1224 = vpop.permute.xlu0 %1223
      %1226 = vset.pattern.permute.xlu0 2
      %1227 = vperm.xlu0 %1226, %v358
      %v1228 = vpop.permute.xlu0 %1227
      %1230 = vset.pattern.permute.xlu0 2
      %1231 = vperm.xlu0 %1230, %v359
      %v1232 = vpop.permute.xlu0 %1231
      %1234 = vset.pattern.permute.xlu0 2
      %1235 = vperm.xlu0 %1234, %v360
      %v1236 = vpop.permute.xlu0 %1235
      %1238 = vset.pattern.permute.xlu0 2
      %1239 = vperm.xlu0 %1238, %v361
      %v1240 = vpop.permute.xlu0 %1239
      %1242 = vset.pattern.permute.xlu0 2
      %1243 = vperm.xlu0 %1242, %v362
      %v1244 = vpop.permute.xlu0 %1243
      %1246 = vset.pattern.permute.xlu0 2
      %1247 = vperm.xlu0 %1246, %v363
      %v1248 = vpop.permute.xlu0 %1247
      %1250 = vset.pattern.permute.xlu0 2
      %1251 = vperm.xlu0 %1250, %v364
      %v1252 = vpop.permute.xlu0 %1251
      %1254 = vset.pattern.permute.xlu0 2
      %1255 = vperm.xlu0 %1254, %v365
      %v1256 = vpop.permute.xlu0 %1255
      %1258 = vset.pattern.permute.xlu0 2
      %1259 = vperm.xlu0 %1258, %v366
      %v1260 = vpop.permute.xlu0 %1259
      %1262 = vset.pattern.permute.xlu0 2
      %1263 = vperm.xlu0 %1262, %v367
      %v1264 = vpop.permute.xlu0 %1263
      %1266 = vset.pattern.permute.xlu0 2
      %1267 = vperm.xlu0 %1266, %v368
      %v1268 = vpop.permute.xlu0 %1267
      %1270 = vset.pattern.permute.xlu0 2
      %1271 = vperm.xlu0 %1270, %v369
      %v1272 = vpop.permute.xlu0 %1271
      %1274 = vset.pattern.permute.xlu0 2
      %1275 = vperm.xlu0 %1274, %v370
      %v1276 = vpop.permute.xlu0 %1275
      %1278 = vset.pattern.permute.xlu0 2
      %1279 = vperm.xlu0 %1278, %v371
      %v1280 = vpop.permute.xlu0 %1279
      %1282 = vset.pattern.permute.xlu0 2
      %1283 = vperm.xlu0 %1282, %v372
      %v1284 = vpop.permute.xlu0 %1283
      %1286 = vset.pattern.permute.xlu0 2
      %1287 = vperm.xlu0 %1286, %v373
      %v1288 = vpop.permute.xlu0 %1287
      %1290 = vset.pattern.permute.xlu0 2
      %1291 = vperm.xlu0 %1290, %v374
      %v1292 = vpop.permute.xlu0 %1291
      %1294 = vset.pattern.permute.xlu0 2
      %1295 = vperm.xlu0 %1294, %v375
      %v1296 = vpop.permute.xlu0 %1295
      %1298 = vset.pattern.permute.xlu0 2
      %1299 = vperm.xlu0 %1298, %v376
      %v1300 = vpop.permute.xlu0 %1299
      %1302 = vset.pattern.permute.xlu0 2
      %1303 = vperm.xlu0 %1302, %v377
      %v1304 = vpop.permute.xlu0 %1303
      %1306 = vset.pattern.permute.xlu0 2
      %1307 = vperm.xlu0 %1306, %v378
      %v1308 = vpop.permute.xlu0 %1307
      %1310 = vset.pattern.permute.xlu0 2
      %1311 = vperm.xlu0 %1310, %v379
      %v1312 = vpop.permute.xlu0 %1311
      %1314 = vset.pattern.permute.xlu0 2
      %1315 = vperm.xlu0 %1314, %v380
      %v1316 = vpop.permute.xlu0 %1315
      %1318 = vset.pattern.permute.xlu0 2
      %1319 = vperm.xlu0 %1318, %v381
      %v1320 = vpop.permute.xlu0 %1319
      %1322 = vset.pattern.permute.xlu0 2
      %1323 = vperm.xlu0 %1322, %v382
      %v1324 = vpop.permute.xlu0 %1323
      %1326 = vset.pattern.permute.xlu0 2
      %1327 = vperm.xlu0 %1326, %v383
      %v1328 = vpop.permute.xlu0 %1327
      %1330 = vset.pattern.permute.xlu0 2
      %1331 = vperm.xlu0 %1330, %v384
      %v1332 = vpop.permute.xlu0 %1331
      %1334 = vset.pattern.permute.xlu0 2
      %1335 = vperm.xlu0 %1334, %v385
      %v1336 = vpop.permute.xlu0 %1335
      %1338 = vset.pattern.permute.xlu0 2
      %1339 = vperm.xlu0 %1338, %v386
      %v1340 = vpop.permute.xlu0 %1339
      %1342 = vset.pattern.permute.xlu0 2
      %1343 = vperm.xlu0 %1342, %v387
      %v1344 = vpop.permute.xlu0 %1343
      %1346 = vset.pattern.permute.xlu0 2
      %1347 = vperm.xlu0 %1346, %v388
      %v1348 = vpop.permute.xlu0 %1347
      %1350 = vset.pattern.permute.xlu0 2
      %1351 = vperm.xlu0 %1350, %v389
      %v1352 = vpop.permute.xlu0 %1351
      %1354 = vset.pattern.permute.xlu0 2
      %1355 = vperm.xlu0 %1354, %v390
      %v1356 = vpop.permute.xlu0 %1355
      %1358 = vset.pattern.permute.xlu0 2
      %1359 = vperm.xlu0 %1358, %v391
      %v1360 = vpop.permute.xlu0 %1359
      %1362 = vset.pattern.permute.xlu0 2
      %1363 = vperm.xlu0 %1362, %v392
      %v1364 = vpop.permute.xlu0 %1363
      %1366 = vset.pattern.permute.xlu0 2
      %1367 = vperm.xlu0 %1366, %v393
      %v1368 = vpop.permute.xlu0 %1367
      %1370 = vset.pattern.permute.xlu0 2
      %1371 = vperm.xlu0 %1370, %v394
      %v1372 = vpop.permute.xlu0 %1371
      %1374 = vset.pattern.permute.xlu0 2
      %1375 = vperm.xlu0 %1374, %v395
      %v1376 = vpop.permute.xlu0 %1375
      %1378 = vset.pattern.permute.xlu0 2
      %1379 = vperm.xlu0 %1378, %v396
      %v1380 = vpop.permute.xlu0 %1379
      %1382 = vset.pattern.permute.xlu0 2
      %1383 = vperm.xlu0 %1382, %v397
      %v1384 = vpop.permute.xlu0 %1383
      %1386 = vset.pattern.permute.xlu0 2
      %1387 = vperm.xlu0 %1386, %v398
      %v1388 = vpop.permute.xlu0 %1387
      %1390 = vset.pattern.permute.xlu0 2
      %1391 = vperm.xlu0 %1390, %v399
      %v1392 = vpop.permute.xlu0 %1391
      %1394 = vset.pattern.permute.xlu0 2
      %1395 = vperm.xlu0 %1394, %v400
      %v1396 = vpop.permute.xlu0 %1395
      %1398 = vset.pattern.permute.xlu0 2
      %1399 = vperm.xlu0 %1398, %v401
      %v1400 = vpop.permute.xlu0 %1399
      %1402 = vset.pattern.permute.xlu0 2
      %1403 = vperm.xlu0 %1402, %v402
      %v1404 = vpop.permute.xlu0 %1403
      %1406 = vset.pattern.permute.xlu0 2
      %1407 = vperm.xlu0 %1406, %v403
      %v1408 = vpop.permute.xlu0 %1407
      %1410 = vset.pattern.permute.xlu0 2
      %1411 = vperm.xlu0 %1410, %v404
      %v1412 = vpop.permute.xlu0 %1411
      %1414 = vset.pattern.permute.xlu0 2
      %1415 = vperm.xlu0 %1414, %v405
      %v1416 = vpop.permute.xlu0 %1415
      %1418 = vset.pattern.permute.xlu0 2
      %1419 = vperm.xlu0 %1418, %v406
      %v1420 = vpop.permute.xlu0 %1419
      %1422 = vset.pattern.permute.xlu0 2
      %1423 = vperm.xlu0 %1422, %v407
      %v1424 = vpop.permute.xlu0 %1423
      %1426 = vset.pattern.permute.xlu0 2
      %1427 = vperm.xlu0 %1426, %v408
      %v1428 = vpop.permute.xlu0 %1427
      %1430 = vset.pattern.permute.xlu0 2
      %1431 = vperm.xlu0 %1430, %v409
      %v1432 = vpop.permute.xlu0 %1431
      %1434 = vset.pattern.permute.xlu0 2
      %1435 = vperm.xlu0 %1434, %v410
      %v1436 = vpop.permute.xlu0 %1435
      %1438 = vset.pattern.permute.xlu0 2
      %1439 = vperm.xlu0 %1438, %v411
      %v1440 = vpop.permute.xlu0 %1439
      %1442 = vset.pattern.permute.xlu0 2
      %1443 = vperm.xlu0 %1442, %v412
      %v1444 = vpop.permute.xlu0 %1443
      %v1446 = vlaneseq
      %v1447 = vshrl.u32 %v1446, 7
      %v1448 = vsub.s32 2, %v1447
      %v1449 = vrot.slane %v413, %v1448
      %v1450 = vmul.f32 %v1192, %v1449
      %v1451 = vmul.f32 %v1196, %v1449
      %v1452 = vmul.f32 %v1200, %v1449
      %v1453 = vmul.f32 %v1204, %v1449
      %v1454 = vmul.f32 %v1208, %v1449
      %v1455 = vmul.f32 %v1212, %v1449
      %v1456 = vmul.f32 %v1216, %v1449
      %v1457 = vmul.f32 %v1220, %v1449
      %v1458 = vmul.f32 %v1224, %v1449
      %v1459 = vmul.f32 %v1228, %v1449
      %v1460 = vmul.f32 %v1232, %v1449
      %v1461 = vmul.f32 %v1236, %v1449
      %v1462 = vmul.f32 %v1240, %v1449
      %v1463 = vmul.f32 %v1244, %v1449
      %v1464 = vmul.f32 %v1248, %v1449
      %v1465 = vmul.f32 %v1252, %v1449
      %v1466 = vmul.f32 %v1256, %v1449
      %v1467 = vmul.f32 %v1260, %v1449
      %v1468 = vmul.f32 %v1264, %v1449
      %v1469 = vmul.f32 %v1268, %v1449
      %v1470 = vmul.f32 %v1272, %v1449
      %v1471 = vmul.f32 %v1276, %v1449
      %v1472 = vmul.f32 %v1280, %v1449
      %v1473 = vmul.f32 %v1284, %v1449
      %v1474 = vmul.f32 %v1288, %v1449
      %v1475 = vmul.f32 %v1292, %v1449
      %v1476 = vmul.f32 %v1296, %v1449
      %v1477 = vmul.f32 %v1300, %v1449
      %v1478 = vmul.f32 %v1304, %v1449
      %v1479 = vmul.f32 %v1308, %v1449
      %v1480 = vmul.f32 %v1312, %v1449
      %v1481 = vmul.f32 %v1316, %v1449
      %v1482 = vmul.f32 %v1320, %v1449
      %v1483 = vmul.f32 %v1324, %v1449
      %v1484 = vmul.f32 %v1328, %v1449
      %v1485 = vmul.f32 %v1332, %v1449
      %v1486 = vmul.f32 %v1336, %v1449
      %v1487 = vmul.f32 %v1340, %v1449
      %v1488 = vmul.f32 %v1344, %v1449
      %v1489 = vmul.f32 %v1348, %v1449
      %v1490 = vmul.f32 %v1352, %v1449
      %v1491 = vmul.f32 %v1356, %v1449
      %v1492 = vmul.f32 %v1360, %v1449
      %v1493 = vmul.f32 %v1364, %v1449
      %v1494 = vmul.f32 %v1368, %v1449
      %v1495 = vmul.f32 %v1372, %v1449
      %v1496 = vmul.f32 %v1376, %v1449
      %v1497 = vmul.f32 %v1380, %v1449
      %v1498 = vmul.f32 %v1384, %v1449
      %v1499 = vmul.f32 %v1388, %v1449
      %v1500 = vmul.f32 %v1392, %v1449
      %v1501 = vmul.f32 %v1396, %v1449
      %v1502 = vmul.f32 %v1400, %v1449
      %v1503 = vmul.f32 %v1404, %v1449
      %v1504 = vmul.f32 %v1408, %v1449
      %v1505 = vmul.f32 %v1412, %v1449
      %v1506 = vmul.f32 %v1416, %v1449
      %v1507 = vmul.f32 %v1420, %v1449
      %v1508 = vmul.f32 %v1424, %v1449
      %v1509 = vmul.f32 %v1428, %v1449
      %v1510 = vmul.f32 %v1432, %v1449
      %v1511 = vmul.f32 %v1436, %v1449
      %v1512 = vmul.f32 %v1440, %v1449
      %v1513 = vmul.f32 %v1444, %v1449
      %v1514 = vadd.f32 %v1126, %v1450
      %v1515 = vadd.f32 %v1127, %v1451
      %v1516 = vadd.f32 %v1128, %v1452
      %v1517 = vadd.f32 %v1129, %v1453
      %v1518 = vadd.f32 %v1130, %v1454
      %v1519 = vadd.f32 %v1131, %v1455
      %v1520 = vadd.f32 %v1132, %v1456
      %v1521 = vadd.f32 %v1133, %v1457
      %v1522 = vadd.f32 %v1134, %v1458
      %v1523 = vadd.f32 %v1135, %v1459
      %v1524 = vadd.f32 %v1136, %v1460
      %v1525 = vadd.f32 %v1137, %v1461
      %v1526 = vadd.f32 %v1138, %v1462
      %v1527 = vadd.f32 %v1139, %v1463
      %v1528 = vadd.f32 %v1140, %v1464
      %v1529 = vadd.f32 %v1141, %v1465
      %v1530 = vadd.f32 %v1142, %v1466
      %v1531 = vadd.f32 %v1143, %v1467
      %v1532 = vadd.f32 %v1144, %v1468
      %v1533 = vadd.f32 %v1145, %v1469
      %v1534 = vadd.f32 %v1146, %v1470
      %v1535 = vadd.f32 %v1147, %v1471
      %v1536 = vadd.f32 %v1148, %v1472
      %v1537 = vadd.f32 %v1149, %v1473
      %v1538 = vadd.f32 %v1150, %v1474
      %v1539 = vadd.f32 %v1151, %v1475
      %v1540 = vadd.f32 %v1152, %v1476
      %v1541 = vadd.f32 %v1153, %v1477
      %v1542 = vadd.f32 %v1154, %v1478
      %v1543 = vadd.f32 %v1155, %v1479
      %v1544 = vadd.f32 %v1156, %v1480
      %v1545 = vadd.f32 %v1157, %v1481
      %v1546 = vadd.f32 %v1158, %v1482
      %v1547 = vadd.f32 %v1159, %v1483
      %v1548 = vadd.f32 %v1160, %v1484
      %v1549 = vadd.f32 %v1161, %v1485
      %v1550 = vadd.f32 %v1162, %v1486
      %v1551 = vadd.f32 %v1163, %v1487
      %v1552 = vadd.f32 %v1164, %v1488
      %v1553 = vadd.f32 %v1165, %v1489
      %v1554 = vadd.f32 %v1166, %v1490
      %v1555 = vadd.f32 %v1167, %v1491
      %v1556 = vadd.f32 %v1168, %v1492
      %v1557 = vadd.f32 %v1169, %v1493
      %v1558 = vadd.f32 %v1170, %v1494
      %v1559 = vadd.f32 %v1171, %v1495
      %v1560 = vadd.f32 %v1172, %v1496
      %v1561 = vadd.f32 %v1173, %v1497
      %v1562 = vadd.f32 %v1174, %v1498
      %v1563 = vadd.f32 %v1175, %v1499
      %v1564 = vadd.f32 %v1176, %v1500
      %v1565 = vadd.f32 %v1177, %v1501
      %v1566 = vadd.f32 %v1178, %v1502
      %v1567 = vadd.f32 %v1179, %v1503
      %v1568 = vadd.f32 %v1180, %v1504
      %v1569 = vadd.f32 %v1181, %v1505
      %v1570 = vadd.f32 %v1182, %v1506
      %v1571 = vadd.f32 %v1183, %v1507
      %v1572 = vadd.f32 %v1184, %v1508
      %v1573 = vadd.f32 %v1185, %v1509
      %v1574 = vadd.f32 %v1186, %v1510
      %v1575 = vadd.f32 %v1187, %v1511
      %v1576 = vadd.f32 %v1188, %v1512
      %v1577 = vadd.f32 %v1189, %v1513
      %v1579 = vlaneseq
      %v1580 = vshrl.u32 %v1579, 7
      %v1581 = vsub.s32 0, %v1580
      %v1582 = vrot.slane %v348, %v1581
      %v1584 = vadd.f32 %v1514, %v1582
      %v1585 = vadd.f32 %v1515, %v1582
      %v1586 = vadd.f32 %v1516, %v1582
      %v1587 = vadd.f32 %v1517, %v1582
      %v1588 = vadd.f32 %v1518, %v1582
      %v1589 = vadd.f32 %v1519, %v1582
      %v1590 = vadd.f32 %v1520, %v1582
      %v1591 = vadd.f32 %v1521, %v1582
      %v1592 = vadd.f32 %v1522, %v1582
      %v1593 = vadd.f32 %v1523, %v1582
      %v1594 = vadd.f32 %v1524, %v1582
      %v1595 = vadd.f32 %v1525, %v1582
      %v1596 = vadd.f32 %v1526, %v1582
      %v1597 = vadd.f32 %v1527, %v1582
      %v1598 = vadd.f32 %v1528, %v1582
      %v1599 = vadd.f32 %v1529, %v1582
      %v1600 = vadd.f32 %v1530, %v1582
      %v1601 = vadd.f32 %v1531, %v1582
      %v1602 = vadd.f32 %v1532, %v1582
      %v1603 = vadd.f32 %v1533, %v1582
      %v1604 = vadd.f32 %v1534, %v1582
      %v1605 = vadd.f32 %v1535, %v1582
      %v1606 = vadd.f32 %v1536, %v1582
      %v1607 = vadd.f32 %v1537, %v1582
      %v1608 = vadd.f32 %v1538, %v1582
      %v1609 = vadd.f32 %v1539, %v1582
      %v1610 = vadd.f32 %v1540, %v1582
      %v1611 = vadd.f32 %v1541, %v1582
      %v1612 = vadd.f32 %v1542, %v1582
      %v1613 = vadd.f32 %v1543, %v1582
      %v1614 = vadd.f32 %v1544, %v1582
      %v1615 = vadd.f32 %v1545, %v1582
      %v1616 = vadd.f32 %v1546, %v1582
      %v1617 = vadd.f32 %v1547, %v1582
      %v1618 = vadd.f32 %v1548, %v1582
      %v1619 = vadd.f32 %v1549, %v1582
      %v1620 = vadd.f32 %v1550, %v1582
      %v1621 = vadd.f32 %v1551, %v1582
      %v1622 = vadd.f32 %v1552, %v1582
      %v1623 = vadd.f32 %v1553, %v1582
      %v1624 = vadd.f32 %v1554, %v1582
      %v1625 = vadd.f32 %v1555, %v1582
      %v1626 = vadd.f32 %v1556, %v1582
      %v1627 = vadd.f32 %v1557, %v1582
      %v1628 = vadd.f32 %v1558, %v1582
      %v1629 = vadd.f32 %v1559, %v1582
      %v1630 = vadd.f32 %v1560, %v1582
      %v1631 = vadd.f32 %v1561, %v1582
      %v1632 = vadd.f32 %v1562, %v1582
      %v1633 = vadd.f32 %v1563, %v1582
      %v1634 = vadd.f32 %v1564, %v1582
      %v1635 = vadd.f32 %v1565, %v1582
      %v1636 = vadd.f32 %v1566, %v1582
      %v1637 = vadd.f32 %v1567, %v1582
      %v1638 = vadd.f32 %v1568, %v1582
      %v1639 = vadd.f32 %v1569, %v1582
      %v1640 = vadd.f32 %v1570, %v1582
      %v1641 = vadd.f32 %v1571, %v1582
      %v1642 = vadd.f32 %v1572, %v1582
      %v1643 = vadd.f32 %v1573, %v1582
      %v1644 = vadd.f32 %v1574, %v1582
      %v1645 = vadd.f32 %v1575, %v1582
      %v1646 = vadd.f32 %v1576, %v1582
      %v1647 = vadd.f32 %v1577, %v1582
      %v1648 = vmax.f32 %v1584, 0.0
      %v1649 = vmax.f32 %v1585, 0.0
      %v1650 = vmax.f32 %v1586, 0.0
      %v1651 = vmax.f32 %v1587, 0.0
      %v1652 = vmax.f32 %v1588, 0.0
      %v1653 = vmax.f32 %v1589, 0.0
      %v1654 = vmax.f32 %v1590, 0.0
      %v1655 = vmax.f32 %v1591, 0.0
      %v1656 = vmax.f32 %v1592, 0.0
      %v1657 = vmax.f32 %v1593, 0.0
      %v1658 = vmax.f32 %v1594, 0.0
      %v1659 = vmax.f32 %v1595, 0.0
      %v1660 = vmax.f32 %v1596, 0.0
      %v1661 = vmax.f32 %v1597, 0.0
      %v1662 = vmax.f32 %v1598, 0.0
      %v1663 = vmax.f32 %v1599, 0.0
      %v1664 = vmax.f32 %v1600, 0.0
      %v1665 = vmax.f32 %v1601, 0.0
      %v1666 = vmax.f32 %v1602, 0.0
      %v1667 = vmax.f32 %v1603, 0.0
      %v1668 = vmax.f32 %v1604, 0.0
      %v1669 = vmax.f32 %v1605, 0.0
      %v1670 = vmax.f32 %v1606, 0.0
      %v1671 = vmax.f32 %v1607, 0.0
      %v1672 = vmax.f32 %v1608, 0.0
      %v1673 = vmax.f32 %v1609, 0.0
      %v1674 = vmax.f32 %v1610, 0.0
      %v1675 = vmax.f32 %v1611, 0.0
      %v1676 = vmax.f32 %v1612, 0.0
      %v1677 = vmax.f32 %v1613, 0.0
      %v1678 = vmax.f32 %v1614, 0.0
      %v1679 = vmax.f32 %v1615, 0.0
      %v1680 = vmax.f32 %v1616, 0.0
      %v1681 = vmax.f32 %v1617, 0.0
      %v1682 = vmax.f32 %v1618, 0.0
      %v1683 = vmax.f32 %v1619, 0.0
      %v1684 = vmax.f32 %v1620, 0.0
      %v1685 = vmax.f32 %v1621, 0.0
      %v1686 = vmax.f32 %v1622, 0.0
      %v1687 = vmax.f32 %v1623, 0.0
      %v1688 = vmax.f32 %v1624, 0.0
      %v1689 = vmax.f32 %v1625, 0.0
      %v1690 = vmax.f32 %v1626, 0.0
      %v1691 = vmax.f32 %v1627, 0.0
      %v1692 = vmax.f32 %v1628, 0.0
      %v1693 = vmax.f32 %v1629, 0.0
      %v1694 = vmax.f32 %v1630, 0.0
      %v1695 = vmax.f32 %v1631, 0.0
      %v1696 = vmax.f32 %v1632, 0.0
      %v1697 = vmax.f32 %v1633, 0.0
      %v1698 = vmax.f32 %v1634, 0.0
      %v1699 = vmax.f32 %v1635, 0.0
      %v1700 = vmax.f32 %v1636, 0.0
      %v1701 = vmax.f32 %v1637, 0.0
      %v1702 = vmax.f32 %v1638, 0.0
      %v1703 = vmax.f32 %v1639, 0.0
      %v1704 = vmax.f32 %v1640, 0.0
      %v1705 = vmax.f32 %v1641, 0.0
      %v1706 = vmax.f32 %v1642, 0.0
      %v1707 = vmax.f32 %v1643, 0.0
      %v1708 = vmax.f32 %v1644, 0.0
      %v1709 = vmax.f32 %v1645, 0.0
      %v1710 = vmax.f32 %v1646, 0.0
      %v1711 = vmax.f32 %v1647, 0.0
      %v1712 = vpack.c.bf16 %v1649, %v1648
      %v1713 = vpack.c.bf16 %v1651, %v1650
      %v1714 = vpack.c.bf16 %v1653, %v1652
      %v1715 = vpack.c.bf16 %v1655, %v1654
      %v1716 = vpack.c.bf16 %v1657, %v1656
      %v1717 = vpack.c.bf16 %v1659, %v1658
      %v1718 = vpack.c.bf16 %v1661, %v1660
      %v1719 = vpack.c.bf16 %v1663, %v1662
      %v1720 = vpack.c.bf16 %v1665, %v1664
      %v1721 = vpack.c.bf16 %v1667, %v1666
      %v1722 = vpack.c.bf16 %v1669, %v1668
      %v1723 = vpack.c.bf16 %v1671, %v1670
      %v1724 = vpack.c.bf16 %v1673, %v1672
      %v1725 = vpack.c.bf16 %v1675, %v1674
      %v1726 = vpack.c.bf16 %v1677, %v1676
      %v1727 = vpack.c.bf16 %v1679, %v1678
      %v1728 = vpack.c.bf16 %v1681, %v1680
      %v1729 = vpack.c.bf16 %v1683, %v1682
      %v1730 = vpack.c.bf16 %v1685, %v1684
      %v1731 = vpack.c.bf16 %v1687, %v1686
      %v1732 = vpack.c.bf16 %v1689, %v1688
      %v1733 = vpack.c.bf16 %v1691, %v1690
      %v1734 = vpack.c.bf16 %v1693, %v1692
      %v1735 = vpack.c.bf16 %v1695, %v1694
      %v1736 = vpack.c.bf16 %v1697, %v1696
      %v1737 = vpack.c.bf16 %v1699, %v1698
      %v1738 = vpack.c.bf16 %v1701, %v1700
      %v1739 = vpack.c.bf16 %v1703, %v1702
      %v1740 = vpack.c.bf16 %v1705, %v1704
      %v1741 = vpack.c.bf16 %v1707, %v1706
      %v1742 = vpack.c.bf16 %v1709, %v1708
      %v1743 = vpack.c.bf16 %v1711, %v1710
      %v1744 = vld [vmem:[%s3] sm:$0xf]
      %v1745 = vld [vmem:[%s3 + $0x4] sm:$0xf]
      %v1746 = vld [vmem:[%s4] sm:$0x1]
      %v1748 = vlaneseq
      %v1749 = vshrl.u32 %v1748, 7
      %v1750 = vsub.s32 0, %v1749
      %v1751 = vrot.slane %v1746, %v1750
      %v1755 = vunpack.c.l.b16 %v1744
      %v1756 = vunpack.c.l.b16 %v1745
      %v1757 = vpack.c.b16 %v1756, %v1755
      %vm1759 = vcmask 130048
      %v1761 = vsel %vm1759, %v1712, 0
      %v1764 = vsel %vm1759, %v1713, 0
      %v1767 = vsel %vm1759, %v1714, 0
      %v1770 = vsel %vm1759, %v1715, 0
      %v1773 = vsel %vm1759, %v1716, 0
      %v1776 = vsel %vm1759, %v1717, 0
      %v1779 = vsel %vm1759, %v1718, 0
      %v1782 = vsel %vm1759, %v1719, 0
      %v1785 = vsel %vm1759, %v1720, 0
      %v1788 = vsel %vm1759, %v1721, 0
      %v1791 = vsel %vm1759, %v1722, 0
      %v1794 = vsel %vm1759, %v1723, 0
      %v1797 = vsel %vm1759, %v1724, 0
      %v1800 = vsel %vm1759, %v1725, 0
      %v1803 = vsel %vm1759, %v1726, 0
      %v1806 = vsel %vm1759, %v1727, 0
      %v1809 = vsel %vm1759, %v1728, 0
      %v1812 = vsel %vm1759, %v1729, 0
      %v1815 = vsel %vm1759, %v1730, 0
      %v1818 = vsel %vm1759, %v1731, 0
      %v1821 = vsel %vm1759, %v1732, 0
      %v1824 = vsel %vm1759, %v1733, 0
      %v1827 = vsel %vm1759, %v1734, 0
      %v1830 = vsel %vm1759, %v1735, 0
      %v1833 = vsel %vm1759, %v1736, 0
      %v1836 = vsel %vm1759, %v1737, 0
      %v1839 = vsel %vm1759, %v1738, 0
      %v1842 = vsel %vm1759, %v1739, 0
      %v1845 = vsel %vm1759, %v1740, 0
      %v1848 = vsel %vm1759, %v1741, 0
      %v1851 = vsel %vm1759, %v1742, 0
      %v1854 = vsel %vm1759, %v1743, 0
      %1856 = vmatprep.subr.bf16.mxu0 0
      %1857 = vmatpush1.bf16.msra.mxu0 %v1757
      %1858 = vmatprep.subr.bf16.mxu0 0
      %1859 = vmatpush1.bf16.msra.mxu0 0
      %1860 = vmatprep.subr.bf16.mxu0 0
      %1861 = vmatpush1.bf16.msra.mxu0 0
      %1862 = vmatprep.subr.bf16.mxu0 0
      %1863 = vmatpush1.bf16.msra.mxu0 0
      %1864 = vmatprep.subr.bf16.mxu0 0
      %1865 = vmatpush1.bf16.msra.mxu0 0
      %1866 = vmatprep.subr.bf16.mxu0 0
      %1867 = vmatpush1.bf16.msra.mxu0 0
      %1868 = vmatprep.subr.bf16.mxu0 0
      %1869 = vmatpush1.bf16.msra.mxu0 0
      %1870 = vmatprep.subr.bf16.mxu0 0
      %1871 = vmatpush1.bf16.msra.mxu0 0
      %1872 = vmatprep.subr.bf16.mxu0 0
      %1873 = vmatpush1.bf16.msra.mxu0 0
      %1874 = vmatprep.subr.bf16.mxu0 0
      %1875 = vmatpush1.bf16.msra.mxu0 0
      %1876 = vmatprep.subr.bf16.mxu0 0
      %1877 = vmatpush1.bf16.msra.mxu0 0
      %1878 = vmatprep.subr.bf16.mxu0 0
      %1879 = vmatpush1.bf16.msra.mxu0 0
      %1880 = vmatprep.subr.bf16.mxu0 0
      %1881 = vmatpush1.bf16.msra.mxu0 0
      %1882 = vmatprep.subr.bf16.mxu0 0
      %1883 = vmatpush1.bf16.msra.mxu0 0
      %1884 = vmatprep.subr.bf16.mxu0 0
      %1885 = vmatpush1.bf16.msra.mxu0 0
      %1886 = vmatprep.subr.bf16.mxu0 0
      %1887 = vmatpush1.bf16.msra.mxu0 0
      %1888 = vmatprep.mubr.bf16.mxu0 0
      %1889 = vmatmul.mubr.bf16.gmra.mrb[0].mxu0 %v1761
      %v1890 = vpop.f32.mrb[0].mxu0
      %v1891 = vadd.f32 %v1751, %v1890
      %v1892 = vpop.f32.mrb[0].mxu0
      %v1893 = vpop.f32.mrb[0].mxu0
      %v1894 = vadd.f32 %v1751, %v1893
      %v1895 = vpop.f32.mrb[0].mxu0
      %1896 = vmatprep.mubr.bf16.mxu0 0
      %1897 = vmatmul.mubr.bf16.gmra.mrb[0].mxu0 %v1764
      %v1898 = vpop.f32.mrb[0].mxu0
      %v1899 = vadd.f32 %v1751, %v1898
      %v1900 = vpop.f32.mrb[0].mxu0
      %v1901 = vpop.f32.mrb[0].mxu0
      %v1902 = vadd.f32 %v1751, %v1901
      %v1903 = vpop.f32.mrb[0].mxu0
      %1904 = vmatprep.mubr.bf16.mxu0 0
      %1905 = vmatmul.mubr.bf16.gmra.mrb[0].mxu0 %v1767
      %v1906 = vpop.f32.mrb[0].mxu0
      %v1907 = vadd.f32 %v1751, %v1906
      %v1908 = vpop.f32.mrb[0].mxu0
      %v1909 = vpop.f32.mrb[0].mxu0
      %v1910 = vadd.f32 %v1751, %v1909
      %v1911 = vpop.f32.mrb[0].mxu0
      %1912 = vmatprep.mubr.bf16.mxu0 0
      %1913 = vmatmul.mubr.bf16.gmra.mrb[0].mxu0 %v1770
      %v1914 = vpop.f32.mrb[0].mxu0
      %v1915 = vadd.f32 %v1751, %v1914
      %v1916 = vpop.f32.mrb[0].mxu0
      %v1917 = vpop.f32.mrb[0].mxu0
      %v1918 = vadd.f32 %v1751, %v1917
      %v1919 = vpop.f32.mrb[0].mxu0
      %1920 = vmatprep.mubr.bf16.mxu0 0
      %1921 = vmatmul.mubr.bf16.gmra.mrb[0].mxu0 %v1773
      %v1922 = vpop.f32.mrb[0].mxu0
      %v1923 = vadd.f32 %v1751, %v1922
      %v1924 = vpop.f32.mrb[0].mxu0
      %v1925 = vpop.f32.mrb[0].mxu0
      %v1926 = vadd.f32 %v1751, %v1925
      %v1927 = vpop.f32.mrb[0].mxu0
      %1928 = vmatprep.mubr.bf16.mxu0 0
      %1929 = vmatmul.mubr.bf16.gmra.mrb[0].mxu0 %v1776
      %v1930 = vpop.f32.mrb[0].mxu0
      %v1931 = vadd.f32 %v1751, %v1930
      %v1932 = vpop.f32.mrb[0].mxu0
      %v1933 = vpop.f32.mrb[0].mxu0
      %v1934 = vadd.f32 %v1751, %v1933
      %v1935 = vpop.f32.mrb[0].mxu0
      %1936 = vmatprep.mubr.bf16.mxu0 0
      %1937 = vmatmul.mubr.bf16.gmra.mrb[0].mxu0 %v1779
      %v1938 = vpop.f32.mrb[0].mxu0
      %v1939 = vadd.f32 %v1751, %v1938
      %v1940 = vpop.f32.mrb[0].mxu0
      %v1941 = vpop.f32.mrb[0].mxu0
      %v1942 = vadd.f32 %v1751, %v1941
      %v1943 = vpop.f32.mrb[0].mxu0
      %1944 = vmatprep.mubr.bf16.mxu0 0
      %1945 = vmatmul.mubr.bf16.gmra.mrb[0].mxu0 %v1782
      %v1946 = vpop.f32.mrb[0].mxu0
      %v1947 = vadd.f32 %v1751, %v1946
      %v1948 = vpop.f32.mrb[0].mxu0
      %v1949 = vpop.f32.mrb[0].mxu0
      %v1950 = vadd.f32 %v1751, %v1949
      %v1951 = vpop.f32.mrb[0].mxu0
      %1952 = vmatprep.mubr.bf16.mxu0 0
      %1953 = vmatmul.mubr.bf16.gmra.mrb[0].mxu0 %v1785
      %v1954 = vpop.f32.mrb[0].mxu0
      %v1955 = vadd.f32 %v1751, %v1954
      %v1956 = vpop.f32.mrb[0].mxu0
      %v1957 = vpop.f32.mrb[0].mxu0
      %v1958 = vadd.f32 %v1751, %v1957
      %v1959 = vpop.f32.mrb[0].mxu0
      %1960 = vmatprep.mubr.bf16.mxu0 0
      %1961 = vmatmul.mubr.bf16.gmra.mrb[0].mxu0 %v1788
      %v1962 = vpop.f32.mrb[0].mxu0
      %v1963 = vadd.f32 %v1751, %v1962
      %v1964 = vpop.f32.mrb[0].mxu0
      %v1965 = vpop.f32.mrb[0].mxu0
      %v1966 = vadd.f32 %v1751, %v1965
      %v1967 = vpop.f32.mrb[0].mxu0
      %1968 = vmatprep.mubr.bf16.mxu0 0
      %1969 = vmatmul.mubr.bf16.gmra.mrb[0].mxu0 %v1791
      %v1970 = vpop.f32.mrb[0].mxu0
      %v1971 = vadd.f32 %v1751, %v1970
      %v1972 = vpop.f32.mrb[0].mxu0
      %v1973 = vpop.f32.mrb[0].mxu0
      %v1974 = vadd.f32 %v1751, %v1973
      %v1975 = vpop.f32.mrb[0].mxu0
      %1976 = vmatprep.mubr.bf16.mxu0 0
      %1977 = vmatmul.mubr.bf16.gmra.mrb[0].mxu0 %v1794
      %v1978 = vpop.f32.mrb[0].mxu0
      %v1979 = vadd.f32 %v1751, %v1978
      %v1980 = vpop.f32.mrb[0].mxu0
      %v1981 = vpop.f32.mrb[0].mxu0
      %v1982 = vadd.f32 %v1751, %v1981
      %v1983 = vpop.f32.mrb[0].mxu0
      %1984 = vmatprep.mubr.bf16.mxu0 0
      %1985 = vmatmul.mubr.bf16.gmra.mrb[0].mxu0 %v1797
      %v1986 = vpop.f32.mrb[0].mxu0
      %v1987 = vadd.f32 %v1751, %v1986
      %v1988 = vpop.f32.mrb[0].mxu0
      %v1989 = vpop.f32.mrb[0].mxu0
      %v1990 = vadd.f32 %v1751, %v1989
      %v1991 = vpop.f32.mrb[0].mxu0
      %1992 = vmatprep.mubr.bf16.mxu0 0
      %1993 = vmatmul.mubr.bf16.gmra.mrb[0].mxu0 %v1800
      %v1994 = vpop.f32.mrb[0].mxu0
      %v1995 = vadd.f32 %v1751, %v1994
      %v1996 = vpop.f32.mrb[0].mxu0
      %v1997 = vpop.f32.mrb[0].mxu0
      %v1998 = vadd.f32 %v1751, %v1997
      %v1999 = vpop.f32.mrb[0].mxu0
      %2000 = vmatprep.mubr.bf16.mxu0 0
      %2001 = vmatmul.mubr.bf16.gmra.mrb[0].mxu0 %v1803
      %v2002 = vpop.f32.mrb[0].mxu0
      %v2003 = vadd.f32 %v1751, %v2002
      %v2004 = vpop.f32.mrb[0].mxu0
      %v2005 = vpop.f32.mrb[0].mxu0
      %v2006 = vadd.f32 %v1751, %v2005
      %v2007 = vpop.f32.mrb[0].mxu0
      %2008 = vmatprep.mubr.bf16.mxu0 0
      %2009 = vmatmul.mubr.bf16.gmra.mrb[0].mxu0 %v1806
      %v2010 = vpop.f32.mrb[0].mxu0
      %v2011 = vadd.f32 %v1751, %v2010
      %v2012 = vpop.f32.mrb[0].mxu0
      %v2013 = vpop.f32.mrb[0].mxu0
      %v2014 = vadd.f32 %v1751, %v2013
      %v2015 = vpop.f32.mrb[0].mxu0
      %2016 = vmatprep.mubr.bf16.mxu0 0
      %2017 = vmatmul.mubr.bf16.gmra.mrb[0].mxu0 %v1809
      %v2018 = vpop.f32.mrb[0].mxu0
      %v2019 = vadd.f32 %v1751, %v2018
      %v2020 = vpop.f32.mrb[0].mxu0
      %v2021 = vpop.f32.mrb[0].mxu0
      %v2022 = vadd.f32 %v1751, %v2021
      %v2023 = vpop.f32.mrb[0].mxu0
      %2024 = vmatprep.mubr.bf16.mxu0 0
      %2025 = vmatmul.mubr.bf16.gmra.mrb[0].mxu0 %v1812
      %v2026 = vpop.f32.mrb[0].mxu0
      %v2027 = vadd.f32 %v1751, %v2026
      %v2028 = vpop.f32.mrb[0].mxu0
      %v2029 = vpop.f32.mrb[0].mxu0
      %v2030 = vadd.f32 %v1751, %v2029
      %v2031 = vpop.f32.mrb[0].mxu0
      %2032 = vmatprep.mubr.bf16.mxu0 0
      %2033 = vmatmul.mubr.bf16.gmra.mrb[0].mxu0 %v1815
      %v2034 = vpop.f32.mrb[0].mxu0
      %v2035 = vadd.f32 %v1751, %v2034
      %v2036 = vpop.f32.mrb[0].mxu0
      %v2037 = vpop.f32.mrb[0].mxu0
      %v2038 = vadd.f32 %v1751, %v2037
      %v2039 = vpop.f32.mrb[0].mxu0
      %2040 = vmatprep.mubr.bf16.mxu0 0
      %2041 = vmatmul.mubr.bf16.gmra.mrb[0].mxu0 %v1818
      %v2042 = vpop.f32.mrb[0].mxu0
      %v2043 = vadd.f32 %v1751, %v2042
      %v2044 = vpop.f32.mrb[0].mxu0
      %v2045 = vpop.f32.mrb[0].mxu0
      %v2046 = vadd.f32 %v1751, %v2045
      %v2047 = vpop.f32.mrb[0].mxu0
      %2048 = vmatprep.mubr.bf16.mxu0 0
      %2049 = vmatmul.mubr.bf16.gmra.mrb[0].mxu0 %v1821
      %v2050 = vpop.f32.mrb[0].mxu0
      %v2051 = vadd.f32 %v1751, %v2050
      %v2052 = vpop.f32.mrb[0].mxu0
      %v2053 = vpop.f32.mrb[0].mxu0
      %v2054 = vadd.f32 %v1751, %v2053
      %v2055 = vpop.f32.mrb[0].mxu0
      %2056 = vmatprep.mubr.bf16.mxu0 0
      %2057 = vmatmul.mubr.bf16.gmra.mrb[0].mxu0 %v1824
      %v2058 = vpop.f32.mrb[0].mxu0
      %v2059 = vadd.f32 %v1751, %v2058
      %v2060 = vpop.f32.mrb[0].mxu0
      %v2061 = vpop.f32.mrb[0].mxu0
      %v2062 = vadd.f32 %v1751, %v2061
      %v2063 = vpop.f32.mrb[0].mxu0
      %2064 = vmatprep.mubr.bf16.mxu0 0
      %2065 = vmatmul.mubr.bf16.gmra.mrb[0].mxu0 %v1827
      %v2066 = vpop.f32.mrb[0].mxu0
      %v2067 = vadd.f32 %v1751, %v2066
      %v2068 = vpop.f32.mrb[0].mxu0
      %v2069 = vpop.f32.mrb[0].mxu0
      %v2070 = vadd.f32 %v1751, %v2069
      %v2071 = vpop.f32.mrb[0].mxu0
      %2072 = vmatprep.mubr.bf16.mxu0 0
      %2073 = vmatmul.mubr.bf16.gmra.mrb[0].mxu0 %v1830
      %v2074 = vpop.f32.mrb[0].mxu0
      %v2075 = vadd.f32 %v1751, %v2074
      %v2076 = vpop.f32.mrb[0].mxu0
      %v2077 = vpop.f32.mrb[0].mxu0
      %v2078 = vadd.f32 %v1751, %v2077
      %v2079 = vpop.f32.mrb[0].mxu0
      %2080 = vmatprep.mubr.bf16.mxu0 0
      %2081 = vmatmul.mubr.bf16.gmra.mrb[0].mxu0 %v1833
      %v2082 = vpop.f32.mrb[0].mxu0
      %v2083 = vadd.f32 %v1751, %v2082
      %v2084 = vpop.f32.mrb[0].mxu0
      %v2085 = vpop.f32.mrb[0].mxu0
      %v2086 = vadd.f32 %v1751, %v2085
      %v2087 = vpop.f32.mrb[0].mxu0
      %2088 = vmatprep.mubr.bf16.mxu0 0
      %2089 = vmatmul.mubr.bf16.gmra.mrb[0].mxu0 %v1836
      %v2090 = vpop.f32.mrb[0].mxu0
      %v2091 = vadd.f32 %v1751, %v2090
      %v2092 = vpop.f32.mrb[0].mxu0
      %v2093 = vpop.f32.mrb[0].mxu0
      %v2094 = vadd.f32 %v1751, %v2093
      %v2095 = vpop.f32.mrb[0].mxu0
      %2096 = vmatprep.mubr.bf16.mxu0 0
      %2097 = vmatmul.mubr.bf16.gmra.mrb[0].mxu0 %v1839
      %v2098 = vpop.f32.mrb[0].mxu0
      %v2099 = vadd.f32 %v1751, %v2098
      %v2100 = vpop.f32.mrb[0].mxu0
      %v2101 = vpop.f32.mrb[0].mxu0
      %v2102 = vadd.f32 %v1751, %v2101
      %v2103 = vpop.f32.mrb[0].mxu0
      %2104 = vmatprep.mubr.bf16.mxu0 0
      %2105 = vmatmul.mubr.bf16.gmra.mrb[0].mxu0 %v1842
      %v2106 = vpop.f32.mrb[0].mxu0
      %v2107 = vadd.f32 %v1751, %v2106
      %v2108 = vpop.f32.mrb[0].mxu0
      %v2109 = vpop.f32.mrb[0].mxu0
      %v2110 = vadd.f32 %v1751, %v2109
      %v2111 = vpop.f32.mrb[0].mxu0
      %2112 = vmatprep.mubr.bf16.mxu0 0
      %2113 = vmatmul.mubr.bf16.gmra.mrb[0].mxu0 %v1845
      %v2114 = vpop.f32.mrb[0].mxu0
      %v2115 = vadd.f32 %v1751, %v2114
      %v2116 = vpop.f32.mrb[0].mxu0
      %v2117 = vpop.f32.mrb[0].mxu0
      %v2118 = vadd.f32 %v1751, %v2117
      %v2119 = vpop.f32.mrb[0].mxu0
      %2120 = vmatprep.mubr.bf16.mxu0 0
      %2121 = vmatmul.mubr.bf16.gmra.mrb[0].mxu0 %v1848
      %v2122 = vpop.f32.mrb[0].mxu0
      %v2123 = vadd.f32 %v1751, %v2122
      %v2124 = vpop.f32.mrb[0].mxu0
      %v2125 = vpop.f32.mrb[0].mxu0
      %v2126 = vadd.f32 %v1751, %v2125
      %v2127 = vpop.f32.mrb[0].mxu0
      %2128 = vmatprep.mubr.bf16.mxu0 0
      %2129 = vmatmul.mubr.bf16.gmra.mrb[0].mxu0 %v1851
      %v2130 = vpop.f32.mrb[0].mxu0
      %v2131 = vadd.f32 %v1751, %v2130
      %v2132 = vpop.f32.mrb[0].mxu0
      %v2133 = vpop.f32.mrb[0].mxu0
      %v2134 = vadd.f32 %v1751, %v2133
      %v2135 = vpop.f32.mrb[0].mxu0
      %2136 = vmatprep.mubr.bf16.mxu0 0
      %2137 = vmatmul.mubr.bf16.gmra.mrb[0].mxu0 %v1854
      %v2138 = vpop.f32.mrb[0].mxu0
      %v2139 = vadd.f32 %v1751, %v2138
      %v2140 = vpop.f32.mrb[0].mxu0
      %v2141 = vpop.f32.mrb[0].mxu0
      %v2142 = vadd.f32 %v1751, %v2141
      %v2143 = vpop.f32.mrb[0].mxu0
      %2144 = vdwg.mxu0
      %v2145 = vmax.f32 %v1891, 0.0
      %v2146 = vmax.f32 %v1894, 0.0
      %v2147 = vmax.f32 %v1899, 0.0
      %v2148 = vmax.f32 %v1902, 0.0
      %v2149 = vmax.f32 %v1907, 0.0
      %v2150 = vmax.f32 %v1910, 0.0
      %v2151 = vmax.f32 %v1915, 0.0
      %v2152 = vmax.f32 %v1918, 0.0
      %v2153 = vmax.f32 %v1923, 0.0
      %v2154 = vmax.f32 %v1926, 0.0
      %v2155 = vmax.f32 %v1931, 0.0
      %v2156 = vmax.f32 %v1934, 0.0
      %v2157 = vmax.f32 %v1939, 0.0
      %v2158 = vmax.f32 %v1942, 0.0
      %v2159 = vmax.f32 %v1947, 0.0
      %v2160 = vmax.f32 %v1950, 0.0
      %v2161 = vmax.f32 %v1955, 0.0
      %v2162 = vmax.f32 %v1958, 0.0
      %v2163 = vmax.f32 %v1963, 0.0
      %v2164 = vmax.f32 %v1966, 0.0
      %v2165 = vmax.f32 %v1971, 0.0
      %v2166 = vmax.f32 %v1974, 0.0
      %v2167 = vmax.f32 %v1979, 0.0
      %v2168 = vmax.f32 %v1982, 0.0
      %v2169 = vmax.f32 %v1987, 0.0
      %v2170 = vmax.f32 %v1990, 0.0
      %v2171 = vmax.f32 %v1995, 0.0
      %v2172 = vmax.f32 %v1998, 0.0
      %v2173 = vmax.f32 %v2003, 0.0
      %v2174 = vmax.f32 %v2006, 0.0
      %v2175 = vmax.f32 %v2011, 0.0
      %v2176 = vmax.f32 %v2014, 0.0
      %v2177 = vmax.f32 %v2019, 0.0
      %v2178 = vmax.f32 %v2022, 0.0
      %v2179 = vmax.f32 %v2027, 0.0
      %v2180 = vmax.f32 %v2030, 0.0
      %v2181 = vmax.f32 %v2035, 0.0
      %v2182 = vmax.f32 %v2038, 0.0
      %v2183 = vmax.f32 %v2043, 0.0
      %v2184 = vmax.f32 %v2046, 0.0
      %v2185 = vmax.f32 %v2051, 0.0
      %v2186 = vmax.f32 %v2054, 0.0
      %v2187 = vmax.f32 %v2059, 0.0
      %v2188 = vmax.f32 %v2062, 0.0
      %v2189 = vmax.f32 %v2067, 0.0
      %v2190 = vmax.f32 %v2070, 0.0
      %v2191 = vmax.f32 %v2075, 0.0
      %v2192 = vmax.f32 %v2078, 0.0
      %v2193 = vmax.f32 %v2083, 0.0
      %v2194 = vmax.f32 %v2086, 0.0
      %v2195 = vmax.f32 %v2091, 0.0
      %v2196 = vmax.f32 %v2094, 0.0
      %v2197 = vmax.f32 %v2099, 0.0
      %v2198 = vmax.f32 %v2102, 0.0
      %v2199 = vmax.f32 %v2107, 0.0
      %v2200 = vmax.f32 %v2110, 0.0
      %v2201 = vmax.f32 %v2115, 0.0
      %v2202 = vmax.f32 %v2118, 0.0
      %v2203 = vmax.f32 %v2123, 0.0
      %v2204 = vmax.f32 %v2126, 0.0
      %v2205 = vmax.f32 %v2131, 0.0
      %v2206 = vmax.f32 %v2134, 0.0
      %v2207 = vmax.f32 %v2139, 0.0
      %v2208 = vmax.f32 %v2142, 0.0
      %v2209 = vpack.c.bf16 %v2146, %v2145
      %v2210 = vpack.c.bf16 %v2148, %v2147
      %v2211 = vpack.c.bf16 %v2150, %v2149
      %v2212 = vpack.c.bf16 %v2152, %v2151
      %v2213 = vpack.c.bf16 %v2154, %v2153
      %v2214 = vpack.c.bf16 %v2156, %v2155
      %v2215 = vpack.c.bf16 %v2158, %v2157
      %v2216 = vpack.c.bf16 %v2160, %v2159
      %v2217 = vpack.c.bf16 %v2162, %v2161
      %v2218 = vpack.c.bf16 %v2164, %v2163
      %v2219 = vpack.c.bf16 %v2166, %v2165
      %v2220 = vpack.c.bf16 %v2168, %v2167
      %v2221 = vpack.c.bf16 %v2170, %v2169
      %v2222 = vpack.c.bf16 %v2172, %v2171
      %v2223 = vpack.c.bf16 %v2174, %v2173
      %v2224 = vpack.c.bf16 %v2176, %v2175
      %v2225 = vpack.c.bf16 %v2178, %v2177
      %v2226 = vpack.c.bf16 %v2180, %v2179
      %v2227 = vpack.c.bf16 %v2182, %v2181
      %v2228 = vpack.c.bf16 %v2184, %v2183
      %v2229 = vpack.c.bf16 %v2186, %v2185
      %v2230 = vpack.c.bf16 %v2188, %v2187
      %v2231 = vpack.c.bf16 %v2190, %v2189
      %v2232 = vpack.c.bf16 %v2192, %v2191
      %v2233 = vpack.c.bf16 %v2194, %v2193
      %v2234 = vpack.c.bf16 %v2196, %v2195
      %v2235 = vpack.c.bf16 %v2198, %v2197
      %v2236 = vpack.c.bf16 %v2200, %v2199
      %v2237 = vpack.c.bf16 %v2202, %v2201
      %v2238 = vpack.c.bf16 %v2204, %v2203
      %v2239 = vpack.c.bf16 %v2206, %v2205
      %v2240 = vpack.c.bf16 %v2208, %v2207
      %v2241 = vld [vmem:[%s5] sm:$0xf]
      %v2242 = vld [vmem:[%s5 + $0x4] sm:$0xf]
      %v2243 = vld [vmem:[%s6] sm:$0x1]
      %v2245 = vlaneseq
      %v2246 = vshrl.u32 %v2245, 7
      %v2247 = vsub.s32 0, %v2246
      %v2248 = vrot.slane %v2243, %v2247
      %v2252 = vunpack.c.l.b16 %v2241
      %v2253 = vunpack.c.l.b16 %v2242
      %v2254 = vpack.c.b16 %v2253, %v2252
      %v2257 = vsel %vm1759, %v2209, 0
      %v2260 = vsel %vm1759, %v2210, 0
      %v2263 = vsel %vm1759, %v2211, 0
      %v2266 = vsel %vm1759, %v2212, 0
      %v2269 = vsel %vm1759, %v2213, 0
      %v2272 = vsel %vm1759, %v2214, 0
      %v2275 = vsel %vm1759, %v2215, 0
      %v2278 = vsel %vm1759, %v2216, 0
      %v2281 = vsel %vm1759, %v2217, 0
      %v2284 = vsel %vm1759, %v2218, 0
      %v2287 = vsel %vm1759, %v2219, 0
      %v2290 = vsel %vm1759, %v2220, 0
      %v2293 = vsel %vm1759, %v2221, 0
      %v2296 = vsel %vm1759, %v2222, 0
      %v2299 = vsel %vm1759, %v2223, 0
      %v2302 = vsel %vm1759, %v2224, 0
      %v2305 = vsel %vm1759, %v2225, 0
      %v2308 = vsel %vm1759, %v2226, 0
      %v2311 = vsel %vm1759, %v2227, 0
      %v2314 = vsel %vm1759, %v2228, 0
      %v2317 = vsel %vm1759, %v2229, 0
      %v2320 = vsel %vm1759, %v2230, 0
      %v2323 = vsel %vm1759, %v2231, 0
      %v2326 = vsel %vm1759, %v2232, 0
      %v2329 = vsel %vm1759, %v2233, 0
      %v2332 = vsel %vm1759, %v2234, 0
      %v2335 = vsel %vm1759, %v2235, 0
      %v2338 = vsel %vm1759, %v2236, 0
      %v2341 = vsel %vm1759, %v2237, 0
      %v2344 = vsel %vm1759, %v2238, 0
      %v2347 = vsel %vm1759, %v2239, 0
      %v2350 = vsel %vm1759, %v2240, 0
      %2352 = vmatprep.subr.bf16.mxu0 0
      %2353 = vmatpush1.bf16.msra.mxu0 %v2254
      %2354 = vmatprep.subr.bf16.mxu0 0
      %2355 = vmatpush1.bf16.msra.mxu0 0
      %2356 = vmatprep.subr.bf16.mxu0 0
      %2357 = vmatpush1.bf16.msra.mxu0 0
      %2358 = vmatprep.subr.bf16.mxu0 0
      %2359 = vmatpush1.bf16.msra.mxu0 0
      %2360 = vmatprep.subr.bf16.mxu0 0
      %2361 = vmatpush1.bf16.msra.mxu0 0
      %2362 = vmatprep.subr.bf16.mxu0 0
      %2363 = vmatpush1.bf16.msra.mxu0 0
      %2364 = vmatprep.subr.bf16.mxu0 0
      %2365 = vmatpush1.bf16.msra.mxu0 0
      %2366 = vmatprep.subr.bf16.mxu0 0
      %2367 = vmatpush1.bf16.msra.mxu0 0
      %2368 = vmatprep.subr.bf16.mxu0 0
      %2369 = vmatpush1.bf16.msra.mxu0 0
      %2370 = vmatprep.subr.bf16.mxu0 0
      %2371 = vmatpush1.bf16.msra.mxu0 0
      %2372 = vmatprep.subr.bf16.mxu0 0
      %2373 = vmatpush1.bf16.msra.mxu0 0
      %2374 = vmatprep.subr.bf16.mxu0 0
      %2375 = vmatpush1.bf16.msra.mxu0 0
      %2376 = vmatprep.subr.bf16.mxu0 0
      %2377 = vmatpush1.bf16.msra.mxu0 0
      %2378 = vmatprep.subr.bf16.mxu0 0
      %2379 = vmatpush1.bf16.msra.mxu0 0
      %2380 = vmatprep.subr.bf16.mxu0 0
      %2381 = vmatpush1.bf16.msra.mxu0 0
      %2382 = vmatprep.subr.bf16.mxu0 0
      %2383 = vmatpush1.bf16.msra.mxu0 0
      %2384 = vmatprep.mubr.bf16.mxu0 0
      %2385 = vmatmul.mubr.bf16.gmra.mrb[0].mxu0 %v2257
      %v2386 = vpop.f32.mrb[0].mxu0
      %v2387 = vadd.f32 %v2248, %v2386
      %v2388 = vpop.f32.mrb[0].mxu0
      %v2389 = vpop.f32.mrb[0].mxu0
      %v2390 = vadd.f32 %v2248, %v2389
      %v2391 = vpop.f32.mrb[0].mxu0
      %2392 = vmatprep.mubr.bf16.mxu0 0
      %2393 = vmatmul.mubr.bf16.gmra.mrb[0].mxu0 %v2260
      %v2394 = vpop.f32.mrb[0].mxu0
      %v2395 = vadd.f32 %v2248, %v2394
      %v2396 = vpop.f32.mrb[0].mxu0
      %v2397 = vpop.f32.mrb[0].mxu0
      %v2398 = vadd.f32 %v2248, %v2397
      %v2399 = vpop.f32.mrb[0].mxu0
      %2400 = vmatprep.mubr.bf16.mxu0 0
      %2401 = vmatmul.mubr.bf16.gmra.mrb[0].mxu0 %v2263
      %v2402 = vpop.f32.mrb[0].mxu0
      %v2403 = vadd.f32 %v2248, %v2402
      %v2404 = vpop.f32.mrb[0].mxu0
      %v2405 = vpop.f32.mrb[0].mxu0
      %v2406 = vadd.f32 %v2248, %v2405
      %v2407 = vpop.f32.mrb[0].mxu0
      %2408 = vmatprep.mubr.bf16.mxu0 0
      %2409 = vmatmul.mubr.bf16.gmra.mrb[0].mxu0 %v2266
      %v2410 = vpop.f32.mrb[0].mxu0
      %v2411 = vadd.f32 %v2248, %v2410
      %v2412 = vpop.f32.mrb[0].mxu0
      %v2413 = vpop.f32.mrb[0].mxu0
      %v2414 = vadd.f32 %v2248, %v2413
      %v2415 = vpop.f32.mrb[0].mxu0
      %2416 = vmatprep.mubr.bf16.mxu0 0
      %2417 = vmatmul.mubr.bf16.gmra.mrb[0].mxu0 %v2269
      %v2418 = vpop.f32.mrb[0].mxu0
      %v2419 = vadd.f32 %v2248, %v2418
      %v2420 = vpop.f32.mrb[0].mxu0
      %v2421 = vpop.f32.mrb[0].mxu0
      %v2422 = vadd.f32 %v2248, %v2421
      %v2423 = vpop.f32.mrb[0].mxu0
      %2424 = vmatprep.mubr.bf16.mxu0 0
      %2425 = vmatmul.mubr.bf16.gmra.mrb[0].mxu0 %v2272
      %v2426 = vpop.f32.mrb[0].mxu0
      %v2427 = vadd.f32 %v2248, %v2426
      %v2428 = vpop.f32.mrb[0].mxu0
      %v2429 = vpop.f32.mrb[0].mxu0
      %v2430 = vadd.f32 %v2248, %v2429
      %v2431 = vpop.f32.mrb[0].mxu0
      %2432 = vmatprep.mubr.bf16.mxu0 0
      %2433 = vmatmul.mubr.bf16.gmra.mrb[0].mxu0 %v2275
      %v2434 = vpop.f32.mrb[0].mxu0
      %v2435 = vadd.f32 %v2248, %v2434
      %v2436 = vpop.f32.mrb[0].mxu0
      %v2437 = vpop.f32.mrb[0].mxu0
      %v2438 = vadd.f32 %v2248, %v2437
      %v2439 = vpop.f32.mrb[0].mxu0
      %2440 = vmatprep.mubr.bf16.mxu0 0
      %2441 = vmatmul.mubr.bf16.gmra.mrb[0].mxu0 %v2278
      %v2442 = vpop.f32.mrb[0].mxu0
      %v2443 = vadd.f32 %v2248, %v2442
      %v2444 = vpop.f32.mrb[0].mxu0
      %v2445 = vpop.f32.mrb[0].mxu0
      %v2446 = vadd.f32 %v2248, %v2445
      %v2447 = vpop.f32.mrb[0].mxu0
      %2448 = vmatprep.mubr.bf16.mxu0 0
      %2449 = vmatmul.mubr.bf16.gmra.mrb[0].mxu0 %v2281
      %v2450 = vpop.f32.mrb[0].mxu0
      %v2451 = vadd.f32 %v2248, %v2450
      %v2452 = vpop.f32.mrb[0].mxu0
      %v2453 = vpop.f32.mrb[0].mxu0
      %v2454 = vadd.f32 %v2248, %v2453
      %v2455 = vpop.f32.mrb[0].mxu0
      %2456 = vmatprep.mubr.bf16.mxu0 0
      %2457 = vmatmul.mubr.bf16.gmra.mrb[0].mxu0 %v2284
      %v2458 = vpop.f32.mrb[0].mxu0
      %v2459 = vadd.f32 %v2248, %v2458
      %v2460 = vpop.f32.mrb[0].mxu0
      %v2461 = vpop.f32.mrb[0].mxu0
      %v2462 = vadd.f32 %v2248, %v2461
      %v2463 = vpop.f32.mrb[0].mxu0
      %2464 = vmatprep.mubr.bf16.mxu0 0
      %2465 = vmatmul.mubr.bf16.gmra.mrb[0].mxu0 %v2287
      %v2466 = vpop.f32.mrb[0].mxu0
      %v2467 = vadd.f32 %v2248, %v2466
      %v2468 = vpop.f32.mrb[0].mxu0
      %v2469 = vpop.f32.mrb[0].mxu0
      %v2470 = vadd.f32 %v2248, %v2469
      %v2471 = vpop.f32.mrb[0].mxu0
      %2472 = vmatprep.mubr.bf16.mxu0 0
      %2473 = vmatmul.mubr.bf16.gmra.mrb[0].mxu0 %v2290
      %v2474 = vpop.f32.mrb[0].mxu0
      %v2475 = vadd.f32 %v2248, %v2474
      %v2476 = vpop.f32.mrb[0].mxu0
      %v2477 = vpop.f32.mrb[0].mxu0
      %v2478 = vadd.f32 %v2248, %v2477
      %v2479 = vpop.f32.mrb[0].mxu0
      %2480 = vmatprep.mubr.bf16.mxu0 0
      %2481 = vmatmul.mubr.bf16.gmra.mrb[0].mxu0 %v2293
      %v2482 = vpop.f32.mrb[0].mxu0
      %v2483 = vadd.f32 %v2248, %v2482
      %v2484 = vpop.f32.mrb[0].mxu0
      %v2485 = vpop.f32.mrb[0].mxu0
      %v2486 = vadd.f32 %v2248, %v2485
      %v2487 = vpop.f32.mrb[0].mxu0
      %2488 = vmatprep.mubr.bf16.mxu0 0
      %2489 = vmatmul.mubr.bf16.gmra.mrb[0].mxu0 %v2296
      %v2490 = vpop.f32.mrb[0].mxu0
      %v2491 = vadd.f32 %v2248, %v2490
      %v2492 = vpop.f32.mrb[0].mxu0
      %v2493 = vpop.f32.mrb[0].mxu0
      %v2494 = vadd.f32 %v2248, %v2493
      %v2495 = vpop.f32.mrb[0].mxu0
      %2496 = vmatprep.mubr.bf16.mxu0 0
      %2497 = vmatmul.mubr.bf16.gmra.mrb[0].mxu0 %v2299
      %v2498 = vpop.f32.mrb[0].mxu0
      %v2499 = vadd.f32 %v2248, %v2498
      %v2500 = vpop.f32.mrb[0].mxu0
      %v2501 = vpop.f32.mrb[0].mxu0
      %v2502 = vadd.f32 %v2248, %v2501
      %v2503 = vpop.f32.mrb[0].mxu0
      %2504 = vmatprep.mubr.bf16.mxu0 0
      %2505 = vmatmul.mubr.bf16.gmra.mrb[0].mxu0 %v2302
      %v2506 = vpop.f32.mrb[0].mxu0
      %v2507 = vadd.f32 %v2248, %v2506
      %v2508 = vpop.f32.mrb[0].mxu0
      %v2509 = vpop.f32.mrb[0].mxu0
      %v2510 = vadd.f32 %v2248, %v2509
      %v2511 = vpop.f32.mrb[0].mxu0
      %2512 = vmatprep.mubr.bf16.mxu0 0
      %2513 = vmatmul.mubr.bf16.gmra.mrb[0].mxu0 %v2305
      %v2514 = vpop.f32.mrb[0].mxu0
      %v2515 = vadd.f32 %v2248, %v2514
      %v2516 = vpop.f32.mrb[0].mxu0
      %v2517 = vpop.f32.mrb[0].mxu0
      %v2518 = vadd.f32 %v2248, %v2517
      %v2519 = vpop.f32.mrb[0].mxu0
      %2520 = vmatprep.mubr.bf16.mxu0 0
      %2521 = vmatmul.mubr.bf16.gmra.mrb[0].mxu0 %v2308
      %v2522 = vpop.f32.mrb[0].mxu0
      %v2523 = vadd.f32 %v2248, %v2522
      %v2524 = vpop.f32.mrb[0].mxu0
      %v2525 = vpop.f32.mrb[0].mxu0
      %v2526 = vadd.f32 %v2248, %v2525
      %v2527 = vpop.f32.mrb[0].mxu0
      %2528 = vmatprep.mubr.bf16.mxu0 0
      %2529 = vmatmul.mubr.bf16.gmra.mrb[0].mxu0 %v2311
      %v2530 = vpop.f32.mrb[0].mxu0
      %v2531 = vadd.f32 %v2248, %v2530
      %v2532 = vpop.f32.mrb[0].mxu0
      %v2533 = vpop.f32.mrb[0].mxu0
      %v2534 = vadd.f32 %v2248, %v2533
      %v2535 = vpop.f32.mrb[0].mxu0
      %2536 = vmatprep.mubr.bf16.mxu0 0
      %2537 = vmatmul.mubr.bf16.gmra.mrb[0].mxu0 %v2314
      %v2538 = vpop.f32.mrb[0].mxu0
      %v2539 = vadd.f32 %v2248, %v2538
      %v2540 = vpop.f32.mrb[0].mxu0
      %v2541 = vpop.f32.mrb[0].mxu0
      %v2542 = vadd.f32 %v2248, %v2541
      %v2543 = vpop.f32.mrb[0].mxu0
      %2544 = vmatprep.mubr.bf16.mxu0 0
      %2545 = vmatmul.mubr.bf16.gmra.mrb[0].mxu0 %v2317
      %v2546 = vpop.f32.mrb[0].mxu0
      %v2547 = vadd.f32 %v2248, %v2546
      %v2548 = vpop.f32.mrb[0].mxu0
      %v2549 = vpop.f32.mrb[0].mxu0
      %v2550 = vadd.f32 %v2248, %v2549
      %v2551 = vpop.f32.mrb[0].mxu0
      %2552 = vmatprep.mubr.bf16.mxu0 0
      %2553 = vmatmul.mubr.bf16.gmra.mrb[0].mxu0 %v2320
      %v2554 = vpop.f32.mrb[0].mxu0
      %v2555 = vadd.f32 %v2248, %v2554
      %v2556 = vpop.f32.mrb[0].mxu0
      %v2557 = vpop.f32.mrb[0].mxu0
      %v2558 = vadd.f32 %v2248, %v2557
      %v2559 = vpop.f32.mrb[0].mxu0
      %2560 = vmatprep.mubr.bf16.mxu0 0
      %2561 = vmatmul.mubr.bf16.gmra.mrb[0].mxu0 %v2323
      %v2562 = vpop.f32.mrb[0].mxu0
      %v2563 = vadd.f32 %v2248, %v2562
      %v2564 = vpop.f32.mrb[0].mxu0
      %v2565 = vpop.f32.mrb[0].mxu0
      %v2566 = vadd.f32 %v2248, %v2565
      %v2567 = vpop.f32.mrb[0].mxu0
      %2568 = vmatprep.mubr.bf16.mxu0 0
      %2569 = vmatmul.mubr.bf16.gmra.mrb[0].mxu0 %v2326
      %v2570 = vpop.f32.mrb[0].mxu0
      %v2571 = vadd.f32 %v2248, %v2570
      %v2572 = vpop.f32.mrb[0].mxu0
      %v2573 = vpop.f32.mrb[0].mxu0
      %v2574 = vadd.f32 %v2248, %v2573
      %v2575 = vpop.f32.mrb[0].mxu0
      %2576 = vmatprep.mubr.bf16.mxu0 0
      %2577 = vmatmul.mubr.bf16.gmra.mrb[0].mxu0 %v2329
      %v2578 = vpop.f32.mrb[0].mxu0
      %v2579 = vadd.f32 %v2248, %v2578
      %v2580 = vpop.f32.mrb[0].mxu0
      %v2581 = vpop.f32.mrb[0].mxu0
      %v2582 = vadd.f32 %v2248, %v2581
      %v2583 = vpop.f32.mrb[0].mxu0
      %2584 = vmatprep.mubr.bf16.mxu0 0
      %2585 = vmatmul.mubr.bf16.gmra.mrb[0].mxu0 %v2332
      %v2586 = vpop.f32.mrb[0].mxu0
      %v2587 = vadd.f32 %v2248, %v2586
      %v2588 = vpop.f32.mrb[0].mxu0
      %v2589 = vpop.f32.mrb[0].mxu0
      %v2590 = vadd.f32 %v2248, %v2589
      %v2591 = vpop.f32.mrb[0].mxu0
      %2592 = vmatprep.mubr.bf16.mxu0 0
      %2593 = vmatmul.mubr.bf16.gmra.mrb[0].mxu0 %v2335
      %v2594 = vpop.f32.mrb[0].mxu0
      %v2595 = vadd.f32 %v2248, %v2594
      %v2596 = vpop.f32.mrb[0].mxu0
      %v2597 = vpop.f32.mrb[0].mxu0
      %v2598 = vadd.f32 %v2248, %v2597
      %v2599 = vpop.f32.mrb[0].mxu0
      %2600 = vmatprep.mubr.bf16.mxu0 0
      %2601 = vmatmul.mubr.bf16.gmra.mrb[0].mxu0 %v2338
      %v2602 = vpop.f32.mrb[0].mxu0
      %v2603 = vadd.f32 %v2248, %v2602
      %v2604 = vpop.f32.mrb[0].mxu0
      %v2605 = vpop.f32.mrb[0].mxu0
      %v2606 = vadd.f32 %v2248, %v2605
      %v2607 = vpop.f32.mrb[0].mxu0
      %2608 = vmatprep.mubr.bf16.mxu0 0
      %2609 = vmatmul.mubr.bf16.gmra.mrb[0].mxu0 %v2341
      %v2610 = vpop.f32.mrb[0].mxu0
      %v2611 = vadd.f32 %v2248, %v2610
      %v2612 = vpop.f32.mrb[0].mxu0
      %v2613 = vpop.f32.mrb[0].mxu0
      %v2614 = vadd.f32 %v2248, %v2613
      %v2615 = vpop.f32.mrb[0].mxu0
      %2616 = vmatprep.mubr.bf16.mxu0 0
      %2617 = vmatmul.mubr.bf16.gmra.mrb[0].mxu0 %v2344
      %v2618 = vpop.f32.mrb[0].mxu0
      %v2619 = vadd.f32 %v2248, %v2618
      %v2620 = vpop.f32.mrb[0].mxu0
      %v2621 = vpop.f32.mrb[0].mxu0
      %v2622 = vadd.f32 %v2248, %v2621
      %v2623 = vpop.f32.mrb[0].mxu0
      %2624 = vmatprep.mubr.bf16.mxu0 0
      %2625 = vmatmul.mubr.bf16.gmra.mrb[0].mxu0 %v2347
      %v2626 = vpop.f32.mrb[0].mxu0
      %v2627 = vadd.f32 %v2248, %v2626
      %v2628 = vpop.f32.mrb[0].mxu0
      %v2629 = vpop.f32.mrb[0].mxu0
      %v2630 = vadd.f32 %v2248, %v2629
      %v2631 = vpop.f32.mrb[0].mxu0
      %2632 = vmatprep.mubr.bf16.mxu0 0
      %2633 = vmatmul.mubr.bf16.gmra.mrb[0].mxu0 %v2350
      %v2634 = vpop.f32.mrb[0].mxu0
      %v2635 = vadd.f32 %v2248, %v2634
      %v2636 = vpop.f32.mrb[0].mxu0
      %v2637 = vpop.f32.mrb[0].mxu0
      %v2638 = vadd.f32 %v2248, %v2637
      %v2639 = vpop.f32.mrb[0].mxu0
      %2640 = vdwg.mxu0
      %v2641 = vmax.f32 %v2387, 0.0
      %v2642 = vmax.f32 %v2390, 0.0
      %v2643 = vmax.f32 %v2395, 0.0
      %v2644 = vmax.f32 %v2398, 0.0
      %v2645 = vmax.f32 %v2403, 0.0
      %v2646 = vmax.f32 %v2406, 0.0
      %v2647 = vmax.f32 %v2411, 0.0
      %v2648 = vmax.f32 %v2414, 0.0
      %v2649 = vmax.f32 %v2419, 0.0
      %v2650 = vmax.f32 %v2422, 0.0
      %v2651 = vmax.f32 %v2427, 0.0
      %v2652 = vmax.f32 %v2430, 0.0
      %v2653 = vmax.f32 %v2435, 0.0
      %v2654 = vmax.f32 %v2438, 0.0
      %v2655 = vmax.f32 %v2443, 0.0
      %v2656 = vmax.f32 %v2446, 0.0
      %v2657 = vmax.f32 %v2451, 0.0
      %v2658 = vmax.f32 %v2454, 0.0
      %v2659 = vmax.f32 %v2459, 0.0
      %v2660 = vmax.f32 %v2462, 0.0
      %v2661 = vmax.f32 %v2467, 0.0
      %v2662 = vmax.f32 %v2470, 0.0
      %v2663 = vmax.f32 %v2475, 0.0
      %v2664 = vmax.f32 %v2478, 0.0
      %v2665 = vmax.f32 %v2483, 0.0
      %v2666 = vmax.f32 %v2486, 0.0
      %v2667 = vmax.f32 %v2491, 0.0
      %v2668 = vmax.f32 %v2494, 0.0
      %v2669 = vmax.f32 %v2499, 0.0
      %v2670 = vmax.f32 %v2502, 0.0
      %v2671 = vmax.f32 %v2507, 0.0
      %v2672 = vmax.f32 %v2510, 0.0
      %v2673 = vmax.f32 %v2515, 0.0
      %v2674 = vmax.f32 %v2518, 0.0
      %v2675 = vmax.f32 %v2523, 0.0
      %v2676 = vmax.f32 %v2526, 0.0
      %v2677 = vmax.f32 %v2531, 0.0
      %v2678 = vmax.f32 %v2534, 0.0
      %v2679 = vmax.f32 %v2539, 0.0
      %v2680 = vmax.f32 %v2542, 0.0
      %v2681 = vmax.f32 %v2547, 0.0
      %v2682 = vmax.f32 %v2550, 0.0
      %v2683 = vmax.f32 %v2555, 0.0
      %v2684 = vmax.f32 %v2558, 0.0
      %v2685 = vmax.f32 %v2563, 0.0
      %v2686 = vmax.f32 %v2566, 0.0
      %v2687 = vmax.f32 %v2571, 0.0
      %v2688 = vmax.f32 %v2574, 0.0
      %v2689 = vmax.f32 %v2579, 0.0
      %v2690 = vmax.f32 %v2582, 0.0
      %v2691 = vmax.f32 %v2587, 0.0
      %v2692 = vmax.f32 %v2590, 0.0
      %v2693 = vmax.f32 %v2595, 0.0
      %v2694 = vmax.f32 %v2598, 0.0
      %v2695 = vmax.f32 %v2603, 0.0
      %v2696 = vmax.f32 %v2606, 0.0
      %v2697 = vmax.f32 %v2611, 0.0
      %v2698 = vmax.f32 %v2614, 0.0
      %v2699 = vmax.f32 %v2619, 0.0
      %v2700 = vmax.f32 %v2622, 0.0
      %v2701 = vmax.f32 %v2627, 0.0
      %v2702 = vmax.f32 %v2630, 0.0
      %v2703 = vmax.f32 %v2635, 0.0
      %v2704 = vmax.f32 %v2638, 0.0
      %v2705 = vrot.slane %v2641, 4
      %v2706 = vmax.f32 %v2641, %v2705
      %v2707 = vrot.slane %v2706, 2
      %v2708 = vmax.f32 %v2706, %v2707
      %v2709 = vrot.slane %v2708, 1
      %v2710 = vmax.f32 %v2708, %v2709
      %v2711 = vrot.slane %v2642, 4
      %v2712 = vmax.f32 %v2642, %v2711
      %v2713 = vrot.slane %v2712, 2
      %v2714 = vmax.f32 %v2712, %v2713
      %v2715 = vrot.slane %v2714, 1
      %v2716 = vmax.f32 %v2714, %v2715
      %v2717 = vrot.slane %v2643, 4
      %v2718 = vmax.f32 %v2643, %v2717
      %v2719 = vrot.slane %v2718, 2
      %v2720 = vmax.f32 %v2718, %v2719
      %v2721 = vrot.slane %v2720, 1
      %v2722 = vmax.f32 %v2720, %v2721
      %v2723 = vrot.slane %v2644, 4
      %v2724 = vmax.f32 %v2644, %v2723
      %v2725 = vrot.slane %v2724, 2
      %v2726 = vmax.f32 %v2724, %v2725
      %v2727 = vrot.slane %v2726, 1
      %v2728 = vmax.f32 %v2726, %v2727
      %v2729 = vrot.slane %v2645, 4
      %v2730 = vmax.f32 %v2645, %v2729
      %v2731 = vrot.slane %v2730, 2
      %v2732 = vmax.f32 %v2730, %v2731
      %v2733 = vrot.slane %v2732, 1
      %v2734 = vmax.f32 %v2732, %v2733
      %v2735 = vrot.slane %v2646, 4
      %v2736 = vmax.f32 %v2646, %v2735
      %v2737 = vrot.slane %v2736, 2
      %v2738 = vmax.f32 %v2736, %v2737
      %v2739 = vrot.slane %v2738, 1
      %v2740 = vmax.f32 %v2738, %v2739
      %v2741 = vrot.slane %v2647, 4
      %v2742 = vmax.f32 %v2647, %v2741
      %v2743 = vrot.slane %v2742, 2
      %v2744 = vmax.f32 %v2742, %v2743
      %v2745 = vrot.slane %v2744, 1
      %v2746 = vmax.f32 %v2744, %v2745
      %v2747 = vrot.slane %v2648, 4
      %v2748 = vmax.f32 %v2648, %v2747
      %v2749 = vrot.slane %v2748, 2
      %v2750 = vmax.f32 %v2748, %v2749
      %v2751 = vrot.slane %v2750, 1
      %v2752 = vmax.f32 %v2750, %v2751
      %v2753 = vrot.slane %v2649, 4
      %v2754 = vmax.f32 %v2649, %v2753
      %v2755 = vrot.slane %v2754, 2
      %v2756 = vmax.f32 %v2754, %v2755
      %v2757 = vrot.slane %v2756, 1
      %v2758 = vmax.f32 %v2756, %v2757
      %v2759 = vrot.slane %v2650, 4
      %v2760 = vmax.f32 %v2650, %v2759
      %v2761 = vrot.slane %v2760, 2
      %v2762 = vmax.f32 %v2760, %v2761
      %v2763 = vrot.slane %v2762, 1
      %v2764 = vmax.f32 %v2762, %v2763
      %v2765 = vrot.slane %v2651, 4
      %v2766 = vmax.f32 %v2651, %v2765
      %v2767 = vrot.slane %v2766, 2
      %v2768 = vmax.f32 %v2766, %v2767
      %v2769 = vrot.slane %v2768, 1
      %v2770 = vmax.f32 %v2768, %v2769
      %v2771 = vrot.slane %v2652, 4
      %v2772 = vmax.f32 %v2652, %v2771
      %v2773 = vrot.slane %v2772, 2
      %v2774 = vmax.f32 %v2772, %v2773
      %v2775 = vrot.slane %v2774, 1
      %v2776 = vmax.f32 %v2774, %v2775
      %v2777 = vrot.slane %v2653, 4
      %v2778 = vmax.f32 %v2653, %v2777
      %v2779 = vrot.slane %v2778, 2
      %v2780 = vmax.f32 %v2778, %v2779
      %v2781 = vrot.slane %v2780, 1
      %v2782 = vmax.f32 %v2780, %v2781
      %v2783 = vrot.slane %v2654, 4
      %v2784 = vmax.f32 %v2654, %v2783
      %v2785 = vrot.slane %v2784, 2
      %v2786 = vmax.f32 %v2784, %v2785
      %v2787 = vrot.slane %v2786, 1
      %v2788 = vmax.f32 %v2786, %v2787
      %v2789 = vrot.slane %v2655, 4
      %v2790 = vmax.f32 %v2655, %v2789
      %v2791 = vrot.slane %v2790, 2
      %v2792 = vmax.f32 %v2790, %v2791
      %v2793 = vrot.slane %v2792, 1
      %v2794 = vmax.f32 %v2792, %v2793
      %v2795 = vrot.slane %v2656, 4
      %v2796 = vmax.f32 %v2656, %v2795
      %v2797 = vrot.slane %v2796, 2
      %v2798 = vmax.f32 %v2796, %v2797
      %v2799 = vrot.slane %v2798, 1
      %v2800 = vmax.f32 %v2798, %v2799
      %v2801 = vrot.slane %v2657, 4
      %v2802 = vmax.f32 %v2657, %v2801
      %v2803 = vrot.slane %v2802, 2
      %v2804 = vmax.f32 %v2802, %v2803
      %v2805 = vrot.slane %v2804, 1
      %v2806 = vmax.f32 %v2804, %v2805
      %v2807 = vrot.slane %v2658, 4
      %v2808 = vmax.f32 %v2658, %v2807
      %v2809 = vrot.slane %v2808, 2
      %v2810 = vmax.f32 %v2808, %v2809
      %v2811 = vrot.slane %v2810, 1
      %v2812 = vmax.f32 %v2810, %v2811
      %v2813 = vrot.slane %v2659, 4
      %v2814 = vmax.f32 %v2659, %v2813
      %v2815 = vrot.slane %v2814, 2
      %v2816 = vmax.f32 %v2814, %v2815
      %v2817 = vrot.slane %v2816, 1
      %v2818 = vmax.f32 %v2816, %v2817
      %v2819 = vrot.slane %v2660, 4
      %v2820 = vmax.f32 %v2660, %v2819
      %v2821 = vrot.slane %v2820, 2
      %v2822 = vmax.f32 %v2820, %v2821
      %v2823 = vrot.slane %v2822, 1
      %v2824 = vmax.f32 %v2822, %v2823
      %v2825 = vrot.slane %v2661, 4
      %v2826 = vmax.f32 %v2661, %v2825
      %v2827 = vrot.slane %v2826, 2
      %v2828 = vmax.f32 %v2826, %v2827
      %v2829 = vrot.slane %v2828, 1
      %v2830 = vmax.f32 %v2828, %v2829
      %v2831 = vrot.slane %v2662, 4
      %v2832 = vmax.f32 %v2662, %v2831
      %v2833 = vrot.slane %v2832, 2
      %v2834 = vmax.f32 %v2832, %v2833
      %v2835 = vrot.slane %v2834, 1
      %v2836 = vmax.f32 %v2834, %v2835
      %v2837 = vrot.slane %v2663, 4
      %v2838 = vmax.f32 %v2663, %v2837
      %v2839 = vrot.slane %v2838, 2
      %v2840 = vmax.f32 %v2838, %v2839
      %v2841 = vrot.slane %v2840, 1
      %v2842 = vmax.f32 %v2840, %v2841
      %v2843 = vrot.slane %v2664, 4
      %v2844 = vmax.f32 %v2664, %v2843
      %v2845 = vrot.slane %v2844, 2
      %v2846 = vmax.f32 %v2844, %v2845
      %v2847 = vrot.slane %v2846, 1
      %v2848 = vmax.f32 %v2846, %v2847
      %v2849 = vrot.slane %v2665, 4
      %v2850 = vmax.f32 %v2665, %v2849
      %v2851 = vrot.slane %v2850, 2
      %v2852 = vmax.f32 %v2850, %v2851
      %v2853 = vrot.slane %v2852, 1
      %v2854 = vmax.f32 %v2852, %v2853
      %v2855 = vrot.slane %v2666, 4
      %v2856 = vmax.f32 %v2666, %v2855
      %v2857 = vrot.slane %v2856, 2
      %v2858 = vmax.f32 %v2856, %v2857
      %v2859 = vrot.slane %v2858, 1
      %v2860 = vmax.f32 %v2858, %v2859
      %v2861 = vrot.slane %v2667, 4
      %v2862 = vmax.f32 %v2667, %v2861
      %v2863 = vrot.slane %v2862, 2
      %v2864 = vmax.f32 %v2862, %v2863
      %v2865 = vrot.slane %v2864, 1
      %v2866 = vmax.f32 %v2864, %v2865
      %v2867 = vrot.slane %v2668, 4
      %v2868 = vmax.f32 %v2668, %v2867
      %v2869 = vrot.slane %v2868, 2
      %v2870 = vmax.f32 %v2868, %v2869
      %v2871 = vrot.slane %v2870, 1
      %v2872 = vmax.f32 %v2870, %v2871
      %v2873 = vrot.slane %v2669, 4
      %v2874 = vmax.f32 %v2669, %v2873
      %v2875 = vrot.slane %v2874, 2
      %v2876 = vmax.f32 %v2874, %v2875
      %v2877 = vrot.slane %v2876, 1
      %v2878 = vmax.f32 %v2876, %v2877
      %v2879 = vrot.slane %v2670, 4
      %v2880 = vmax.f32 %v2670, %v2879
      %v2881 = vrot.slane %v2880, 2
      %v2882 = vmax.f32 %v2880, %v2881
      %v2883 = vrot.slane %v2882, 1
      %v2884 = vmax.f32 %v2882, %v2883
      %v2885 = vrot.slane %v2671, 4
      %v2886 = vmax.f32 %v2671, %v2885
      %v2887 = vrot.slane %v2886, 2
      %v2888 = vmax.f32 %v2886, %v2887
      %v2889 = vrot.slane %v2888, 1
      %v2890 = vmax.f32 %v2888, %v2889
      %v2891 = vrot.slane %v2672, 4
      %v2892 = vmax.f32 %v2672, %v2891
      %v2893 = vrot.slane %v2892, 2
      %v2894 = vmax.f32 %v2892, %v2893
      %v2895 = vrot.slane %v2894, 1
      %v2896 = vmax.f32 %v2894, %v2895
      %v2897 = vrot.slane %v2673, 4
      %v2898 = vmax.f32 %v2673, %v2897
      %v2899 = vrot.slane %v2898, 2
      %v2900 = vmax.f32 %v2898, %v2899
      %v2901 = vrot.slane %v2900, 1
      %v2902 = vmax.f32 %v2900, %v2901
      %v2903 = vrot.slane %v2674, 4
      %v2904 = vmax.f32 %v2674, %v2903
      %v2905 = vrot.slane %v2904, 2
      %v2906 = vmax.f32 %v2904, %v2905
      %v2907 = vrot.slane %v2906, 1
      %v2908 = vmax.f32 %v2906, %v2907
      %v2909 = vrot.slane %v2675, 4
      %v2910 = vmax.f32 %v2675, %v2909
      %v2911 = vrot.slane %v2910, 2
      %v2912 = vmax.f32 %v2910, %v2911
      %v2913 = vrot.slane %v2912, 1
      %v2914 = vmax.f32 %v2912, %v2913
      %v2915 = vrot.slane %v2676, 4
      %v2916 = vmax.f32 %v2676, %v2915
      %v2917 = vrot.slane %v2916, 2
      %v2918 = vmax.f32 %v2916, %v2917
      %v2919 = vrot.slane %v2918, 1
      %v2920 = vmax.f32 %v2918, %v2919
      %v2921 = vrot.slane %v2677, 4
      %v2922 = vmax.f32 %v2677, %v2921
      %v2923 = vrot.slane %v2922, 2
      %v2924 = vmax.f32 %v2922, %v2923
      %v2925 = vrot.slane %v2924, 1
      %v2926 = vmax.f32 %v2924, %v2925
      %v2927 = vrot.slane %v2678, 4
      %v2928 = vmax.f32 %v2678, %v2927
      %v2929 = vrot.slane %v2928, 2
      %v2930 = vmax.f32 %v2928, %v2929
      %v2931 = vrot.slane %v2930, 1
      %v2932 = vmax.f32 %v2930, %v2931
      %v2933 = vrot.slane %v2679, 4
      %v2934 = vmax.f32 %v2679, %v2933
      %v2935 = vrot.slane %v2934, 2
      %v2936 = vmax.f32 %v2934, %v2935
      %v2937 = vrot.slane %v2936, 1
      %v2938 = vmax.f32 %v2936, %v2937
      %v2939 = vrot.slane %v2680, 4
      %v2940 = vmax.f32 %v2680, %v2939
      %v2941 = vrot.slane %v2940, 2
      %v2942 = vmax.f32 %v2940, %v2941
      %v2943 = vrot.slane %v2942, 1
      %v2944 = vmax.f32 %v2942, %v2943
      %v2945 = vrot.slane %v2681, 4
      %v2946 = vmax.f32 %v2681, %v2945
      %v2947 = vrot.slane %v2946, 2
      %v2948 = vmax.f32 %v2946, %v2947
      %v2949 = vrot.slane %v2948, 1
      %v2950 = vmax.f32 %v2948, %v2949
      %v2951 = vrot.slane %v2682, 4
      %v2952 = vmax.f32 %v2682, %v2951
      %v2953 = vrot.slane %v2952, 2
      %v2954 = vmax.f32 %v2952, %v2953
      %v2955 = vrot.slane %v2954, 1
      %v2956 = vmax.f32 %v2954, %v2955
      %v2957 = vrot.slane %v2683, 4
      %v2958 = vmax.f32 %v2683, %v2957
      %v2959 = vrot.slane %v2958, 2
      %v2960 = vmax.f32 %v2958, %v2959
      %v2961 = vrot.slane %v2960, 1
      %v2962 = vmax.f32 %v2960, %v2961
      %v2963 = vrot.slane %v2684, 4
      %v2964 = vmax.f32 %v2684, %v2963
      %v2965 = vrot.slane %v2964, 2
      %v2966 = vmax.f32 %v2964, %v2965
      %v2967 = vrot.slane %v2966, 1
      %v2968 = vmax.f32 %v2966, %v2967
      %v2969 = vrot.slane %v2685, 4
      %v2970 = vmax.f32 %v2685, %v2969
      %v2971 = vrot.slane %v2970, 2
      %v2972 = vmax.f32 %v2970, %v2971
      %v2973 = vrot.slane %v2972, 1
      %v2974 = vmax.f32 %v2972, %v2973
      %v2975 = vrot.slane %v2686, 4
      %v2976 = vmax.f32 %v2686, %v2975
      %v2977 = vrot.slane %v2976, 2
      %v2978 = vmax.f32 %v2976, %v2977
      %v2979 = vrot.slane %v2978, 1
      %v2980 = vmax.f32 %v2978, %v2979
      %v2981 = vrot.slane %v2687, 4
      %v2982 = vmax.f32 %v2687, %v2981
      %v2983 = vrot.slane %v2982, 2
      %v2984 = vmax.f32 %v2982, %v2983
      %v2985 = vrot.slane %v2984, 1
      %v2986 = vmax.f32 %v2984, %v2985
      %v2987 = vrot.slane %v2688, 4
      %v2988 = vmax.f32 %v2688, %v2987
      %v2989 = vrot.slane %v2988, 2
      %v2990 = vmax.f32 %v2988, %v2989
      %v2991 = vrot.slane %v2990, 1
      %v2992 = vmax.f32 %v2990, %v2991
      %v2993 = vrot.slane %v2689, 4
      %v2994 = vmax.f32 %v2689, %v2993
      %v2995 = vrot.slane %v2994, 2
      %v2996 = vmax.f32 %v2994, %v2995
      %v2997 = vrot.slane %v2996, 1
      %v2998 = vmax.f32 %v2996, %v2997
      %v2999 = vrot.slane %v2690, 4
      %v3000 = vmax.f32 %v2690, %v2999
      %v3001 = vrot.slane %v3000, 2
      %v3002 = vmax.f32 %v3000, %v3001
      %v3003 = vrot.slane %v3002, 1
      %v3004 = vmax.f32 %v3002, %v3003
      %v3005 = vrot.slane %v2691, 4
      %v3006 = vmax.f32 %v2691, %v3005
      %v3007 = vrot.slane %v3006, 2
      %v3008 = vmax.f32 %v3006, %v3007
      %v3009 = vrot.slane %v3008, 1
      %v3010 = vmax.f32 %v3008, %v3009
      %v3011 = vrot.slane %v2692, 4
      %v3012 = vmax.f32 %v2692, %v3011
      %v3013 = vrot.slane %v3012, 2
      %v3014 = vmax.f32 %v3012, %v3013
      %v3015 = vrot.slane %v3014, 1
      %v3016 = vmax.f32 %v3014, %v3015
      %v3017 = vrot.slane %v2693, 4
      %v3018 = vmax.f32 %v2693, %v3017
      %v3019 = vrot.slane %v3018, 2
      %v3020 = vmax.f32 %v3018, %v3019
      %v3021 = vrot.slane %v3020, 1
      %v3022 = vmax.f32 %v3020, %v3021
      %v3023 = vrot.slane %v2694, 4
      %v3024 = vmax.f32 %v2694, %v3023
      %v3025 = vrot.slane %v3024, 2
      %v3026 = vmax.f32 %v3024, %v3025
      %v3027 = vrot.slane %v3026, 1
      %v3028 = vmax.f32 %v3026, %v3027
      %v3029 = vrot.slane %v2695, 4
      %v3030 = vmax.f32 %v2695, %v3029
      %v3031 = vrot.slane %v3030, 2
      %v3032 = vmax.f32 %v3030, %v3031
      %v3033 = vrot.slane %v3032, 1
      %v3034 = vmax.f32 %v3032, %v3033
      %v3035 = vrot.slane %v2696, 4
      %v3036 = vmax.f32 %v2696, %v3035
      %v3037 = vrot.slane %v3036, 2
      %v3038 = vmax.f32 %v3036, %v3037
      %v3039 = vrot.slane %v3038, 1
      %v3040 = vmax.f32 %v3038, %v3039
      %v3041 = vrot.slane %v2697, 4
      %v3042 = vmax.f32 %v2697, %v3041
      %v3043 = vrot.slane %v3042, 2
      %v3044 = vmax.f32 %v3042, %v3043
      %v3045 = vrot.slane %v3044, 1
      %v3046 = vmax.f32 %v3044, %v3045
      %v3047 = vrot.slane %v2698, 4
      %v3048 = vmax.f32 %v2698, %v3047
      %v3049 = vrot.slane %v3048, 2
      %v3050 = vmax.f32 %v3048, %v3049
      %v3051 = vrot.slane %v3050, 1
      %v3052 = vmax.f32 %v3050, %v3051
      %v3053 = vrot.slane %v2699, 4
      %v3054 = vmax.f32 %v2699, %v3053
      %v3055 = vrot.slane %v3054, 2
      %v3056 = vmax.f32 %v3054, %v3055
      %v3057 = vrot.slane %v3056, 1
      %v3058 = vmax.f32 %v3056, %v3057
      %v3059 = vrot.slane %v2700, 4
      %v3060 = vmax.f32 %v2700, %v3059
      %v3061 = vrot.slane %v3060, 2
      %v3062 = vmax.f32 %v3060, %v3061
      %v3063 = vrot.slane %v3062, 1
      %v3064 = vmax.f32 %v3062, %v3063
      %v3065 = vrot.slane %v2701, 4
      %v3066 = vmax.f32 %v2701, %v3065
      %v3067 = vrot.slane %v3066, 2
      %v3068 = vmax.f32 %v3066, %v3067
      %v3069 = vrot.slane %v3068, 1
      %v3070 = vmax.f32 %v3068, %v3069
      %v3071 = vrot.slane %v2702, 4
      %v3072 = vmax.f32 %v2702, %v3071
      %v3073 = vrot.slane %v3072, 2
      %v3074 = vmax.f32 %v3072, %v3073
      %v3075 = vrot.slane %v3074, 1
      %v3076 = vmax.f32 %v3074, %v3075
      %v3077 = vrot.slane %v2703, 4
      %v3078 = vmax.f32 %v2703, %v3077
      %v3079 = vrot.slane %v3078, 2
      %v3080 = vmax.f32 %v3078, %v3079
      %v3081 = vrot.slane %v3080, 1
      %v3082 = vmax.f32 %v3080, %v3081
      %v3083 = vrot.slane %v2704, 4
      %v3084 = vmax.f32 %v2704, %v3083
      %v3085 = vrot.slane %v3084, 2
      %v3086 = vmax.f32 %v3084, %v3085
      %v3087 = vrot.slane %v3086, 1
      %v3088 = vmax.f32 %v3086, %v3087
      %vm3153 = vcmask 1041409
      %v3154 = vsel %vm3153, %v2716, %v2710
      %vm3155 = vcmask 1042434
      %v3156 = vsel %vm3155, %v2722, %v3154
      %vm3157 = vcmask 1043459
      %v3158 = vsel %vm3157, %v2728, %v3156
      %vm3159 = vcmask 1044484
      %v3160 = vsel %vm3159, %v2734, %v3158
      %vm3161 = vcmask 1045509
      %v3162 = vsel %vm3161, %v2740, %v3160
      %vm3163 = vcmask 1046534
      %v3164 = vsel %vm3163, %v2746, %v3162
      %vm3165 = vcmask 1047559
      %v3166 = vsel %vm3165, %v2752, %v3164
      %v3167 = vsel %vm3153, %v2764, %v2758
      %v3168 = vsel %vm3155, %v2770, %v3167
      %v3169 = vsel %vm3157, %v2776, %v3168
      %v3170 = vsel %vm3159, %v2782, %v3169
      %v3171 = vsel %vm3161, %v2788, %v3170
      %v3172 = vsel %vm3163, %v2794, %v3171
      %v3173 = vsel %vm3165, %v2800, %v3172
      %v3174 = vsel %vm3153, %v2812, %v2806
      %v3175 = vsel %vm3155, %v2818, %v3174
      %v3176 = vsel %vm3157, %v2824, %v3175
      %v3177 = vsel %vm3159, %v2830, %v3176
      %v3178 = vsel %vm3161, %v2836, %v3177
      %v3179 = vsel %vm3163, %v2842, %v3178
      %v3180 = vsel %vm3165, %v2848, %v3179
      %v3181 = vsel %vm3153, %v2860, %v2854
      %v3182 = vsel %vm3155, %v2866, %v3181
      %v3183 = vsel %vm3157, %v2872, %v3182
      %v3184 = vsel %vm3159, %v2878, %v3183
      %v3185 = vsel %vm3161, %v2884, %v3184
      %v3186 = vsel %vm3163, %v2890, %v3185
      %v3187 = vsel %vm3165, %v2896, %v3186
      %v3188 = vsel %vm3153, %v2908, %v2902
      %v3189 = vsel %vm3155, %v2914, %v3188
      %v3190 = vsel %vm3157, %v2920, %v3189
      %v3191 = vsel %vm3159, %v2926, %v3190
      %v3192 = vsel %vm3161, %v2932, %v3191
      %v3193 = vsel %vm3163, %v2938, %v3192
      %v3194 = vsel %vm3165, %v2944, %v3193
      %v3195 = vsel %vm3153, %v2956, %v2950
      %v3196 = vsel %vm3155, %v2962, %v3195
      %v3197 = vsel %vm3157, %v2968, %v3196
      %v3198 = vsel %vm3159, %v2974, %v3197
      %v3199 = vsel %vm3161, %v2980, %v3198
      %v3200 = vsel %vm3163, %v2986, %v3199
      %v3201 = vsel %vm3165, %v2992, %v3200
      %v3202 = vsel %vm3153, %v3004, %v2998
      %v3203 = vsel %vm3155, %v3010, %v3202
      %v3204 = vsel %vm3157, %v3016, %v3203
      %v3205 = vsel %vm3159, %v3022, %v3204
      %v3206 = vsel %vm3161, %v3028, %v3205
      %v3207 = vsel %vm3163, %v3034, %v3206
      %v3208 = vsel %vm3165, %v3040, %v3207
      %v3209 = vsel %vm3153, %v3052, %v3046
      %v3210 = vsel %vm3155, %v3058, %v3209
      %v3211 = vsel %vm3157, %v3064, %v3210
      %v3212 = vsel %vm3159, %v3070, %v3211
      %v3213 = vsel %vm3161, %v3076, %v3212
      %v3214 = vsel %vm3163, %v3082, %v3213
      %v3215 = vsel %vm3165, %v3088, %v3214
      %3224 = vst [vmem:[%s280] sm:$0xff] %v3166
      %3225 = vst [vmem:[%s280 + $0x8] sm:$0xff] %v3173
      %3226 = vst [vmem:[%s280 + $0x10] sm:$0xff] %v3180
      %3227 = vst [vmem:[%s280 + $0x18] sm:$0xff] %v3187
      %3228 = vst [vmem:[%s280 + $0x20] sm:$0xff] %v3194
      %3229 = vst [vmem:[%s280 + $0x28] sm:$0xff] %v3201
      %3230 = vst [vmem:[%s280 + $0x30] sm:$0xff] %v3208
      %3231 = vst [vmem:[%s280 + $0x38] sm:$0xff] %v3215
      %s3232 = smul.u32 8, %s18
      %p3233 = scmp.lt.s32.totalorder %s3232, 15
      %s3234 = scalar_select %p3233, %s3232, 15
      %s3235 = smul.addr %s3234, 8
      %s3236 = scalar_lea.vmem %s7, %s3235
      // Predicated region
      $region49: #{pointnet2_forward.4} parent=47 // pred_check
        %p3237 = pneg %p188
      $region50: #{pointnet2_forward.4} parent=47 // pred_check_branch
        %3239 = sbr.rel (%p3237) target = $region52
      $region51: #{pointnet2_forward.4} parent=47 // pred_region
        %s3240 = smul.u32 8, %s18
      $region52: #{pointnet2_forward.4} parent=47 // pred_fallthru
        _
    $region48: #{pointnet2_forward.4} parent=5 // pred_fallthru
      _
    %p3241 = scmp.le.s32.totalorder 2, %s13
    // Predicated region
    $region53: #{pointnet2_forward.4} parent=5 // pred_check
      %p3242 = pneg %p3241
    $region54: #{pointnet2_forward.4} parent=5 // pred_check_branch
      %3244 = sbr.rel (%p3242) target = $region56
    $region55: #{pointnet2_forward.4} parent=5 // pred_region
      %s3245 = ssub.s32 %s13, 2
      // Predicated region
      $region57: #{pointnet2_forward.4} parent=55 // pred_check
        %p3246 = pneg %p194
      $region58: #{pointnet2_forward.4} parent=55 // pred_check_branch
        %3248 = sbr.rel (%p3246) target = $region60
      $region59: #{pointnet2_forward.4} parent=55 // pred_region
        %s3249 = smul.u32 8, %s19
        %p3250 = scmp.lt.s32.totalorder %s3249, 15
        %s3251 = scalar_select %p3250, %s3249, 15
        %s3252 = smul.addr %s3251, 8
        %s3253 = scalar_lea.vmem %s7, %s3252
      $region60: #{pointnet2_forward.4} parent=55 // pred_fallthru
        _
    $region56: #{pointnet2_forward.4} parent=5 // pred_fallthru
      _
  $region6: #{pointnet2_forward.4} parent=0 // loop_footer
    %s17 = sadd.s32 1, %s13
  $region7: #{pointnet2_forward.4} parent=0 // loop_footer_branch
    %12 = sbr.rel target = $region3
  $region8: #{pointnet2_forward.4} parent=0 // loop_exit
    _

// kernel: custom-call.24
$region0: #{custom-call.24}
  %s0 = inlined_call_operand.vmem [shape: f32[2,32], index: 0, kind: output, shape index: {}]

// kernel: pointnet2_forward.5
$region0: #{pointnet2_forward.5}
  #allocation0 [shape = 'u32[]', space=smem, size = 0x4, offset = 0x4, fixed_abs, tag = 'smem constant byte address 0x4 - core index']
  #allocation1 [shape = 'u32[144,128]{1,0:T(1,128)}', space=vmem, size = 0x12000, scoped, tag = 'internal scratch']
  %s0 = inlined_call_operand.vmem [shape: bf16[512,35], index: 0, kind: input, shape index: {}]
  %s1 = inlined_call_operand.vmem [shape: bf16[35,32], index: 1, kind: input, shape index: {}]
  %s2 = inlined_call_operand.vmem [shape: f32[1,32], index: 2, kind: input, shape index: {}]
  %s3 = inlined_call_operand.vmem [shape: bf16[32,32], index: 3, kind: input, shape index: {}]
  %s4 = inlined_call_operand.vmem [shape: f32[1,32], index: 4, kind: input, shape index: {}]
  %s5 = inlined_call_operand.vmem [shape: bf16[32,128], index: 5, kind: input, shape index: {}]
  %s6 = inlined_call_operand.vmem [shape: f32[1,128], index: 6, kind: input, shape index: {}]
  %s7 = inlined_call_operand.vmem [shape: f32[64,128], index: 7, kind: output, shape index: {}]
  %s8 = sld [smem:[#allocation0]]
  $region61: #{pointnet2_forward.5} parent=0
    _
  %s10 = ssub.s32 1, %s8
  %s11 = scalar_select 0, %s10, %s8
  loop: start=0, step=1, limit=4
  $region2: #{pointnet2_forward.5} parent=0 // loop_pre_header
    _
  $region3: #{pointnet2_forward.5} parent=0 // loop_header
    %s13 = sphi 0, %s17
    %p14 = scmp.ge.s32.totalorder %s13, 4
    %s23 = sphi 0, %s25
    %s26 = sphi 0, %s23
    %s27 = sphi 0, %s26
    %s43 = sphi 0, %s27
    %s47 = sphi 0, %s47
    %s49 = sphi 0, %s47
    %s50 = sphi 0, %s49
    %s64 = sphi 0, %s50
    %s68 = sphi 0, %s68
    %s70 = sphi 0, %s68
    %s71 = sphi 0, %s70
    %s85 = sphi 0, %s71
    %s89 = sphi 0, %s89
    %s91 = sphi 0, %s89
    %s92 = sphi 0, %s91
    %s106 = sphi 0, %s92
    %s110 = sphi 0, %s110
    %s112 = sphi 0, %s110
    %s113 = sphi 0, %s112
    %s127 = sphi 0, %s113
    %s131 = sphi 0, %s131
    %s133 = sphi 0, %s131
    %s134 = sphi 0, %s133
    %s148 = sphi 0, %s134
    %s152 = sphi 0, %s152
    %s154 = sphi 0, %s152
    %s155 = sphi 0, %s154
    %s169 = sphi 0, %s155
    %s175 = sphi 0, %s177
    %s178 = sphi 0, %s175
    %s179 = sphi 0, %s178
    %s195 = sphi 0, %s179
  $region4: #{pointnet2_forward.5} parent=0 // loop_header_branch
    %16 = sbr.rel (%p14) target = $region8
  $region5: #{pointnet2_forward.5} parent=0 // loop_body
    %s18 = ssub.s32 %s13, 1
    %s19 = ssub.s32 %s13, 2
    %s20 = sadd.s32 %s13, 1
    %s21 = ssub.s32 %s13, %s20
    %p22 = scmp.eq.s32.totalorder %s21, 0
    %s24 = sadd.s32 %s23, 1
    %s25 = scalar_select %p22, %s23, %s24
    %p28 = pneg %p22
    %p29 = scmp.eq.s32.totalorder %s13, 1
    %p30 = por %p28, %p29
    %p31 = scmp.ne.s32.totalorder %s23, %s26
    %p32 = scmp.eq.s32.totalorder %s13, 0
    %p33 = por %p31, %p32
    %p34 = scmp.ne.s32.totalorder %s23, %s26
    %p35 = scmp.eq.s32.totalorder %s18, 1
    %p36 = por %p34, %p35
    %p37 = scmp.ne.s32.totalorder %s26, %s27
    %p38 = scmp.eq.s32.totalorder %s18, 0
    %p39 = por %p37, %p38
    %p40 = scmp.ne.s32.totalorder %s26, %s27
    %p41 = scmp.eq.s32.totalorder %s19, 1
    %p42 = por %p40, %p41
    %p44 = scmp.ne.s32.totalorder %s27, %s43
    %p45 = scmp.eq.s32.totalorder %s19, 0
    %p46 = por %p44, %p45
    %s48 = sadd.s32 %s47, 1
    %p51 = scmp.eq.s32.totalorder %s13, 1
    %p52 = scmp.ne.s32.totalorder %s47, %s49
    %p53 = scmp.eq.s32.totalorder %s13, 0
    %p54 = por %p52, %p53
    %p55 = scmp.ne.s32.totalorder %s47, %s49
    %p56 = scmp.eq.s32.totalorder %s18, 1
    %p57 = por %p55, %p56
    %p58 = scmp.ne.s32.totalorder %s49, %s50
    %p59 = scmp.eq.s32.totalorder %s18, 0
    %p60 = por %p58, %p59
    %p61 = scmp.ne.s32.totalorder %s49, %s50
    %p62 = scmp.eq.s32.totalorder %s19, 1
    %p63 = por %p61, %p62
    %p65 = scmp.ne.s32.totalorder %s50, %s64
    %p66 = scmp.eq.s32.totalorder %s19, 0
    %p67 = por %p65, %p66
    %s69 = sadd.s32 %s68, 1
    %p72 = scmp.eq.s32.totalorder %s13, 1
    %p73 = scmp.ne.s32.totalorder %s68, %s70
    %p74 = scmp.eq.s32.totalorder %s13, 0
    %p75 = por %p73, %p74
    %p76 = scmp.ne.s32.totalorder %s68, %s70
    %p77 = scmp.eq.s32.totalorder %s18, 1
    %p78 = por %p76, %p77
    %p79 = scmp.ne.s32.totalorder %s70, %s71
    %p80 = scmp.eq.s32.totalorder %s18, 0
    %p81 = por %p79, %p80
    %p82 = scmp.ne.s32.totalorder %s70, %s71
    %p83 = scmp.eq.s32.totalorder %s19, 1
    %p84 = por %p82, %p83
    %p86 = scmp.ne.s32.totalorder %s71, %s85
    %p87 = scmp.eq.s32.totalorder %s19, 0
    %p88 = por %p86, %p87
    %s90 = sadd.s32 %s89, 1
    %p93 = scmp.eq.s32.totalorder %s13, 1
    %p94 = scmp.ne.s32.totalorder %s89, %s91
    %p95 = scmp.eq.s32.totalorder %s13, 0
    %p96 = por %p94, %p95
    %p97 = scmp.ne.s32.totalorder %s89, %s91
    %p98 = scmp.eq.s32.totalorder %s18, 1
    %p99 = por %p97, %p98
    %p100 = scmp.ne.s32.totalorder %s91, %s92
    %p101 = scmp.eq.s32.totalorder %s18, 0
    %p102 = por %p100, %p101
    %p103 = scmp.ne.s32.totalorder %s91, %s92
    %p104 = scmp.eq.s32.totalorder %s19, 1
    %p105 = por %p103, %p104
    %p107 = scmp.ne.s32.totalorder %s92, %s106
    %p108 = scmp.eq.s32.totalorder %s19, 0
    %p109 = por %p107, %p108
    %s111 = sadd.s32 %s110, 1
    %p114 = scmp.eq.s32.totalorder %s13, 1
    %p115 = scmp.ne.s32.totalorder %s110, %s112
    %p116 = scmp.eq.s32.totalorder %s13, 0
    %p117 = por %p115, %p116
    %p118 = scmp.ne.s32.totalorder %s110, %s112
    %p119 = scmp.eq.s32.totalorder %s18, 1
    %p120 = por %p118, %p119
    %p121 = scmp.ne.s32.totalorder %s112, %s113
    %p122 = scmp.eq.s32.totalorder %s18, 0
    %p123 = por %p121, %p122
    %p124 = scmp.ne.s32.totalorder %s112, %s113
    %p125 = scmp.eq.s32.totalorder %s19, 1
    %p126 = por %p124, %p125
    %p128 = scmp.ne.s32.totalorder %s113, %s127
    %p129 = scmp.eq.s32.totalorder %s19, 0
    %p130 = por %p128, %p129
    %s132 = sadd.s32 %s131, 1
    %p135 = scmp.eq.s32.totalorder %s13, 1
    %p136 = scmp.ne.s32.totalorder %s131, %s133
    %p137 = scmp.eq.s32.totalorder %s13, 0
    %p138 = por %p136, %p137
    %p139 = scmp.ne.s32.totalorder %s131, %s133
    %p140 = scmp.eq.s32.totalorder %s18, 1
    %p141 = por %p139, %p140
    %p142 = scmp.ne.s32.totalorder %s133, %s134
    %p143 = scmp.eq.s32.totalorder %s18, 0
    %p144 = por %p142, %p143
    %p145 = scmp.ne.s32.totalorder %s133, %s134
    %p146 = scmp.eq.s32.totalorder %s19, 1
    %p147 = por %p145, %p146
    %p149 = scmp.ne.s32.totalorder %s134, %s148
    %p150 = scmp.eq.s32.totalorder %s19, 0
    %p151 = por %p149, %p150
    %s153 = sadd.s32 %s152, 1
    %p156 = scmp.eq.s32.totalorder %s13, 1
    %p157 = scmp.ne.s32.totalorder %s152, %s154
    %p158 = scmp.eq.s32.totalorder %s13, 0
    %p159 = por %p157, %p158
    %p160 = scmp.ne.s32.totalorder %s152, %s154
    %p161 = scmp.eq.s32.totalorder %s18, 1
    %p162 = por %p160, %p161
    %p163 = scmp.ne.s32.totalorder %s154, %s155
    %p164 = scmp.eq.s32.totalorder %s18, 0
    %p165 = por %p163, %p164
    %p166 = scmp.ne.s32.totalorder %s154, %s155
    %p167 = scmp.eq.s32.totalorder %s19, 1
    %p168 = por %p166, %p167
    %p170 = scmp.ne.s32.totalorder %s155, %s169
    %p171 = scmp.eq.s32.totalorder %s19, 0
    %p172 = por %p170, %p171
    %s173 = ssub.s32 %s13, %s20
    %p174 = scmp.eq.s32.totalorder %s173, 0
    %s176 = sadd.s32 %s175, 1
    %s177 = scalar_select %p174, %s175, %s176
    %p180 = pneg %p174
    %p181 = scmp.eq.s32.totalorder %s13, 1
    %p182 = por %p180, %p181
    %p183 = scmp.ne.s32.totalorder %s175, %s178
    %p184 = scmp.eq.s32.totalorder %s13, 0
    %p185 = por %p183, %p184
    %p186 = scmp.ne.s32.totalorder %s175, %s178
    %p187 = scmp.eq.s32.totalorder %s18, 1
    %p188 = por %p186, %p187
    %p189 = scmp.ne.s32.totalorder %s178, %s179
    %p190 = scmp.eq.s32.totalorder %s18, 0
    %p191 = por %p189, %p190
    %p192 = scmp.ne.s32.totalorder %s178, %s179
    %p193 = scmp.eq.s32.totalorder %s19, 1
    %p194 = por %p192, %p193
    %p196 = scmp.ne.s32.totalorder %s179, %s195
    %p197 = scmp.eq.s32.totalorder %s19, 0
    %p198 = por %p196, %p197
    %p199 = scmp.le.s32.totalorder 1, %s13
    %p200 = scmp.lt.s32.totalorder %s13, 3
    %p201 = pnand %p199, %p200
    %p202 = pneg %p201
    // Predicated region
    $region9: #{pointnet2_forward.5} parent=5 // pred_check
      _
    $region10: #{pointnet2_forward.5} parent=5 // pred_check_branch
      %204 = sbr.rel (%p201) target = $region12
    $region11: #{pointnet2_forward.5} parent=5 // pred_region
      %s205 = ssub.s32 %s13, 1
      // Predicated region
      $region13: #{pointnet2_forward.5} parent=11 // pred_check
        %p206 = pneg %p60
      $region14: #{pointnet2_forward.5} parent=11 // pred_check_branch
        %208 = sbr.rel (%p206) target = $region16
      $region15: #{pointnet2_forward.5} parent=11 // pred_region
        _
      $region16: #{pointnet2_forward.5} parent=11 // pred_fallthru
        _
      // Predicated region
      $region17: #{pointnet2_forward.5} parent=11 // pred_check
        %p209 = pneg %p81
      $region18: #{pointnet2_forward.5} parent=11 // pred_check_branch
        %211 = sbr.rel (%p209) target = $region20
      $region19: #{pointnet2_forward.5} parent=11 // pred_region
        _
      $region20: #{pointnet2_forward.5} parent=11 // pred_fallthru
        _
      // Predicated region
      $region21: #{pointnet2_forward.5} parent=11 // pred_check
        %p212 = pneg %p102
      $region22: #{pointnet2_forward.5} parent=11 // pred_check_branch
        %214 = sbr.rel (%p212) target = $region24
      $region23: #{pointnet2_forward.5} parent=11 // pred_region
        _
      $region24: #{pointnet2_forward.5} parent=11 // pred_fallthru
        _
      // Predicated region
      $region25: #{pointnet2_forward.5} parent=11 // pred_check
        %p215 = pneg %p123
      $region26: #{pointnet2_forward.5} parent=11 // pred_check_branch
        %217 = sbr.rel (%p215) target = $region28
      $region27: #{pointnet2_forward.5} parent=11 // pred_region
        _
      $region28: #{pointnet2_forward.5} parent=11 // pred_fallthru
        _
      // Predicated region
      $region29: #{pointnet2_forward.5} parent=11 // pred_check
        %p218 = pneg %p144
      $region30: #{pointnet2_forward.5} parent=11 // pred_check_branch
        %220 = sbr.rel (%p218) target = $region32
      $region31: #{pointnet2_forward.5} parent=11 // pred_region
        _
      $region32: #{pointnet2_forward.5} parent=11 // pred_fallthru
        _
      // Predicated region
      $region33: #{pointnet2_forward.5} parent=11 // pred_check
        %p221 = pneg %p165
      $region34: #{pointnet2_forward.5} parent=11 // pred_check_branch
        %223 = sbr.rel (%p221) target = $region36
      $region35: #{pointnet2_forward.5} parent=11 // pred_region
        _
      $region36: #{pointnet2_forward.5} parent=11 // pred_fallthru
        _
    $region12: #{pointnet2_forward.5} parent=5 // pred_fallthru
      _
    %p224 = scmp.lt.s32.totalorder %s13, 2
    // Predicated region
    $region37: #{pointnet2_forward.5} parent=5 // pred_check
      %p225 = pneg %p224
    $region38: #{pointnet2_forward.5} parent=5 // pred_check_branch
      %227 = sbr.rel (%p225) target = $region40
    $region39: #{pointnet2_forward.5} parent=5 // pred_region
      // Predicated region
      $region41: #{pointnet2_forward.5} parent=39 // pred_check
        %p228 = pneg %p33
      $region42: #{pointnet2_forward.5} parent=39 // pred_check_branch
        %230 = sbr.rel (%p228) target = $region44
      $region43: #{pointnet2_forward.5} parent=39 // pred_region
        %s231 = smul.u32 32, %s13
        %p232 = scmp.lt.s32.totalorder %s231, 63
        %s233 = scalar_select %p232, %s231, 63
        %s234 = smul.addr %s233, 4
        %s235 = scalar_lea.vmem %s0, %s234
        %s236 = smul.u32 32, %s13
      $region44: #{pointnet2_forward.5} parent=39 // pred_fallthru
        _
    $region40: #{pointnet2_forward.5} parent=5 // pred_fallthru
      _
    %p237 = scmp.le.s32.totalorder 1, %s13
    %p238 = scmp.lt.s32.totalorder %s13, 3
    %p239 = pnand %p237, %p238
    %p240 = pneg %p239
    // Predicated region
    $region45: #{pointnet2_forward.5} parent=5 // pred_check
      _
    $region46: #{pointnet2_forward.5} parent=5 // pred_check_branch
      %242 = sbr.rel (%p239) target = $region48
    $region47: #{pointnet2_forward.5} parent=5 // pred_region
      %s243 = ssub.s32 %s13, 1
      %s244 = smul.u32 32, %s18
      %p245 = scmp.lt.s32.totalorder %s244, 63
      %s246 = scalar_select %p245, %s244, 63
      %s247 = smul.addr %s246, 4
      %s248 = scalar_lea.vmem %s0, %s247
      %p249 = pneg %p39
      %p250 = pneg %p36
      %p251 = pneg %p60
      %p252 = pneg %p57
      %p253 = pneg %p81
      %p254 = pneg %p78
      %p255 = pneg %p102
      %p256 = pneg %p99
      %p257 = pneg %p123
      %p258 = pneg %p120
      %p259 = pneg %p144
      %p260 = pneg %p141
      %p261 = pneg %p165
      %p262 = pneg %p162
      %p263 = pneg %p191
      %p264 = pneg %p188
      %s265 = smul.u32 4, %s18
      %p266 = scmp.lt.s32.totalorder %s265, 7
      %s267 = scalar_select %p266, %s265, 7
      %s268 = smul.addr %s267, 8
      %s269 = scalar_lea.vmem %s7, %s268
      %s270 = smul.u32 32, %s18
      %p271 = scmp.lt.s32.totalorder %s270, 63
      %s272 = scalar_select %p271, %s270, 63
      %s273 = smul.addr %s272, 4
      %s274 = scalar_lea.vmem %s0, %s273
      %s275 = smul.u32 32, %s18
      %s276 = smul.u32 4, %s18
      %p277 = scmp.lt.s32.totalorder %s276, 7
      %s278 = scalar_select %p277, %s276, 7
      %s279 = smul.addr %s278, 8
      %s280 = scalar_lea.vmem %s7, %s279
      %s281 = smul.u32 4, %s18
      %v283 = vld [vmem:[%s274] sm:$0xf]
      %v284 = vld [vmem:[%s274 + $0x4] sm:$0xf]
      %v285 = vld [vmem:[%s274 + $0x8] sm:$0xf]
      %v286 = vld [vmem:[%s274 + $0xc] sm:$0xf]
      %v287 = vld [vmem:[%s274 + $0x10] sm:$0xf]
      %v288 = vld [vmem:[%s274 + $0x14] sm:$0xf]
      %v289 = vld [vmem:[%s274 + $0x18] sm:$0xf]
      %v290 = vld [vmem:[%s274 + $0x1c] sm:$0xf]
      %v291 = vld [vmem:[%s274 + $0x20] sm:$0xf]
      %v292 = vld [vmem:[%s274 + $0x24] sm:$0xf]
      %v293 = vld [vmem:[%s274 + $0x28] sm:$0xf]
      %v294 = vld [vmem:[%s274 + $0x2c] sm:$0xf]
      %v295 = vld [vmem:[%s274 + $0x30] sm:$0xf]
      %v296 = vld [vmem:[%s274 + $0x34] sm:$0xf]
      %v297 = vld [vmem:[%s274 + $0x38] sm:$0xf]
      %v298 = vld [vmem:[%s274 + $0x3c] sm:$0xf]
      %v299 = vld [vmem:[%s274 + $0x40] sm:$0xf]
      %v300 = vld [vmem:[%s274 + $0x44] sm:$0xf]
      %v301 = vld [vmem:[%s274 + $0x48] sm:$0xf]
      %v302 = vld [vmem:[%s274 + $0x4c] sm:$0xf]
      %v303 = vld [vmem:[%s274 + $0x50] sm:$0xf]
      %v304 = vld [vmem:[%s274 + $0x54] sm:$0xf]
      %v305 = vld [vmem:[%s274 + $0x58] sm:$0xf]
      %v306 = vld [vmem:[%s274 + $0x5c] sm:$0xf]
      %v307 = vld [vmem:[%s274 + $0x60] sm:$0xf]
      %v308 = vld [vmem:[%s274 + $0x64] sm:$0xf]
      %v309 = vld [vmem:[%s274 + $0x68] sm:$0xf]
      %v310 = vld [vmem:[%s274 + $0x6c] sm:$0xf]
      %v311 = vld [vmem:[%s274 + $0x70] sm:$0xf]
      %v312 = vld [vmem:[%s274 + $0x74] sm:$0xf]
      %v313 = vld [vmem:[%s274 + $0x78] sm:$0xf]
      %v314 = vld [vmem:[%s274 + $0x7c] sm:$0xf]
      %v315 = vld [vmem:[%s1] sm:$0xf]
      %v316 = vld [vmem:[%s1 + $0x4] sm:$0xf]
      %v317 = vld [vmem:[%s1 + $0x8] sm:$0xf]
      %v318 = vld [vmem:[%s1 + $0xc] sm:$0xf]
      %v319 = vld [vmem:[%s1 + $0x10] sm:$0x3]
      %v320 = vld [vmem:[%s2] sm:$0x1]
      %v322 = vlaneseq
      %v323 = vshrl.u32 %v322, 7
      %v324 = vsub.s32 0, %v323
      %v325 = vrot.slane %v320, %v324
      %v359 = vunpack.c.l.b16 %v283
      %v360 = vunpack.c.l.b16 %v284
      %v361 = vunpack.c.l.b16 %v285
      %v362 = vunpack.c.l.b16 %v286
      %v363 = vunpack.c.l.b16 %v287
      %v364 = vunpack.c.l.b16 %v288
      %v365 = vunpack.c.l.b16 %v289
      %v366 = vunpack.c.l.b16 %v290
      %v367 = vunpack.c.l.b16 %v291
      %v368 = vunpack.c.l.b16 %v292
      %v369 = vunpack.c.l.b16 %v293
      %v370 = vunpack.c.l.b16 %v294
      %v371 = vunpack.c.l.b16 %v295
      %v372 = vunpack.c.l.b16 %v296
      %v373 = vunpack.c.l.b16 %v297
      %v374 = vunpack.c.l.b16 %v298
      %v375 = vunpack.c.l.b16 %v299
      %v376 = vunpack.c.l.b16 %v300
      %v377 = vunpack.c.l.b16 %v301
      %v378 = vunpack.c.l.b16 %v302
      %v379 = vunpack.c.l.b16 %v303
      %v380 = vunpack.c.l.b16 %v304
      %v381 = vunpack.c.l.b16 %v305
      %v382 = vunpack.c.l.b16 %v306
      %v383 = vunpack.c.l.b16 %v307
      %v384 = vunpack.c.l.b16 %v308
      %v385 = vunpack.c.l.b16 %v309
      %v386 = vunpack.c.l.b16 %v310
      %v387 = vunpack.c.l.b16 %v311
      %v388 = vunpack.c.l.b16 %v312
      %v389 = vunpack.c.l.b16 %v313
      %v390 = vunpack.c.l.b16 %v314
      %v391 = vpack.c.b16 %v360, %v359
      %v392 = vpack.c.b16 %v362, %v361
      %v393 = vpack.c.b16 %v364, %v363
      %v394 = vpack.c.b16 %v366, %v365
      %v395 = vpack.c.b16 %v368, %v367
      %v396 = vpack.c.b16 %v370, %v369
      %v397 = vpack.c.b16 %v372, %v371
      %v398 = vpack.c.b16 %v374, %v373
      %v399 = vpack.c.b16 %v376, %v375
      %v400 = vpack.c.b16 %v378, %v377
      %v401 = vpack.c.b16 %v380, %v379
      %v402 = vpack.c.b16 %v382, %v381
      %v403 = vpack.c.b16 %v384, %v383
      %v404 = vpack.c.b16 %v386, %v385
      %v405 = vpack.c.b16 %v388, %v387
      %v406 = vpack.c.b16 %v390, %v389
      %v412 = vunpack.c.l.b16 %v315
      %v413 = vunpack.c.l.b16 %v316
      %v414 = vunpack.c.l.b16 %v317
      %v415 = vunpack.c.l.b16 %v318
      %v416 = vunpack.c.l.b16 %v319
      %v417 = vpack.c.b16 %v413, %v412
      %v418 = vpack.c.b16 %v415, %v414
      %v419 = vpack.c.b16 %v416, %v416
      %vm422 = vcmask 285696
      %v424 = vsel %vm422, %v391, 0
      %v427 = vsel %vm422, %v392, 0
      %v430 = vsel %vm422, %v393, 0
      %v433 = vsel %vm422, %v394, 0
      %v436 = vsel %vm422, %v395, 0
      %v439 = vsel %vm422, %v396, 0
      %v442 = vsel %vm422, %v397, 0
      %v445 = vsel %vm422, %v398, 0
      %v448 = vsel %vm422, %v399, 0
      %v451 = vsel %vm422, %v400, 0
      %v454 = vsel %vm422, %v401, 0
      %v457 = vsel %vm422, %v402, 0
      %v460 = vsel %vm422, %v403, 0
      %v463 = vsel %vm422, %v404, 0
      %v466 = vsel %vm422, %v405, 0
      %v469 = vsel %vm422, %v406, 0
      %vm471 = vcmask 1040384
      %vm472 = vcmask 1041408
      %v473 = vsel %vm471, 4294967295, 65535
      %v474 = vsel %vm472, %v473, 0
      %v476 = vand.u32 %v419, %v474
      %478 = vmatprep.subr.bf16.mxu0 0
      %479 = vmatpush1.bf16.msra.mxu0 %v417
      %480 = vmatprep.subr.bf16.mxu0 0
      %481 = vmatpush1.bf16.msra.mxu0 %v418
      %482 = vmatprep.subr.bf16.mxu0 0
      %483 = vmatpush1.bf16.msra.mxu0 %v476
      %484 = vmatprep.subr.bf16.mxu0 0
      %485 = vmatpush1.bf16.msra.mxu0 0
      %486 = vmatprep.subr.bf16.mxu0 0
      %487 = vmatpush1.bf16.msra.mxu0 0
      %488 = vmatprep.subr.bf16.mxu0 0
      %489 = vmatpush1.bf16.msra.mxu0 0
      %490 = vmatprep.subr.bf16.mxu0 0
      %491 = vmatpush1.bf16.msra.mxu0 0
      %492 = vmatprep.subr.bf16.mxu0 0
      %493 = vmatpush1.bf16.msra.mxu0 0
      %494 = vmatprep.subr.bf16.mxu0 0
      %495 = vmatpush1.bf16.msra.mxu0 0
      %496 = vmatprep.subr.bf16.mxu0 0
      %497 = vmatpush1.bf16.msra.mxu0 0
      %498 = vmatprep.subr.bf16.mxu0 0
      %499 = vmatpush1.bf16.msra.mxu0 0
      %500 = vmatprep.subr.bf16.mxu0 0
      %501 = vmatpush1.bf16.msra.mxu0 0
      %502 = vmatprep.subr.bf16.mxu0 0
      %503 = vmatpush1.bf16.msra.mxu0 0
      %504 = vmatprep.subr.bf16.mxu0 0
      %505 = vmatpush1.bf16.msra.mxu0 0
      %506 = vmatprep.subr.bf16.mxu0 0
      %507 = vmatpush1.bf16.msra.mxu0 0
      %508 = vmatprep.subr.bf16.mxu0 0
      %509 = vmatpush1.bf16.msra.mxu0 0
      %510 = vmatprep.mubr.bf16.mxu0 0
      %511 = vmatmul.mubr.bf16.gmra.mrb[0].mxu0 %v424
      %v512 = vpop.f32.mrb[0].mxu0
      %v513 = vadd.f32 %v325, %v512
      %v514 = vpop.f32.mrb[0].mxu0
      %v515 = vpop.f32.mrb[0].mxu0
      %v516 = vadd.f32 %v325, %v515
      %v517 = vpop.f32.mrb[0].mxu0
      %518 = vmatprep.mubr.bf16.mxu0 0
      %519 = vmatmul.mubr.bf16.gmra.mrb[0].mxu0 %v427
      %v520 = vpop.f32.mrb[0].mxu0
      %v521 = vadd.f32 %v325, %v520
      %v522 = vpop.f32.mrb[0].mxu0
      %v523 = vpop.f32.mrb[0].mxu0
      %v524 = vadd.f32 %v325, %v523
      %v525 = vpop.f32.mrb[0].mxu0
      %526 = vmatprep.mubr.bf16.mxu0 0
      %527 = vmatmul.mubr.bf16.gmra.mrb[0].mxu0 %v430
      %v528 = vpop.f32.mrb[0].mxu0
      %v529 = vadd.f32 %v325, %v528
      %v530 = vpop.f32.mrb[0].mxu0
      %v531 = vpop.f32.mrb[0].mxu0
      %v532 = vadd.f32 %v325, %v531
      %v533 = vpop.f32.mrb[0].mxu0
      %534 = vmatprep.mubr.bf16.mxu0 0
      %535 = vmatmul.mubr.bf16.gmra.mrb[0].mxu0 %v433
      %v536 = vpop.f32.mrb[0].mxu0
      %v537 = vadd.f32 %v325, %v536
      %v538 = vpop.f32.mrb[0].mxu0
      %v539 = vpop.f32.mrb[0].mxu0
      %v540 = vadd.f32 %v325, %v539
      %v541 = vpop.f32.mrb[0].mxu0
      %542 = vmatprep.mubr.bf16.mxu0 0
      %543 = vmatmul.mubr.bf16.gmra.mrb[0].mxu0 %v436
      %v544 = vpop.f32.mrb[0].mxu0
      %v545 = vadd.f32 %v325, %v544
      %v546 = vpop.f32.mrb[0].mxu0
      %v547 = vpop.f32.mrb[0].mxu0
      %v548 = vadd.f32 %v325, %v547
      %v549 = vpop.f32.mrb[0].mxu0
      %550 = vmatprep.mubr.bf16.mxu0 0
      %551 = vmatmul.mubr.bf16.gmra.mrb[0].mxu0 %v439
      %v552 = vpop.f32.mrb[0].mxu0
      %v553 = vadd.f32 %v325, %v552
      %v554 = vpop.f32.mrb[0].mxu0
      %v555 = vpop.f32.mrb[0].mxu0
      %v556 = vadd.f32 %v325, %v555
      %v557 = vpop.f32.mrb[0].mxu0
      %558 = vmatprep.mubr.bf16.mxu0 0
      %559 = vmatmul.mubr.bf16.gmra.mrb[0].mxu0 %v442
      %v560 = vpop.f32.mrb[0].mxu0
      %v561 = vadd.f32 %v325, %v560
      %v562 = vpop.f32.mrb[0].mxu0
      %v563 = vpop.f32.mrb[0].mxu0
      %v564 = vadd.f32 %v325, %v563
      %v565 = vpop.f32.mrb[0].mxu0
      %566 = vmatprep.mubr.bf16.mxu0 0
      %567 = vmatmul.mubr.bf16.gmra.mrb[0].mxu0 %v445
      %v568 = vpop.f32.mrb[0].mxu0
      %v569 = vadd.f32 %v325, %v568
      %v570 = vpop.f32.mrb[0].mxu0
      %v571 = vpop.f32.mrb[0].mxu0
      %v572 = vadd.f32 %v325, %v571
      %v573 = vpop.f32.mrb[0].mxu0
      %574 = vmatprep.mubr.bf16.mxu0 0
      %575 = vmatmul.mubr.bf16.gmra.mrb[0].mxu0 %v448
      %v576 = vpop.f32.mrb[0].mxu0
      %v577 = vadd.f32 %v325, %v576
      %v578 = vpop.f32.mrb[0].mxu0
      %v579 = vpop.f32.mrb[0].mxu0
      %v580 = vadd.f32 %v325, %v579
      %v581 = vpop.f32.mrb[0].mxu0
      %582 = vmatprep.mubr.bf16.mxu0 0
      %583 = vmatmul.mubr.bf16.gmra.mrb[0].mxu0 %v451
      %v584 = vpop.f32.mrb[0].mxu0
      %v585 = vadd.f32 %v325, %v584
      %v586 = vpop.f32.mrb[0].mxu0
      %v587 = vpop.f32.mrb[0].mxu0
      %v588 = vadd.f32 %v325, %v587
      %v589 = vpop.f32.mrb[0].mxu0
      %590 = vmatprep.mubr.bf16.mxu0 0
      %591 = vmatmul.mubr.bf16.gmra.mrb[0].mxu0 %v454
      %v592 = vpop.f32.mrb[0].mxu0
      %v593 = vadd.f32 %v325, %v592
      %v594 = vpop.f32.mrb[0].mxu0
      %v595 = vpop.f32.mrb[0].mxu0
      %v596 = vadd.f32 %v325, %v595
      %v597 = vpop.f32.mrb[0].mxu0
      %598 = vmatprep.mubr.bf16.mxu0 0
      %599 = vmatmul.mubr.bf16.gmra.mrb[0].mxu0 %v457
      %v600 = vpop.f32.mrb[0].mxu0
      %v601 = vadd.f32 %v325, %v600
      %v602 = vpop.f32.mrb[0].mxu0
      %v603 = vpop.f32.mrb[0].mxu0
      %v604 = vadd.f32 %v325, %v603
      %v605 = vpop.f32.mrb[0].mxu0
      %606 = vmatprep.mubr.bf16.mxu0 0
      %607 = vmatmul.mubr.bf16.gmra.mrb[0].mxu0 %v460
      %v608 = vpop.f32.mrb[0].mxu0
      %v609 = vadd.f32 %v325, %v608
      %v610 = vpop.f32.mrb[0].mxu0
      %v611 = vpop.f32.mrb[0].mxu0
      %v612 = vadd.f32 %v325, %v611
      %v613 = vpop.f32.mrb[0].mxu0
      %614 = vmatprep.mubr.bf16.mxu0 0
      %615 = vmatmul.mubr.bf16.gmra.mrb[0].mxu0 %v463
      %v616 = vpop.f32.mrb[0].mxu0
      %v617 = vadd.f32 %v325, %v616
      %v618 = vpop.f32.mrb[0].mxu0
      %v619 = vpop.f32.mrb[0].mxu0
      %v620 = vadd.f32 %v325, %v619
      %v621 = vpop.f32.mrb[0].mxu0
      %622 = vmatprep.mubr.bf16.mxu0 0
      %623 = vmatmul.mubr.bf16.gmra.mrb[0].mxu0 %v466
      %v624 = vpop.f32.mrb[0].mxu0
      %v625 = vadd.f32 %v325, %v624
      %v626 = vpop.f32.mrb[0].mxu0
      %v627 = vpop.f32.mrb[0].mxu0
      %v628 = vadd.f32 %v325, %v627
      %v629 = vpop.f32.mrb[0].mxu0
      %630 = vmatprep.mubr.bf16.mxu0 0
      %631 = vmatmul.mubr.bf16.gmra.mrb[0].mxu0 %v469
      %v632 = vpop.f32.mrb[0].mxu0
      %v633 = vadd.f32 %v325, %v632
      %v634 = vpop.f32.mrb[0].mxu0
      %v635 = vpop.f32.mrb[0].mxu0
      %v636 = vadd.f32 %v325, %v635
      %v637 = vpop.f32.mrb[0].mxu0
      %638 = vdwg.mxu0
      %v639 = vmax.f32 %v513, 0.0
      %v640 = vmax.f32 %v516, 0.0
      %v641 = vmax.f32 %v521, 0.0
      %v642 = vmax.f32 %v524, 0.0
      %v643 = vmax.f32 %v529, 0.0
      %v644 = vmax.f32 %v532, 0.0
      %v645 = vmax.f32 %v537, 0.0
      %v646 = vmax.f32 %v540, 0.0
      %v647 = vmax.f32 %v545, 0.0
      %v648 = vmax.f32 %v548, 0.0
      %v649 = vmax.f32 %v553, 0.0
      %v650 = vmax.f32 %v556, 0.0
      %v651 = vmax.f32 %v561, 0.0
      %v652 = vmax.f32 %v564, 0.0
      %v653 = vmax.f32 %v569, 0.0
      %v654 = vmax.f32 %v572, 0.0
      %v655 = vmax.f32 %v577, 0.0
      %v656 = vmax.f32 %v580, 0.0
      %v657 = vmax.f32 %v585, 0.0
      %v658 = vmax.f32 %v588, 0.0
      %v659 = vmax.f32 %v593, 0.0
      %v660 = vmax.f32 %v596, 0.0
      %v661 = vmax.f32 %v601, 0.0
      %v662 = vmax.f32 %v604, 0.0
      %v663 = vmax.f32 %v609, 0.0
      %v664 = vmax.f32 %v612, 0.0
      %v665 = vmax.f32 %v617, 0.0
      %v666 = vmax.f32 %v620, 0.0
      %v667 = vmax.f32 %v625, 0.0
      %v668 = vmax.f32 %v628, 0.0
      %v669 = vmax.f32 %v633, 0.0
      %v670 = vmax.f32 %v636, 0.0
      %v671 = vpack.c.bf16 %v640, %v639
      %v672 = vpack.c.bf16 %v642, %v641
      %v673 = vpack.c.bf16 %v644, %v643
      %v674 = vpack.c.bf16 %v646, %v645
      %v675 = vpack.c.bf16 %v648, %v647
      %v676 = vpack.c.bf16 %v650, %v649
      %v677 = vpack.c.bf16 %v652, %v651
      %v678 = vpack.c.bf16 %v654, %v653
      %v679 = vpack.c.bf16 %v656, %v655
      %v680 = vpack.c.bf16 %v658, %v657
      %v681 = vpack.c.bf16 %v660, %v659
      %v682 = vpack.c.bf16 %v662, %v661
      %v683 = vpack.c.bf16 %v664, %v663
      %v684 = vpack.c.bf16 %v666, %v665
      %v685 = vpack.c.bf16 %v668, %v667
      %v686 = vpack.c.bf16 %v670, %v669
      %v687 = vld [vmem:[%s3] sm:$0xf]
      %v688 = vld [vmem:[%s3 + $0x4] sm:$0xf]
      %v689 = vld [vmem:[%s3 + $0x8] sm:$0xf]
      %v690 = vld [vmem:[%s3 + $0xc] sm:$0xf]
      %v691 = vld [vmem:[%s4] sm:$0x1]
      %v693 = vlaneseq
      %v694 = vshrl.u32 %v693, 7
      %v695 = vsub.s32 0, %v694
      %v696 = vrot.slane %v691, %v695
      %v702 = vunpack.c.l.b16 %v687
      %v703 = vunpack.c.l.b16 %v688
      %v704 = vunpack.c.l.b16 %v689
      %v705 = vunpack.c.l.b16 %v690
      %v706 = vpack.c.b16 %v703, %v702
      %v707 = vpack.c.b16 %v705, %v704
      %vm710 = vcmask 261120
      %v712 = vsel %vm710, %v671, 0
      %v715 = vsel %vm710, %v672, 0
      %v718 = vsel %vm710, %v673, 0
      %v721 = vsel %vm710, %v674, 0
      %v724 = vsel %vm710, %v675, 0
      %v727 = vsel %vm710, %v676, 0
      %v730 = vsel %vm710, %v677, 0
      %v733 = vsel %vm710, %v678, 0
      %v736 = vsel %vm710, %v679, 0
      %v739 = vsel %vm710, %v680, 0
      %v742 = vsel %vm710, %v681, 0
      %v745 = vsel %vm710, %v682, 0
      %v748 = vsel %vm710, %v683, 0
      %v751 = vsel %vm710, %v684, 0
      %v754 = vsel %vm710, %v685, 0
      %v757 = vsel %vm710, %v686, 0
      %759 = vmatprep.subr.bf16.mxu0 0
      %760 = vmatpush1.bf16.msra.mxu0 %v706
      %761 = vmatprep.subr.bf16.mxu0 0
      %762 = vmatpush1.bf16.msra.mxu0 %v707
      %763 = vmatprep.subr.bf16.mxu0 0
      %764 = vmatpush1.bf16.msra.mxu0 0
      %765 = vmatprep.subr.bf16.mxu0 0
      %766 = vmatpush1.bf16.msra.mxu0 0
      %767 = vmatprep.subr.bf16.mxu0 0
      %768 = vmatpush1.bf16.msra.mxu0 0
      %769 = vmatprep.subr.bf16.mxu0 0
      %770 = vmatpush1.bf16.msra.mxu0 0
      %771 = vmatprep.subr.bf16.mxu0 0
      %772 = vmatpush1.bf16.msra.mxu0 0
      %773 = vmatprep.subr.bf16.mxu0 0
      %774 = vmatpush1.bf16.msra.mxu0 0
      %775 = vmatprep.subr.bf16.mxu0 0
      %776 = vmatpush1.bf16.msra.mxu0 0
      %777 = vmatprep.subr.bf16.mxu0 0
      %778 = vmatpush1.bf16.msra.mxu0 0
      %779 = vmatprep.subr.bf16.mxu0 0
      %780 = vmatpush1.bf16.msra.mxu0 0
      %781 = vmatprep.subr.bf16.mxu0 0
      %782 = vmatpush1.bf16.msra.mxu0 0
      %783 = vmatprep.subr.bf16.mxu0 0
      %784 = vmatpush1.bf16.msra.mxu0 0
      %785 = vmatprep.subr.bf16.mxu0 0
      %786 = vmatpush1.bf16.msra.mxu0 0
      %787 = vmatprep.subr.bf16.mxu0 0
      %788 = vmatpush1.bf16.msra.mxu0 0
      %789 = vmatprep.subr.bf16.mxu0 0
      %790 = vmatpush1.bf16.msra.mxu0 0
      %791 = vmatprep.mubr.bf16.mxu0 0
      %792 = vmatmul.mubr.bf16.gmra.mrb[0].mxu0 %v712
      %v793 = vpop.f32.mrb[0].mxu0
      %v794 = vadd.f32 %v696, %v793
      %v795 = vpop.f32.mrb[0].mxu0
      %v796 = vpop.f32.mrb[0].mxu0
      %v797 = vadd.f32 %v696, %v796
      %v798 = vpop.f32.mrb[0].mxu0
      %799 = vmatprep.mubr.bf16.mxu0 0
      %800 = vmatmul.mubr.bf16.gmra.mrb[0].mxu0 %v715
      %v801 = vpop.f32.mrb[0].mxu0
      %v802 = vadd.f32 %v696, %v801
      %v803 = vpop.f32.mrb[0].mxu0
      %v804 = vpop.f32.mrb[0].mxu0
      %v805 = vadd.f32 %v696, %v804
      %v806 = vpop.f32.mrb[0].mxu0
      %807 = vmatprep.mubr.bf16.mxu0 0
      %808 = vmatmul.mubr.bf16.gmra.mrb[0].mxu0 %v718
      %v809 = vpop.f32.mrb[0].mxu0
      %v810 = vadd.f32 %v696, %v809
      %v811 = vpop.f32.mrb[0].mxu0
      %v812 = vpop.f32.mrb[0].mxu0
      %v813 = vadd.f32 %v696, %v812
      %v814 = vpop.f32.mrb[0].mxu0
      %815 = vmatprep.mubr.bf16.mxu0 0
      %816 = vmatmul.mubr.bf16.gmra.mrb[0].mxu0 %v721
      %v817 = vpop.f32.mrb[0].mxu0
      %v818 = vadd.f32 %v696, %v817
      %v819 = vpop.f32.mrb[0].mxu0
      %v820 = vpop.f32.mrb[0].mxu0
      %v821 = vadd.f32 %v696, %v820
      %v822 = vpop.f32.mrb[0].mxu0
      %823 = vmatprep.mubr.bf16.mxu0 0
      %824 = vmatmul.mubr.bf16.gmra.mrb[0].mxu0 %v724
      %v825 = vpop.f32.mrb[0].mxu0
      %v826 = vadd.f32 %v696, %v825
      %v827 = vpop.f32.mrb[0].mxu0
      %v828 = vpop.f32.mrb[0].mxu0
      %v829 = vadd.f32 %v696, %v828
      %v830 = vpop.f32.mrb[0].mxu0
      %831 = vmatprep.mubr.bf16.mxu0 0
      %832 = vmatmul.mubr.bf16.gmra.mrb[0].mxu0 %v727
      %v833 = vpop.f32.mrb[0].mxu0
      %v834 = vadd.f32 %v696, %v833
      %v835 = vpop.f32.mrb[0].mxu0
      %v836 = vpop.f32.mrb[0].mxu0
      %v837 = vadd.f32 %v696, %v836
      %v838 = vpop.f32.mrb[0].mxu0
      %839 = vmatprep.mubr.bf16.mxu0 0
      %840 = vmatmul.mubr.bf16.gmra.mrb[0].mxu0 %v730
      %v841 = vpop.f32.mrb[0].mxu0
      %v842 = vadd.f32 %v696, %v841
      %v843 = vpop.f32.mrb[0].mxu0
      %v844 = vpop.f32.mrb[0].mxu0
      %v845 = vadd.f32 %v696, %v844
      %v846 = vpop.f32.mrb[0].mxu0
      %847 = vmatprep.mubr.bf16.mxu0 0
      %848 = vmatmul.mubr.bf16.gmra.mrb[0].mxu0 %v733
      %v849 = vpop.f32.mrb[0].mxu0
      %v850 = vadd.f32 %v696, %v849
      %v851 = vpop.f32.mrb[0].mxu0
      %v852 = vpop.f32.mrb[0].mxu0
      %v853 = vadd.f32 %v696, %v852
      %v854 = vpop.f32.mrb[0].mxu0
      %855 = vmatprep.mubr.bf16.mxu0 0
      %856 = vmatmul.mubr.bf16.gmra.mrb[0].mxu0 %v736
      %v857 = vpop.f32.mrb[0].mxu0
      %v858 = vadd.f32 %v696, %v857
      %v859 = vpop.f32.mrb[0].mxu0
      %v860 = vpop.f32.mrb[0].mxu0
      %v861 = vadd.f32 %v696, %v860
      %v862 = vpop.f32.mrb[0].mxu0
      %863 = vmatprep.mubr.bf16.mxu0 0
      %864 = vmatmul.mubr.bf16.gmra.mrb[0].mxu0 %v739
      %v865 = vpop.f32.mrb[0].mxu0
      %v866 = vadd.f32 %v696, %v865
      %v867 = vpop.f32.mrb[0].mxu0
      %v868 = vpop.f32.mrb[0].mxu0
      %v869 = vadd.f32 %v696, %v868
      %v870 = vpop.f32.mrb[0].mxu0
      %871 = vmatprep.mubr.bf16.mxu0 0
      %872 = vmatmul.mubr.bf16.gmra.mrb[0].mxu0 %v742
      %v873 = vpop.f32.mrb[0].mxu0
      %v874 = vadd.f32 %v696, %v873
      %v875 = vpop.f32.mrb[0].mxu0
      %v876 = vpop.f32.mrb[0].mxu0
      %v877 = vadd.f32 %v696, %v876
      %v878 = vpop.f32.mrb[0].mxu0
      %879 = vmatprep.mubr.bf16.mxu0 0
      %880 = vmatmul.mubr.bf16.gmra.mrb[0].mxu0 %v745
      %v881 = vpop.f32.mrb[0].mxu0
      %v882 = vadd.f32 %v696, %v881
      %v883 = vpop.f32.mrb[0].mxu0
      %v884 = vpop.f32.mrb[0].mxu0
      %v885 = vadd.f32 %v696, %v884
      %v886 = vpop.f32.mrb[0].mxu0
      %887 = vmatprep.mubr.bf16.mxu0 0
      %888 = vmatmul.mubr.bf16.gmra.mrb[0].mxu0 %v748
      %v889 = vpop.f32.mrb[0].mxu0
      %v890 = vadd.f32 %v696, %v889
      %v891 = vpop.f32.mrb[0].mxu0
      %v892 = vpop.f32.mrb[0].mxu0
      %v893 = vadd.f32 %v696, %v892
      %v894 = vpop.f32.mrb[0].mxu0
      %895 = vmatprep.mubr.bf16.mxu0 0
      %896 = vmatmul.mubr.bf16.gmra.mrb[0].mxu0 %v751
      %v897 = vpop.f32.mrb[0].mxu0
      %v898 = vadd.f32 %v696, %v897
      %v899 = vpop.f32.mrb[0].mxu0
      %v900 = vpop.f32.mrb[0].mxu0
      %v901 = vadd.f32 %v696, %v900
      %v902 = vpop.f32.mrb[0].mxu0
      %903 = vmatprep.mubr.bf16.mxu0 0
      %904 = vmatmul.mubr.bf16.gmra.mrb[0].mxu0 %v754
      %v905 = vpop.f32.mrb[0].mxu0
      %v906 = vadd.f32 %v696, %v905
      %v907 = vpop.f32.mrb[0].mxu0
      %v908 = vpop.f32.mrb[0].mxu0
      %v909 = vadd.f32 %v696, %v908
      %v910 = vpop.f32.mrb[0].mxu0
      %911 = vmatprep.mubr.bf16.mxu0 0
      %912 = vmatmul.mubr.bf16.gmra.mrb[0].mxu0 %v757
      %v913 = vpop.f32.mrb[0].mxu0
      %v914 = vadd.f32 %v696, %v913
      %v915 = vpop.f32.mrb[0].mxu0
      %v916 = vpop.f32.mrb[0].mxu0
      %v917 = vadd.f32 %v696, %v916
      %v918 = vpop.f32.mrb[0].mxu0
      %919 = vdwg.mxu0
      %v920 = vmax.f32 %v794, 0.0
      %v921 = vmax.f32 %v797, 0.0
      %v922 = vmax.f32 %v802, 0.0
      %v923 = vmax.f32 %v805, 0.0
      %v924 = vmax.f32 %v810, 0.0
      %v925 = vmax.f32 %v813, 0.0
      %v926 = vmax.f32 %v818, 0.0
      %v927 = vmax.f32 %v821, 0.0
      %v928 = vmax.f32 %v826, 0.0
      %v929 = vmax.f32 %v829, 0.0
      %v930 = vmax.f32 %v834, 0.0
      %v931 = vmax.f32 %v837, 0.0
      %v932 = vmax.f32 %v842, 0.0
      %v933 = vmax.f32 %v845, 0.0
      %v934 = vmax.f32 %v850, 0.0
      %v935 = vmax.f32 %v853, 0.0
      %v936 = vmax.f32 %v858, 0.0
      %v937 = vmax.f32 %v861, 0.0
      %v938 = vmax.f32 %v866, 0.0
      %v939 = vmax.f32 %v869, 0.0
      %v940 = vmax.f32 %v874, 0.0
      %v941 = vmax.f32 %v877, 0.0
      %v942 = vmax.f32 %v882, 0.0
      %v943 = vmax.f32 %v885, 0.0
      %v944 = vmax.f32 %v890, 0.0
      %v945 = vmax.f32 %v893, 0.0
      %v946 = vmax.f32 %v898, 0.0
      %v947 = vmax.f32 %v901, 0.0
      %v948 = vmax.f32 %v906, 0.0
      %v949 = vmax.f32 %v909, 0.0
      %v950 = vmax.f32 %v914, 0.0
      %v951 = vmax.f32 %v917, 0.0
      %v952 = vpack.c.bf16 %v921, %v920
      %v953 = vpack.c.bf16 %v923, %v922
      %v954 = vpack.c.bf16 %v925, %v924
      %v955 = vpack.c.bf16 %v927, %v926
      %v956 = vpack.c.bf16 %v929, %v928
      %v957 = vpack.c.bf16 %v931, %v930
      %v958 = vpack.c.bf16 %v933, %v932
      %v959 = vpack.c.bf16 %v935, %v934
      %v960 = vpack.c.bf16 %v937, %v936
      %v961 = vpack.c.bf16 %v939, %v938
      %v962 = vpack.c.bf16 %v941, %v940
      %v963 = vpack.c.bf16 %v943, %v942
      %v964 = vpack.c.bf16 %v945, %v944
      %v965 = vpack.c.bf16 %v947, %v946
      %v966 = vpack.c.bf16 %v949, %v948
      %v967 = vpack.c.bf16 %v951, %v950
      %v968 = vld [vmem:[%s5] sm:$0xf]
      %v969 = vld [vmem:[%s5 + $0x4] sm:$0xf]
      %v970 = vld [vmem:[%s5 + $0x8] sm:$0xf]
      %v971 = vld [vmem:[%s5 + $0xc] sm:$0xf]
      %v972 = vld [vmem:[%s6] sm:$0x1]
      %v974 = vlaneseq
      %v975 = vshrl.u32 %v974, 7
      %v976 = vsub.s32 0, %v975
      %v977 = vrot.slane %v972, %v976
      %v983 = vunpack.c.l.b16 %v968
      %v984 = vunpack.c.l.b16 %v969
      %v985 = vunpack.c.l.b16 %v970
      %v986 = vunpack.c.l.b16 %v971
      %v987 = vpack.c.b16 %v984, %v983
      %v988 = vpack.c.b16 %v986, %v985
      %v992 = vsel %vm710, %v952, 0
      %v995 = vsel %vm710, %v953, 0
      %v998 = vsel %vm710, %v954, 0
      %v1001 = vsel %vm710, %v955, 0
      %v1004 = vsel %vm710, %v956, 0
      %v1007 = vsel %vm710, %v957, 0
      %v1010 = vsel %vm710, %v958, 0
      %v1013 = vsel %vm710, %v959, 0
      %v1016 = vsel %vm710, %v960, 0
      %v1019 = vsel %vm710, %v961, 0
      %v1022 = vsel %vm710, %v962, 0
      %v1025 = vsel %vm710, %v963, 0
      %v1028 = vsel %vm710, %v964, 0
      %v1031 = vsel %vm710, %v965, 0
      %v1034 = vsel %vm710, %v966, 0
      %v1037 = vsel %vm710, %v967, 0
      %1039 = vmatprep.subr.bf16.mxu0 0
      %1040 = vmatpush1.bf16.msra.mxu0 %v987
      %1041 = vmatprep.subr.bf16.mxu0 0
      %1042 = vmatpush1.bf16.msra.mxu0 %v988
      %1043 = vmatprep.subr.bf16.mxu0 0
      %1044 = vmatpush1.bf16.msra.mxu0 0
      %1045 = vmatprep.subr.bf16.mxu0 0
      %1046 = vmatpush1.bf16.msra.mxu0 0
      %1047 = vmatprep.subr.bf16.mxu0 0
      %1048 = vmatpush1.bf16.msra.mxu0 0
      %1049 = vmatprep.subr.bf16.mxu0 0
      %1050 = vmatpush1.bf16.msra.mxu0 0
      %1051 = vmatprep.subr.bf16.mxu0 0
      %1052 = vmatpush1.bf16.msra.mxu0 0
      %1053 = vmatprep.subr.bf16.mxu0 0
      %1054 = vmatpush1.bf16.msra.mxu0 0
      %1055 = vmatprep.subr.bf16.mxu0 0
      %1056 = vmatpush1.bf16.msra.mxu0 0
      %1057 = vmatprep.subr.bf16.mxu0 0
      %1058 = vmatpush1.bf16.msra.mxu0 0
      %1059 = vmatprep.subr.bf16.mxu0 0
      %1060 = vmatpush1.bf16.msra.mxu0 0
      %1061 = vmatprep.subr.bf16.mxu0 0
      %1062 = vmatpush1.bf16.msra.mxu0 0
      %1063 = vmatprep.subr.bf16.mxu0 0
      %1064 = vmatpush1.bf16.msra.mxu0 0
      %1065 = vmatprep.subr.bf16.mxu0 0
      %1066 = vmatpush1.bf16.msra.mxu0 0
      %1067 = vmatprep.subr.bf16.mxu0 0
      %1068 = vmatpush1.bf16.msra.mxu0 0
      %1069 = vmatprep.subr.bf16.mxu0 0
      %1070 = vmatpush1.bf16.msra.mxu0 0
      %1071 = vmatprep.mubr.bf16.mxu0 0
      %1072 = vmatmul.mubr.bf16.gmra.mrb[0].mxu0 %v992
      %v1073 = vpop.f32.mrb[0].mxu0
      %v1074 = vadd.f32 %v977, %v1073
      %v1075 = vpop.f32.mrb[0].mxu0
      %v1076 = vpop.f32.mrb[0].mxu0
      %v1077 = vadd.f32 %v977, %v1076
      %v1078 = vpop.f32.mrb[0].mxu0
      %1079 = vmatprep.mubr.bf16.mxu0 0
      %1080 = vmatmul.mubr.bf16.gmra.mrb[0].mxu0 %v995
      %v1081 = vpop.f32.mrb[0].mxu0
      %v1082 = vadd.f32 %v977, %v1081
      %v1083 = vpop.f32.mrb[0].mxu0
      %v1084 = vpop.f32.mrb[0].mxu0
      %v1085 = vadd.f32 %v977, %v1084
      %v1086 = vpop.f32.mrb[0].mxu0
      %1087 = vmatprep.mubr.bf16.mxu0 0
      %1088 = vmatmul.mubr.bf16.gmra.mrb[0].mxu0 %v998
      %v1089 = vpop.f32.mrb[0].mxu0
      %v1090 = vadd.f32 %v977, %v1089
      %v1091 = vpop.f32.mrb[0].mxu0
      %v1092 = vpop.f32.mrb[0].mxu0
      %v1093 = vadd.f32 %v977, %v1092
      %v1094 = vpop.f32.mrb[0].mxu0
      %1095 = vmatprep.mubr.bf16.mxu0 0
      %1096 = vmatmul.mubr.bf16.gmra.mrb[0].mxu0 %v1001
      %v1097 = vpop.f32.mrb[0].mxu0
      %v1098 = vadd.f32 %v977, %v1097
      %v1099 = vpop.f32.mrb[0].mxu0
      %v1100 = vpop.f32.mrb[0].mxu0
      %v1101 = vadd.f32 %v977, %v1100
      %v1102 = vpop.f32.mrb[0].mxu0
      %1103 = vmatprep.mubr.bf16.mxu0 0
      %1104 = vmatmul.mubr.bf16.gmra.mrb[0].mxu0 %v1004
      %v1105 = vpop.f32.mrb[0].mxu0
      %v1106 = vadd.f32 %v977, %v1105
      %v1107 = vpop.f32.mrb[0].mxu0
      %v1108 = vpop.f32.mrb[0].mxu0
      %v1109 = vadd.f32 %v977, %v1108
      %v1110 = vpop.f32.mrb[0].mxu0
      %1111 = vmatprep.mubr.bf16.mxu0 0
      %1112 = vmatmul.mubr.bf16.gmra.mrb[0].mxu0 %v1007
      %v1113 = vpop.f32.mrb[0].mxu0
      %v1114 = vadd.f32 %v977, %v1113
      %v1115 = vpop.f32.mrb[0].mxu0
      %v1116 = vpop.f32.mrb[0].mxu0
      %v1117 = vadd.f32 %v977, %v1116
      %v1118 = vpop.f32.mrb[0].mxu0
      %1119 = vmatprep.mubr.bf16.mxu0 0
      %1120 = vmatmul.mubr.bf16.gmra.mrb[0].mxu0 %v1010
      %v1121 = vpop.f32.mrb[0].mxu0
      %v1122 = vadd.f32 %v977, %v1121
      %v1123 = vpop.f32.mrb[0].mxu0
      %v1124 = vpop.f32.mrb[0].mxu0
      %v1125 = vadd.f32 %v977, %v1124
      %v1126 = vpop.f32.mrb[0].mxu0
      %1127 = vmatprep.mubr.bf16.mxu0 0
      %1128 = vmatmul.mubr.bf16.gmra.mrb[0].mxu0 %v1013
      %v1129 = vpop.f32.mrb[0].mxu0
      %v1130 = vadd.f32 %v977, %v1129
      %v1131 = vpop.f32.mrb[0].mxu0
      %v1132 = vpop.f32.mrb[0].mxu0
      %v1133 = vadd.f32 %v977, %v1132
      %v1134 = vpop.f32.mrb[0].mxu0
      %1135 = vmatprep.mubr.bf16.mxu0 0
      %1136 = vmatmul.mubr.bf16.gmra.mrb[0].mxu0 %v1016
      %v1137 = vpop.f32.mrb[0].mxu0
      %v1138 = vadd.f32 %v977, %v1137
      %v1139 = vpop.f32.mrb[0].mxu0
      %v1140 = vpop.f32.mrb[0].mxu0
      %v1141 = vadd.f32 %v977, %v1140
      %v1142 = vpop.f32.mrb[0].mxu0
      %1143 = vmatprep.mubr.bf16.mxu0 0
      %1144 = vmatmul.mubr.bf16.gmra.mrb[0].mxu0 %v1019
      %v1145 = vpop.f32.mrb[0].mxu0
      %v1146 = vadd.f32 %v977, %v1145
      %v1147 = vpop.f32.mrb[0].mxu0
      %v1148 = vpop.f32.mrb[0].mxu0
      %v1149 = vadd.f32 %v977, %v1148
      %v1150 = vpop.f32.mrb[0].mxu0
      %1151 = vmatprep.mubr.bf16.mxu0 0
      %1152 = vmatmul.mubr.bf16.gmra.mrb[0].mxu0 %v1022
      %v1153 = vpop.f32.mrb[0].mxu0
      %v1154 = vadd.f32 %v977, %v1153
      %v1155 = vpop.f32.mrb[0].mxu0
      %v1156 = vpop.f32.mrb[0].mxu0
      %v1157 = vadd.f32 %v977, %v1156
      %v1158 = vpop.f32.mrb[0].mxu0
      %1159 = vmatprep.mubr.bf16.mxu0 0
      %1160 = vmatmul.mubr.bf16.gmra.mrb[0].mxu0 %v1025
      %v1161 = vpop.f32.mrb[0].mxu0
      %v1162 = vadd.f32 %v977, %v1161
      %v1163 = vpop.f32.mrb[0].mxu0
      %v1164 = vpop.f32.mrb[0].mxu0
      %v1165 = vadd.f32 %v977, %v1164
      %v1166 = vpop.f32.mrb[0].mxu0
      %1167 = vmatprep.mubr.bf16.mxu0 0
      %1168 = vmatmul.mubr.bf16.gmra.mrb[0].mxu0 %v1028
      %v1169 = vpop.f32.mrb[0].mxu0
      %v1170 = vadd.f32 %v977, %v1169
      %v1171 = vpop.f32.mrb[0].mxu0
      %v1172 = vpop.f32.mrb[0].mxu0
      %v1173 = vadd.f32 %v977, %v1172
      %v1174 = vpop.f32.mrb[0].mxu0
      %1175 = vmatprep.mubr.bf16.mxu0 0
      %1176 = vmatmul.mubr.bf16.gmra.mrb[0].mxu0 %v1031
      %v1177 = vpop.f32.mrb[0].mxu0
      %v1178 = vadd.f32 %v977, %v1177
      %v1179 = vpop.f32.mrb[0].mxu0
      %v1180 = vpop.f32.mrb[0].mxu0
      %v1181 = vadd.f32 %v977, %v1180
      %v1182 = vpop.f32.mrb[0].mxu0
      %1183 = vmatprep.mubr.bf16.mxu0 0
      %1184 = vmatmul.mubr.bf16.gmra.mrb[0].mxu0 %v1034
      %v1185 = vpop.f32.mrb[0].mxu0
      %v1186 = vadd.f32 %v977, %v1185
      %v1187 = vpop.f32.mrb[0].mxu0
      %v1188 = vpop.f32.mrb[0].mxu0
      %v1189 = vadd.f32 %v977, %v1188
      %v1190 = vpop.f32.mrb[0].mxu0
      %1191 = vmatprep.mubr.bf16.mxu0 0
      %1192 = vmatmul.mubr.bf16.gmra.mrb[0].mxu0 %v1037
      %v1193 = vpop.f32.mrb[0].mxu0
      %v1194 = vadd.f32 %v977, %v1193
      %v1195 = vpop.f32.mrb[0].mxu0
      %v1196 = vpop.f32.mrb[0].mxu0
      %v1197 = vadd.f32 %v977, %v1196
      %v1198 = vpop.f32.mrb[0].mxu0
      %1199 = vdwg.mxu0
      %v1200 = vmax.f32 %v1074, 0.0
      %v1201 = vmax.f32 %v1077, 0.0
      %v1202 = vmax.f32 %v1082, 0.0
      %v1203 = vmax.f32 %v1085, 0.0
      %v1204 = vmax.f32 %v1090, 0.0
      %v1205 = vmax.f32 %v1093, 0.0
      %v1206 = vmax.f32 %v1098, 0.0
      %v1207 = vmax.f32 %v1101, 0.0
      %v1208 = vmax.f32 %v1106, 0.0
      %v1209 = vmax.f32 %v1109, 0.0
      %v1210 = vmax.f32 %v1114, 0.0
      %v1211 = vmax.f32 %v1117, 0.0
      %v1212 = vmax.f32 %v1122, 0.0
      %v1213 = vmax.f32 %v1125, 0.0
      %v1214 = vmax.f32 %v1130, 0.0
      %v1215 = vmax.f32 %v1133, 0.0
      %v1216 = vmax.f32 %v1138, 0.0
      %v1217 = vmax.f32 %v1141, 0.0
      %v1218 = vmax.f32 %v1146, 0.0
      %v1219 = vmax.f32 %v1149, 0.0
      %v1220 = vmax.f32 %v1154, 0.0
      %v1221 = vmax.f32 %v1157, 0.0
      %v1222 = vmax.f32 %v1162, 0.0
      %v1223 = vmax.f32 %v1165, 0.0
      %v1224 = vmax.f32 %v1170, 0.0
      %v1225 = vmax.f32 %v1173, 0.0
      %v1226 = vmax.f32 %v1178, 0.0
      %v1227 = vmax.f32 %v1181, 0.0
      %v1228 = vmax.f32 %v1186, 0.0
      %v1229 = vmax.f32 %v1189, 0.0
      %v1230 = vmax.f32 %v1194, 0.0
      %v1231 = vmax.f32 %v1197, 0.0
      %v1232 = vrot.slane %v1200, 4
      %v1233 = vmax.f32 %v1200, %v1232
      %v1234 = vrot.slane %v1233, 2
      %v1235 = vmax.f32 %v1233, %v1234
      %v1236 = vrot.slane %v1235, 1
      %v1237 = vmax.f32 %v1235, %v1236
      %v1238 = vrot.slane %v1201, 4
      %v1239 = vmax.f32 %v1201, %v1238
      %v1240 = vrot.slane %v1239, 2
      %v1241 = vmax.f32 %v1239, %v1240
      %v1242 = vrot.slane %v1241, 1
      %v1243 = vmax.f32 %v1241, %v1242
      %v1244 = vrot.slane %v1202, 4
      %v1245 = vmax.f32 %v1202, %v1244
      %v1246 = vrot.slane %v1245, 2
      %v1247 = vmax.f32 %v1245, %v1246
      %v1248 = vrot.slane %v1247, 1
      %v1249 = vmax.f32 %v1247, %v1248
      %v1250 = vrot.slane %v1203, 4
      %v1251 = vmax.f32 %v1203, %v1250
      %v1252 = vrot.slane %v1251, 2
      %v1253 = vmax.f32 %v1251, %v1252
      %v1254 = vrot.slane %v1253, 1
      %v1255 = vmax.f32 %v1253, %v1254
      %v1256 = vrot.slane %v1204, 4
      %v1257 = vmax.f32 %v1204, %v1256
      %v1258 = vrot.slane %v1257, 2
      %v1259 = vmax.f32 %v1257, %v1258
      %v1260 = vrot.slane %v1259, 1
      %v1261 = vmax.f32 %v1259, %v1260
      %v1262 = vrot.slane %v1205, 4
      %v1263 = vmax.f32 %v1205, %v1262
      %v1264 = vrot.slane %v1263, 2
      %v1265 = vmax.f32 %v1263, %v1264
      %v1266 = vrot.slane %v1265, 1
      %v1267 = vmax.f32 %v1265, %v1266
      %v1268 = vrot.slane %v1206, 4
      %v1269 = vmax.f32 %v1206, %v1268
      %v1270 = vrot.slane %v1269, 2
      %v1271 = vmax.f32 %v1269, %v1270
      %v1272 = vrot.slane %v1271, 1
      %v1273 = vmax.f32 %v1271, %v1272
      %v1274 = vrot.slane %v1207, 4
      %v1275 = vmax.f32 %v1207, %v1274
      %v1276 = vrot.slane %v1275, 2
      %v1277 = vmax.f32 %v1275, %v1276
      %v1278 = vrot.slane %v1277, 1
      %v1279 = vmax.f32 %v1277, %v1278
      %v1280 = vrot.slane %v1208, 4
      %v1281 = vmax.f32 %v1208, %v1280
      %v1282 = vrot.slane %v1281, 2
      %v1283 = vmax.f32 %v1281, %v1282
      %v1284 = vrot.slane %v1283, 1
      %v1285 = vmax.f32 %v1283, %v1284
      %v1286 = vrot.slane %v1209, 4
      %v1287 = vmax.f32 %v1209, %v1286
      %v1288 = vrot.slane %v1287, 2
      %v1289 = vmax.f32 %v1287, %v1288
      %v1290 = vrot.slane %v1289, 1
      %v1291 = vmax.f32 %v1289, %v1290
      %v1292 = vrot.slane %v1210, 4
      %v1293 = vmax.f32 %v1210, %v1292
      %v1294 = vrot.slane %v1293, 2
      %v1295 = vmax.f32 %v1293, %v1294
      %v1296 = vrot.slane %v1295, 1
      %v1297 = vmax.f32 %v1295, %v1296
      %v1298 = vrot.slane %v1211, 4
      %v1299 = vmax.f32 %v1211, %v1298
      %v1300 = vrot.slane %v1299, 2
      %v1301 = vmax.f32 %v1299, %v1300
      %v1302 = vrot.slane %v1301, 1
      %v1303 = vmax.f32 %v1301, %v1302
      %v1304 = vrot.slane %v1212, 4
      %v1305 = vmax.f32 %v1212, %v1304
      %v1306 = vrot.slane %v1305, 2
      %v1307 = vmax.f32 %v1305, %v1306
      %v1308 = vrot.slane %v1307, 1
      %v1309 = vmax.f32 %v1307, %v1308
      %v1310 = vrot.slane %v1213, 4
      %v1311 = vmax.f32 %v1213, %v1310
      %v1312 = vrot.slane %v1311, 2
      %v1313 = vmax.f32 %v1311, %v1312
      %v1314 = vrot.slane %v1313, 1
      %v1315 = vmax.f32 %v1313, %v1314
      %v1316 = vrot.slane %v1214, 4
      %v1317 = vmax.f32 %v1214, %v1316
      %v1318 = vrot.slane %v1317, 2
      %v1319 = vmax.f32 %v1317, %v1318
      %v1320 = vrot.slane %v1319, 1
      %v1321 = vmax.f32 %v1319, %v1320
      %v1322 = vrot.slane %v1215, 4
      %v1323 = vmax.f32 %v1215, %v1322
      %v1324 = vrot.slane %v1323, 2
      %v1325 = vmax.f32 %v1323, %v1324
      %v1326 = vrot.slane %v1325, 1
      %v1327 = vmax.f32 %v1325, %v1326
      %v1328 = vrot.slane %v1216, 4
      %v1329 = vmax.f32 %v1216, %v1328
      %v1330 = vrot.slane %v1329, 2
      %v1331 = vmax.f32 %v1329, %v1330
      %v1332 = vrot.slane %v1331, 1
      %v1333 = vmax.f32 %v1331, %v1332
      %v1334 = vrot.slane %v1217, 4
      %v1335 = vmax.f32 %v1217, %v1334
      %v1336 = vrot.slane %v1335, 2
      %v1337 = vmax.f32 %v1335, %v1336
      %v1338 = vrot.slane %v1337, 1
      %v1339 = vmax.f32 %v1337, %v1338
      %v1340 = vrot.slane %v1218, 4
      %v1341 = vmax.f32 %v1218, %v1340
      %v1342 = vrot.slane %v1341, 2
      %v1343 = vmax.f32 %v1341, %v1342
      %v1344 = vrot.slane %v1343, 1
      %v1345 = vmax.f32 %v1343, %v1344
      %v1346 = vrot.slane %v1219, 4
      %v1347 = vmax.f32 %v1219, %v1346
      %v1348 = vrot.slane %v1347, 2
      %v1349 = vmax.f32 %v1347, %v1348
      %v1350 = vrot.slane %v1349, 1
      %v1351 = vmax.f32 %v1349, %v1350
      %v1352 = vrot.slane %v1220, 4
      %v1353 = vmax.f32 %v1220, %v1352
      %v1354 = vrot.slane %v1353, 2
      %v1355 = vmax.f32 %v1353, %v1354
      %v1356 = vrot.slane %v1355, 1
      %v1357 = vmax.f32 %v1355, %v1356
      %v1358 = vrot.slane %v1221, 4
      %v1359 = vmax.f32 %v1221, %v1358
      %v1360 = vrot.slane %v1359, 2
      %v1361 = vmax.f32 %v1359, %v1360
      %v1362 = vrot.slane %v1361, 1
      %v1363 = vmax.f32 %v1361, %v1362
      %v1364 = vrot.slane %v1222, 4
      %v1365 = vmax.f32 %v1222, %v1364
      %v1366 = vrot.slane %v1365, 2
      %v1367 = vmax.f32 %v1365, %v1366
      %v1368 = vrot.slane %v1367, 1
      %v1369 = vmax.f32 %v1367, %v1368
      %v1370 = vrot.slane %v1223, 4
      %v1371 = vmax.f32 %v1223, %v1370
      %v1372 = vrot.slane %v1371, 2
      %v1373 = vmax.f32 %v1371, %v1372
      %v1374 = vrot.slane %v1373, 1
      %v1375 = vmax.f32 %v1373, %v1374
      %v1376 = vrot.slane %v1224, 4
      %v1377 = vmax.f32 %v1224, %v1376
      %v1378 = vrot.slane %v1377, 2
      %v1379 = vmax.f32 %v1377, %v1378
      %v1380 = vrot.slane %v1379, 1
      %v1381 = vmax.f32 %v1379, %v1380
      %v1382 = vrot.slane %v1225, 4
      %v1383 = vmax.f32 %v1225, %v1382
      %v1384 = vrot.slane %v1383, 2
      %v1385 = vmax.f32 %v1383, %v1384
      %v1386 = vrot.slane %v1385, 1
      %v1387 = vmax.f32 %v1385, %v1386
      %v1388 = vrot.slane %v1226, 4
      %v1389 = vmax.f32 %v1226, %v1388
      %v1390 = vrot.slane %v1389, 2
      %v1391 = vmax.f32 %v1389, %v1390
      %v1392 = vrot.slane %v1391, 1
      %v1393 = vmax.f32 %v1391, %v1392
      %v1394 = vrot.slane %v1227, 4
      %v1395 = vmax.f32 %v1227, %v1394
      %v1396 = vrot.slane %v1395, 2
      %v1397 = vmax.f32 %v1395, %v1396
      %v1398 = vrot.slane %v1397, 1
      %v1399 = vmax.f32 %v1397, %v1398
      %v1400 = vrot.slane %v1228, 4
      %v1401 = vmax.f32 %v1228, %v1400
      %v1402 = vrot.slane %v1401, 2
      %v1403 = vmax.f32 %v1401, %v1402
      %v1404 = vrot.slane %v1403, 1
      %v1405 = vmax.f32 %v1403, %v1404
      %v1406 = vrot.slane %v1229, 4
      %v1407 = vmax.f32 %v1229, %v1406
      %v1408 = vrot.slane %v1407, 2
      %v1409 = vmax.f32 %v1407, %v1408
      %v1410 = vrot.slane %v1409, 1
      %v1411 = vmax.f32 %v1409, %v1410
      %v1412 = vrot.slane %v1230, 4
      %v1413 = vmax.f32 %v1230, %v1412
      %v1414 = vrot.slane %v1413, 2
      %v1415 = vmax.f32 %v1413, %v1414
      %v1416 = vrot.slane %v1415, 1
      %v1417 = vmax.f32 %v1415, %v1416
      %v1418 = vrot.slane %v1231, 4
      %v1419 = vmax.f32 %v1231, %v1418
      %v1420 = vrot.slane %v1419, 2
      %v1421 = vmax.f32 %v1419, %v1420
      %v1422 = vrot.slane %v1421, 1
      %v1423 = vmax.f32 %v1421, %v1422
      %vm1456 = vcmask 1041409
      %v1457 = vsel %vm1456, %v1243, %v1237
      %vm1458 = vcmask 1042434
      %v1459 = vsel %vm1458, %v1249, %v1457
      %vm1460 = vcmask 1043459
      %v1461 = vsel %vm1460, %v1255, %v1459
      %vm1462 = vcmask 1044484
      %v1463 = vsel %vm1462, %v1261, %v1461
      %vm1464 = vcmask 1045509
      %v1465 = vsel %vm1464, %v1267, %v1463
      %vm1466 = vcmask 1046534
      %v1467 = vsel %vm1466, %v1273, %v1465
      %vm1468 = vcmask 1047559
      %v1469 = vsel %vm1468, %v1279, %v1467
      %v1470 = vsel %vm1456, %v1291, %v1285
      %v1471 = vsel %vm1458, %v1297, %v1470
      %v1472 = vsel %vm1460, %v1303, %v1471
      %v1473 = vsel %vm1462, %v1309, %v1472
      %v1474 = vsel %vm1464, %v1315, %v1473
      %v1475 = vsel %vm1466, %v1321, %v1474
      %v1476 = vsel %vm1468, %v1327, %v1475
      %v1477 = vsel %vm1456, %v1339, %v1333
      %v1478 = vsel %vm1458, %v1345, %v1477
      %v1479 = vsel %vm1460, %v1351, %v1478
      %v1480 = vsel %vm1462, %v1357, %v1479
      %v1481 = vsel %vm1464, %v1363, %v1480
      %v1482 = vsel %vm1466, %v1369, %v1481
      %v1483 = vsel %vm1468, %v1375, %v1482
      %v1484 = vsel %vm1456, %v1387, %v1381
      %v1485 = vsel %vm1458, %v1393, %v1484
      %v1486 = vsel %vm1460, %v1399, %v1485
      %v1487 = vsel %vm1462, %v1405, %v1486
      %v1488 = vsel %vm1464, %v1411, %v1487
      %v1489 = vsel %vm1466, %v1417, %v1488
      %v1490 = vsel %vm1468, %v1423, %v1489
      %1495 = vst [vmem:[%s280] sm:$0xff] %v1469
      %1496 = vst [vmem:[%s280 + $0x8] sm:$0xff] %v1476
      %1497 = vst [vmem:[%s280 + $0x10] sm:$0xff] %v1483
      %1498 = vst [vmem:[%s280 + $0x18] sm:$0xff] %v1490
      %s1499 = smul.u32 4, %s18
      %p1500 = scmp.lt.s32.totalorder %s1499, 7
      %s1501 = scalar_select %p1500, %s1499, 7
      %s1502 = smul.addr %s1501, 8
      %s1503 = scalar_lea.vmem %s7, %s1502
      // Predicated region
      $region49: #{pointnet2_forward.5} parent=47 // pred_check
        %p1504 = pneg %p188
      $region50: #{pointnet2_forward.5} parent=47 // pred_check_branch
        %1506 = sbr.rel (%p1504) target = $region52
      $region51: #{pointnet2_forward.5} parent=47 // pred_region
        %s1507 = smul.u32 4, %s18
      $region52: #{pointnet2_forward.5} parent=47 // pred_fallthru
        _
    $region48: #{pointnet2_forward.5} parent=5 // pred_fallthru
      _
    %p1508 = scmp.le.s32.totalorder 2, %s13
    // Predicated region
    $region53: #{pointnet2_forward.5} parent=5 // pred_check
      %p1509 = pneg %p1508
    $region54: #{pointnet2_forward.5} parent=5 // pred_check_branch
      %1511 = sbr.rel (%p1509) target = $region56
    $region55: #{pointnet2_forward.5} parent=5 // pred_region
      %s1512 = ssub.s32 %s13, 2
      // Predicated region
      $region57: #{pointnet2_forward.5} parent=55 // pred_check
        %p1513 = pneg %p194
      $region58: #{pointnet2_forward.5} parent=55 // pred_check_branch
        %1515 = sbr.rel (%p1513) target = $region60
      $region59: #{pointnet2_forward.5} parent=55 // pred_region
        %s1516 = smul.u32 4, %s19
        %p1517 = scmp.lt.s32.totalorder %s1516, 7
        %s1518 = scalar_select %p1517, %s1516, 7
        %s1519 = smul.addr %s1518, 8
        %s1520 = scalar_lea.vmem %s7, %s1519
      $region60: #{pointnet2_forward.5} parent=55 // pred_fallthru
        _
    $region56: #{pointnet2_forward.5} parent=5 // pred_fallthru
      _
  $region6: #{pointnet2_forward.5} parent=0 // loop_footer
    %s17 = sadd.s32 1, %s13
  $region7: #{pointnet2_forward.5} parent=0 // loop_footer_branch
    %12 = sbr.rel target = $region3
  $region8: #{pointnet2_forward.5} parent=0 // loop_exit
    _

// kernel: pointnet2_forward.6
$region0: #{pointnet2_forward.6}
  #allocation0 [shape = 'u32[]', space=smem, size = 0x4, offset = 0x4, fixed_abs, tag = 'smem constant byte address 0x4 - core index']
  #allocation1 [shape = 'u32[144,128]{1,0:T(1,128)}', space=vmem, size = 0x12000, scoped, tag = 'internal scratch']
  %s0 = inlined_call_operand.vmem [shape: bf16[256,67], index: 0, kind: input, shape index: {}]
  %s1 = inlined_call_operand.vmem [shape: bf16[67,64], index: 1, kind: input, shape index: {}]
  %s2 = inlined_call_operand.vmem [shape: f32[1,64], index: 2, kind: input, shape index: {}]
  %s3 = inlined_call_operand.vmem [shape: bf16[64,64], index: 3, kind: input, shape index: {}]
  %s4 = inlined_call_operand.vmem [shape: f32[1,64], index: 4, kind: input, shape index: {}]
  %s5 = inlined_call_operand.vmem [shape: bf16[64,128], index: 5, kind: input, shape index: {}]
  %s6 = inlined_call_operand.vmem [shape: f32[1,128], index: 6, kind: input, shape index: {}]
  %s7 = inlined_call_operand.vmem [shape: f32[32,128], index: 7, kind: output, shape index: {}]
  %s8 = sld [smem:[#allocation0]]
  $region61: #{pointnet2_forward.6} parent=0
    _
  %s10 = ssub.s32 1, %s8
  %s11 = scalar_select 0, %s10, %s8
  loop: start=0, step=1, limit=4
  $region2: #{pointnet2_forward.6} parent=0 // loop_pre_header
    _
  $region3: #{pointnet2_forward.6} parent=0 // loop_header
    %s13 = sphi 0, %s17
    %p14 = scmp.ge.s32.totalorder %s13, 4
    %s23 = sphi 0, %s25
    %s26 = sphi 0, %s23
    %s27 = sphi 0, %s26
    %s43 = sphi 0, %s27
    %s47 = sphi 0, %s47
    %s49 = sphi 0, %s47
    %s50 = sphi 0, %s49
    %s64 = sphi 0, %s50
    %s68 = sphi 0, %s68
    %s70 = sphi 0, %s68
    %s71 = sphi 0, %s70
    %s85 = sphi 0, %s71
    %s89 = sphi 0, %s89
    %s91 = sphi 0, %s89
    %s92 = sphi 0, %s91
    %s106 = sphi 0, %s92
    %s110 = sphi 0, %s110
    %s112 = sphi 0, %s110
    %s113 = sphi 0, %s112
    %s127 = sphi 0, %s113
    %s131 = sphi 0, %s131
    %s133 = sphi 0, %s131
    %s134 = sphi 0, %s133
    %s148 = sphi 0, %s134
    %s152 = sphi 0, %s152
    %s154 = sphi 0, %s152
    %s155 = sphi 0, %s154
    %s169 = sphi 0, %s155
    %s175 = sphi 0, %s177
    %s178 = sphi 0, %s175
    %s179 = sphi 0, %s178
    %s195 = sphi 0, %s179
  $region4: #{pointnet2_forward.6} parent=0 // loop_header_branch
    %16 = sbr.rel (%p14) target = $region8
  $region5: #{pointnet2_forward.6} parent=0 // loop_body
    %s18 = ssub.s32 %s13, 1
    %s19 = ssub.s32 %s13, 2
    %s20 = sadd.s32 %s13, 1
    %s21 = ssub.s32 %s13, %s20
    %p22 = scmp.eq.s32.totalorder %s21, 0
    %s24 = sadd.s32 %s23, 1
    %s25 = scalar_select %p22, %s23, %s24
    %p28 = pneg %p22
    %p29 = scmp.eq.s32.totalorder %s13, 1
    %p30 = por %p28, %p29
    %p31 = scmp.ne.s32.totalorder %s23, %s26
    %p32 = scmp.eq.s32.totalorder %s13, 0
    %p33 = por %p31, %p32
    %p34 = scmp.ne.s32.totalorder %s23, %s26
    %p35 = scmp.eq.s32.totalorder %s18, 1
    %p36 = por %p34, %p35
    %p37 = scmp.ne.s32.totalorder %s26, %s27
    %p38 = scmp.eq.s32.totalorder %s18, 0
    %p39 = por %p37, %p38
    %p40 = scmp.ne.s32.totalorder %s26, %s27
    %p41 = scmp.eq.s32.totalorder %s19, 1
    %p42 = por %p40, %p41
    %p44 = scmp.ne.s32.totalorder %s27, %s43
    %p45 = scmp.eq.s32.totalorder %s19, 0
    %p46 = por %p44, %p45
    %s48 = sadd.s32 %s47, 1
    %p51 = scmp.eq.s32.totalorder %s13, 1
    %p52 = scmp.ne.s32.totalorder %s47, %s49
    %p53 = scmp.eq.s32.totalorder %s13, 0
    %p54 = por %p52, %p53
    %p55 = scmp.ne.s32.totalorder %s47, %s49
    %p56 = scmp.eq.s32.totalorder %s18, 1
    %p57 = por %p55, %p56
    %p58 = scmp.ne.s32.totalorder %s49, %s50
    %p59 = scmp.eq.s32.totalorder %s18, 0
    %p60 = por %p58, %p59
    %p61 = scmp.ne.s32.totalorder %s49, %s50
    %p62 = scmp.eq.s32.totalorder %s19, 1
    %p63 = por %p61, %p62
    %p65 = scmp.ne.s32.totalorder %s50, %s64
    %p66 = scmp.eq.s32.totalorder %s19, 0
    %p67 = por %p65, %p66
    %s69 = sadd.s32 %s68, 1
    %p72 = scmp.eq.s32.totalorder %s13, 1
    %p73 = scmp.ne.s32.totalorder %s68, %s70
    %p74 = scmp.eq.s32.totalorder %s13, 0
    %p75 = por %p73, %p74
    %p76 = scmp.ne.s32.totalorder %s68, %s70
    %p77 = scmp.eq.s32.totalorder %s18, 1
    %p78 = por %p76, %p77
    %p79 = scmp.ne.s32.totalorder %s70, %s71
    %p80 = scmp.eq.s32.totalorder %s18, 0
    %p81 = por %p79, %p80
    %p82 = scmp.ne.s32.totalorder %s70, %s71
    %p83 = scmp.eq.s32.totalorder %s19, 1
    %p84 = por %p82, %p83
    %p86 = scmp.ne.s32.totalorder %s71, %s85
    %p87 = scmp.eq.s32.totalorder %s19, 0
    %p88 = por %p86, %p87
    %s90 = sadd.s32 %s89, 1
    %p93 = scmp.eq.s32.totalorder %s13, 1
    %p94 = scmp.ne.s32.totalorder %s89, %s91
    %p95 = scmp.eq.s32.totalorder %s13, 0
    %p96 = por %p94, %p95
    %p97 = scmp.ne.s32.totalorder %s89, %s91
    %p98 = scmp.eq.s32.totalorder %s18, 1
    %p99 = por %p97, %p98
    %p100 = scmp.ne.s32.totalorder %s91, %s92
    %p101 = scmp.eq.s32.totalorder %s18, 0
    %p102 = por %p100, %p101
    %p103 = scmp.ne.s32.totalorder %s91, %s92
    %p104 = scmp.eq.s32.totalorder %s19, 1
    %p105 = por %p103, %p104
    %p107 = scmp.ne.s32.totalorder %s92, %s106
    %p108 = scmp.eq.s32.totalorder %s19, 0
    %p109 = por %p107, %p108
    %s111 = sadd.s32 %s110, 1
    %p114 = scmp.eq.s32.totalorder %s13, 1
    %p115 = scmp.ne.s32.totalorder %s110, %s112
    %p116 = scmp.eq.s32.totalorder %s13, 0
    %p117 = por %p115, %p116
    %p118 = scmp.ne.s32.totalorder %s110, %s112
    %p119 = scmp.eq.s32.totalorder %s18, 1
    %p120 = por %p118, %p119
    %p121 = scmp.ne.s32.totalorder %s112, %s113
    %p122 = scmp.eq.s32.totalorder %s18, 0
    %p123 = por %p121, %p122
    %p124 = scmp.ne.s32.totalorder %s112, %s113
    %p125 = scmp.eq.s32.totalorder %s19, 1
    %p126 = por %p124, %p125
    %p128 = scmp.ne.s32.totalorder %s113, %s127
    %p129 = scmp.eq.s32.totalorder %s19, 0
    %p130 = por %p128, %p129
    %s132 = sadd.s32 %s131, 1
    %p135 = scmp.eq.s32.totalorder %s13, 1
    %p136 = scmp.ne.s32.totalorder %s131, %s133
    %p137 = scmp.eq.s32.totalorder %s13, 0
    %p138 = por %p136, %p137
    %p139 = scmp.ne.s32.totalorder %s131, %s133
    %p140 = scmp.eq.s32.totalorder %s18, 1
    %p141 = por %p139, %p140
    %p142 = scmp.ne.s32.totalorder %s133, %s134
    %p143 = scmp.eq.s32.totalorder %s18, 0
    %p144 = por %p142, %p143
    %p145 = scmp.ne.s32.totalorder %s133, %s134
    %p146 = scmp.eq.s32.totalorder %s19, 1
    %p147 = por %p145, %p146
    %p149 = scmp.ne.s32.totalorder %s134, %s148
    %p150 = scmp.eq.s32.totalorder %s19, 0
    %p151 = por %p149, %p150
    %s153 = sadd.s32 %s152, 1
    %p156 = scmp.eq.s32.totalorder %s13, 1
    %p157 = scmp.ne.s32.totalorder %s152, %s154
    %p158 = scmp.eq.s32.totalorder %s13, 0
    %p159 = por %p157, %p158
    %p160 = scmp.ne.s32.totalorder %s152, %s154
    %p161 = scmp.eq.s32.totalorder %s18, 1
    %p162 = por %p160, %p161
    %p163 = scmp.ne.s32.totalorder %s154, %s155
    %p164 = scmp.eq.s32.totalorder %s18, 0
    %p165 = por %p163, %p164
    %p166 = scmp.ne.s32.totalorder %s154, %s155
    %p167 = scmp.eq.s32.totalorder %s19, 1
    %p168 = por %p166, %p167
    %p170 = scmp.ne.s32.totalorder %s155, %s169
    %p171 = scmp.eq.s32.totalorder %s19, 0
    %p172 = por %p170, %p171
    %s173 = ssub.s32 %s13, %s20
    %p174 = scmp.eq.s32.totalorder %s173, 0
    %s176 = sadd.s32 %s175, 1
    %s177 = scalar_select %p174, %s175, %s176
    %p180 = pneg %p174
    %p181 = scmp.eq.s32.totalorder %s13, 1
    %p182 = por %p180, %p181
    %p183 = scmp.ne.s32.totalorder %s175, %s178
    %p184 = scmp.eq.s32.totalorder %s13, 0
    %p185 = por %p183, %p184
    %p186 = scmp.ne.s32.totalorder %s175, %s178
    %p187 = scmp.eq.s32.totalorder %s18, 1
    %p188 = por %p186, %p187
    %p189 = scmp.ne.s32.totalorder %s178, %s179
    %p190 = scmp.eq.s32.totalorder %s18, 0
    %p191 = por %p189, %p190
    %p192 = scmp.ne.s32.totalorder %s178, %s179
    %p193 = scmp.eq.s32.totalorder %s19, 1
    %p194 = por %p192, %p193
    %p196 = scmp.ne.s32.totalorder %s179, %s195
    %p197 = scmp.eq.s32.totalorder %s19, 0
    %p198 = por %p196, %p197
    %p199 = scmp.le.s32.totalorder 1, %s13
    %p200 = scmp.lt.s32.totalorder %s13, 3
    %p201 = pnand %p199, %p200
    %p202 = pneg %p201
    // Predicated region
    $region9: #{pointnet2_forward.6} parent=5 // pred_check
      _
    $region10: #{pointnet2_forward.6} parent=5 // pred_check_branch
      %204 = sbr.rel (%p201) target = $region12
    $region11: #{pointnet2_forward.6} parent=5 // pred_region
      %s205 = ssub.s32 %s13, 1
      // Predicated region
      $region13: #{pointnet2_forward.6} parent=11 // pred_check
        %p206 = pneg %p60
      $region14: #{pointnet2_forward.6} parent=11 // pred_check_branch
        %208 = sbr.rel (%p206) target = $region16
      $region15: #{pointnet2_forward.6} parent=11 // pred_region
        _
      $region16: #{pointnet2_forward.6} parent=11 // pred_fallthru
        _
      // Predicated region
      $region17: #{pointnet2_forward.6} parent=11 // pred_check
        %p209 = pneg %p81
      $region18: #{pointnet2_forward.6} parent=11 // pred_check_branch
        %211 = sbr.rel (%p209) target = $region20
      $region19: #{pointnet2_forward.6} parent=11 // pred_region
        _
      $region20: #{pointnet2_forward.6} parent=11 // pred_fallthru
        _
      // Predicated region
      $region21: #{pointnet2_forward.6} parent=11 // pred_check
        %p212 = pneg %p102
      $region22: #{pointnet2_forward.6} parent=11 // pred_check_branch
        %214 = sbr.rel (%p212) target = $region24
      $region23: #{pointnet2_forward.6} parent=11 // pred_region
        _
      $region24: #{pointnet2_forward.6} parent=11 // pred_fallthru
        _
      // Predicated region
      $region25: #{pointnet2_forward.6} parent=11 // pred_check
        %p215 = pneg %p123
      $region26: #{pointnet2_forward.6} parent=11 // pred_check_branch
        %217 = sbr.rel (%p215) target = $region28
      $region27: #{pointnet2_forward.6} parent=11 // pred_region
        _
      $region28: #{pointnet2_forward.6} parent=11 // pred_fallthru
        _
      // Predicated region
      $region29: #{pointnet2_forward.6} parent=11 // pred_check
        %p218 = pneg %p144
      $region30: #{pointnet2_forward.6} parent=11 // pred_check_branch
        %220 = sbr.rel (%p218) target = $region32
      $region31: #{pointnet2_forward.6} parent=11 // pred_region
        _
      $region32: #{pointnet2_forward.6} parent=11 // pred_fallthru
        _
      // Predicated region
      $region33: #{pointnet2_forward.6} parent=11 // pred_check
        %p221 = pneg %p165
      $region34: #{pointnet2_forward.6} parent=11 // pred_check_branch
        %223 = sbr.rel (%p221) target = $region36
      $region35: #{pointnet2_forward.6} parent=11 // pred_region
        _
      $region36: #{pointnet2_forward.6} parent=11 // pred_fallthru
        _
    $region12: #{pointnet2_forward.6} parent=5 // pred_fallthru
      _
    %p224 = scmp.lt.s32.totalorder %s13, 2
    // Predicated region
    $region37: #{pointnet2_forward.6} parent=5 // pred_check
      %p225 = pneg %p224
    $region38: #{pointnet2_forward.6} parent=5 // pred_check_branch
      %227 = sbr.rel (%p225) target = $region40
    $region39: #{pointnet2_forward.6} parent=5 // pred_region
      // Predicated region
      $region41: #{pointnet2_forward.6} parent=39 // pred_check
        %p228 = pneg %p33
      $region42: #{pointnet2_forward.6} parent=39 // pred_check_branch
        %230 = sbr.rel (%p228) target = $region44
      $region43: #{pointnet2_forward.6} parent=39 // pred_region
        %s231 = smul.u32 16, %s13
        %p232 = scmp.lt.s32.totalorder %s231, 31
        %s233 = scalar_select %p232, %s231, 31
        %s234 = smul.addr %s233, 4
        %s235 = scalar_lea.vmem %s0, %s234
        %s236 = smul.u32 16, %s13
      $region44: #{pointnet2_forward.6} parent=39 // pred_fallthru
        _
    $region40: #{pointnet2_forward.6} parent=5 // pred_fallthru
      _
    %p237 = scmp.le.s32.totalorder 1, %s13
    %p238 = scmp.lt.s32.totalorder %s13, 3
    %p239 = pnand %p237, %p238
    %p240 = pneg %p239
    // Predicated region
    $region45: #{pointnet2_forward.6} parent=5 // pred_check
      _
    $region46: #{pointnet2_forward.6} parent=5 // pred_check_branch
      %242 = sbr.rel (%p239) target = $region48
    $region47: #{pointnet2_forward.6} parent=5 // pred_region
      %s243 = ssub.s32 %s13, 1
      %s244 = smul.u32 16, %s18
      %p245 = scmp.lt.s32.totalorder %s244, 31
      %s246 = scalar_select %p245, %s244, 31
      %s247 = smul.addr %s246, 4
      %s248 = scalar_lea.vmem %s0, %s247
      %p249 = pneg %p39
      %p250 = pneg %p36
      %p251 = pneg %p60
      %p252 = pneg %p57
      %p253 = pneg %p81
      %p254 = pneg %p78
      %p255 = pneg %p102
      %p256 = pneg %p99
      %p257 = pneg %p123
      %p258 = pneg %p120
      %p259 = pneg %p144
      %p260 = pneg %p141
      %p261 = pneg %p165
      %p262 = pneg %p162
      %p263 = pneg %p191
      %p264 = pneg %p188
      %s265 = smul.u32 2, %s18
      %p266 = scmp.lt.s32.totalorder %s265, 3
      %s267 = scalar_select %p266, %s265, 3
      %s268 = smul.addr %s267, 8
      %s269 = scalar_lea.vmem %s7, %s268
      %s270 = smul.u32 16, %s18
      %p271 = scmp.lt.s32.totalorder %s270, 31
      %s272 = scalar_select %p271, %s270, 31
      %s273 = smul.addr %s272, 4
      %s274 = scalar_lea.vmem %s0, %s273
      %s275 = smul.u32 16, %s18
      %s276 = smul.u32 2, %s18
      %p277 = scmp.lt.s32.totalorder %s276, 3
      %s278 = scalar_select %p277, %s276, 3
      %s279 = smul.addr %s278, 8
      %s280 = scalar_lea.vmem %s7, %s279
      %s281 = smul.u32 2, %s18
      %v283 = vld [vmem:[%s274] sm:$0xf]
      %v284 = vld [vmem:[%s274 + $0x4] sm:$0xf]
      %v285 = vld [vmem:[%s274 + $0x8] sm:$0xf]
      %v286 = vld [vmem:[%s274 + $0xc] sm:$0xf]
      %v287 = vld [vmem:[%s274 + $0x10] sm:$0xf]
      %v288 = vld [vmem:[%s274 + $0x14] sm:$0xf]
      %v289 = vld [vmem:[%s274 + $0x18] sm:$0xf]
      %v290 = vld [vmem:[%s274 + $0x1c] sm:$0xf]
      %v291 = vld [vmem:[%s274 + $0x20] sm:$0xf]
      %v292 = vld [vmem:[%s274 + $0x24] sm:$0xf]
      %v293 = vld [vmem:[%s274 + $0x28] sm:$0xf]
      %v294 = vld [vmem:[%s274 + $0x2c] sm:$0xf]
      %v295 = vld [vmem:[%s274 + $0x30] sm:$0xf]
      %v296 = vld [vmem:[%s274 + $0x34] sm:$0xf]
      %v297 = vld [vmem:[%s274 + $0x38] sm:$0xf]
      %v298 = vld [vmem:[%s274 + $0x3c] sm:$0xf]
      %v299 = vld [vmem:[%s1] sm:$0xf]
      %v300 = vld [vmem:[%s1 + $0x4] sm:$0xf]
      %v301 = vld [vmem:[%s1 + $0x8] sm:$0xf]
      %v302 = vld [vmem:[%s1 + $0xc] sm:$0xf]
      %v303 = vld [vmem:[%s1 + $0x10] sm:$0xf]
      %v304 = vld [vmem:[%s1 + $0x14] sm:$0xf]
      %v305 = vld [vmem:[%s1 + $0x18] sm:$0xf]
      %v306 = vld [vmem:[%s1 + $0x1c] sm:$0xf]
      %v307 = vld [vmem:[%s1 + $0x20] sm:$0x3]
      %v308 = vld [vmem:[%s2] sm:$0x1]
      %v310 = vlaneseq
      %v311 = vshrl.u32 %v310, 7
      %v312 = vsub.s32 0, %v311
      %v313 = vrot.slane %v308, %v312
      %v331 = vunpack.c.l.b16 %v283
      %v332 = vunpack.c.l.b16 %v284
      %v333 = vunpack.c.l.b16 %v285
      %v334 = vunpack.c.l.b16 %v286
      %v335 = vunpack.c.l.b16 %v287
      %v336 = vunpack.c.l.b16 %v288
      %v337 = vunpack.c.l.b16 %v289
      %v338 = vunpack.c.l.b16 %v290
      %v339 = vunpack.c.l.b16 %v291
      %v340 = vunpack.c.l.b16 %v292
      %v341 = vunpack.c.l.b16 %v293
      %v342 = vunpack.c.l.b16 %v294
      %v343 = vunpack.c.l.b16 %v295
      %v344 = vunpack.c.l.b16 %v296
      %v345 = vunpack.c.l.b16 %v297
      %v346 = vunpack.c.l.b16 %v298
      %v347 = vpack.c.b16 %v332, %v331
      %v348 = vpack.c.b16 %v334, %v333
      %v349 = vpack.c.b16 %v336, %v335
      %v350 = vpack.c.b16 %v338, %v337
      %v351 = vpack.c.b16 %v340, %v339
      %v352 = vpack.c.b16 %v342, %v341
      %v353 = vpack.c.b16 %v344, %v343
      %v354 = vpack.c.b16 %v346, %v345
      %v364 = vunpack.c.l.b16 %v299
      %v365 = vunpack.c.l.b16 %v300
      %v366 = vunpack.c.l.b16 %v301
      %v367 = vunpack.c.l.b16 %v302
      %v368 = vunpack.c.l.b16 %v303
      %v369 = vunpack.c.l.b16 %v304
      %v370 = vunpack.c.l.b16 %v305
      %v371 = vunpack.c.l.b16 %v306
      %v372 = vunpack.c.l.b16 %v307
      %v373 = vpack.c.b16 %v365, %v364
      %v374 = vpack.c.b16 %v367, %v366
      %v375 = vpack.c.b16 %v369, %v368
      %v376 = vpack.c.b16 %v371, %v370
      %v377 = vpack.c.b16 %v372, %v372
      %vm382 = vcmask 547840
      %v384 = vsel %vm382, %v347, 0
      %v387 = vsel %vm382, %v348, 0
      %v390 = vsel %vm382, %v349, 0
      %v393 = vsel %vm382, %v350, 0
      %v396 = vsel %vm382, %v351, 0
      %v399 = vsel %vm382, %v352, 0
      %v402 = vsel %vm382, %v353, 0
      %v405 = vsel %vm382, %v354, 0
      %vm407 = vcmask 1040384
      %vm408 = vcmask 1041408
      %v409 = vsel %vm407, 4294967295, 65535
      %v410 = vsel %vm408, %v409, 0
      %v412 = vand.u32 %v377, %v410
      %414 = vmatprep.subr.bf16.mxu0 0
      %415 = vmatpush1.bf16.msra.mxu0 %v373
      %416 = vmatprep.subr.bf16.mxu0 0
      %417 = vmatpush1.bf16.msra.mxu0 %v374
      %418 = vmatprep.subr.bf16.mxu0 0
      %419 = vmatpush1.bf16.msra.mxu0 %v375
      %420 = vmatprep.subr.bf16.mxu0 0
      %421 = vmatpush1.bf16.msra.mxu0 %v376
      %422 = vmatprep.subr.bf16.mxu0 0
      %423 = vmatpush1.bf16.msra.mxu0 %v412
      %424 = vmatprep.subr.bf16.mxu0 0
      %425 = vmatpush1.bf16.msra.mxu0 0
      %426 = vmatprep.subr.bf16.mxu0 0
      %427 = vmatpush1.bf16.msra.mxu0 0
      %428 = vmatprep.subr.bf16.mxu0 0
      %429 = vmatpush1.bf16.msra.mxu0 0
      %430 = vmatprep.subr.bf16.mxu0 0
      %431 = vmatpush1.bf16.msra.mxu0 0
      %432 = vmatprep.subr.bf16.mxu0 0
      %433 = vmatpush1.bf16.msra.mxu0 0
      %434 = vmatprep.subr.bf16.mxu0 0
      %435 = vmatpush1.bf16.msra.mxu0 0
      %436 = vmatprep.subr.bf16.mxu0 0
      %437 = vmatpush1.bf16.msra.mxu0 0
      %438 = vmatprep.subr.bf16.mxu0 0
      %439 = vmatpush1.bf16.msra.mxu0 0
      %440 = vmatprep.subr.bf16.mxu0 0
      %441 = vmatpush1.bf16.msra.mxu0 0
      %442 = vmatprep.subr.bf16.mxu0 0
      %443 = vmatpush1.bf16.msra.mxu0 0
      %444 = vmatprep.subr.bf16.mxu0 0
      %445 = vmatpush1.bf16.msra.mxu0 0
      %446 = vmatprep.mubr.bf16.mxu0 0
      %447 = vmatmul.mubr.bf16.gmra.mrb[0].mxu0 %v384
      %v448 = vpop.f32.mrb[0].mxu0
      %v449 = vadd.f32 %v313, %v448
      %v450 = vpop.f32.mrb[0].mxu0
      %v451 = vpop.f32.mrb[0].mxu0
      %v452 = vadd.f32 %v313, %v451
      %v453 = vpop.f32.mrb[0].mxu0
      %454 = vmatprep.mubr.bf16.mxu0 0
      %455 = vmatmul.mubr.bf16.gmra.mrb[0].mxu0 %v387
      %v456 = vpop.f32.mrb[0].mxu0
      %v457 = vadd.f32 %v313, %v456
      %v458 = vpop.f32.mrb[0].mxu0
      %v459 = vpop.f32.mrb[0].mxu0
      %v460 = vadd.f32 %v313, %v459
      %v461 = vpop.f32.mrb[0].mxu0
      %462 = vmatprep.mubr.bf16.mxu0 0
      %463 = vmatmul.mubr.bf16.gmra.mrb[0].mxu0 %v390
      %v464 = vpop.f32.mrb[0].mxu0
      %v465 = vadd.f32 %v313, %v464
      %v466 = vpop.f32.mrb[0].mxu0
      %v467 = vpop.f32.mrb[0].mxu0
      %v468 = vadd.f32 %v313, %v467
      %v469 = vpop.f32.mrb[0].mxu0
      %470 = vmatprep.mubr.bf16.mxu0 0
      %471 = vmatmul.mubr.bf16.gmra.mrb[0].mxu0 %v393
      %v472 = vpop.f32.mrb[0].mxu0
      %v473 = vadd.f32 %v313, %v472
      %v474 = vpop.f32.mrb[0].mxu0
      %v475 = vpop.f32.mrb[0].mxu0
      %v476 = vadd.f32 %v313, %v475
      %v477 = vpop.f32.mrb[0].mxu0
      %478 = vmatprep.mubr.bf16.mxu0 0
      %479 = vmatmul.mubr.bf16.gmra.mrb[0].mxu0 %v396
      %v480 = vpop.f32.mrb[0].mxu0
      %v481 = vadd.f32 %v313, %v480
      %v482 = vpop.f32.mrb[0].mxu0
      %v483 = vpop.f32.mrb[0].mxu0
      %v484 = vadd.f32 %v313, %v483
      %v485 = vpop.f32.mrb[0].mxu0
      %486 = vmatprep.mubr.bf16.mxu0 0
      %487 = vmatmul.mubr.bf16.gmra.mrb[0].mxu0 %v399
      %v488 = vpop.f32.mrb[0].mxu0
      %v489 = vadd.f32 %v313, %v488
      %v490 = vpop.f32.mrb[0].mxu0
      %v491 = vpop.f32.mrb[0].mxu0
      %v492 = vadd.f32 %v313, %v491
      %v493 = vpop.f32.mrb[0].mxu0
      %494 = vmatprep.mubr.bf16.mxu0 0
      %495 = vmatmul.mubr.bf16.gmra.mrb[0].mxu0 %v402
      %v496 = vpop.f32.mrb[0].mxu0
      %v497 = vadd.f32 %v313, %v496
      %v498 = vpop.f32.mrb[0].mxu0
      %v499 = vpop.f32.mrb[0].mxu0
      %v500 = vadd.f32 %v313, %v499
      %v501 = vpop.f32.mrb[0].mxu0
      %502 = vmatprep.mubr.bf16.mxu0 0
      %503 = vmatmul.mubr.bf16.gmra.mrb[0].mxu0 %v405
      %v504 = vpop.f32.mrb[0].mxu0
      %v505 = vadd.f32 %v313, %v504
      %v506 = vpop.f32.mrb[0].mxu0
      %v507 = vpop.f32.mrb[0].mxu0
      %v508 = vadd.f32 %v313, %v507
      %v509 = vpop.f32.mrb[0].mxu0
      %510 = vdwg.mxu0
      %v511 = vmax.f32 %v449, 0.0
      %v512 = vmax.f32 %v452, 0.0
      %v513 = vmax.f32 %v457, 0.0
      %v514 = vmax.f32 %v460, 0.0
      %v515 = vmax.f32 %v465, 0.0
      %v516 = vmax.f32 %v468, 0.0
      %v517 = vmax.f32 %v473, 0.0
      %v518 = vmax.f32 %v476, 0.0
      %v519 = vmax.f32 %v481, 0.0
      %v520 = vmax.f32 %v484, 0.0
      %v521 = vmax.f32 %v489, 0.0
      %v522 = vmax.f32 %v492, 0.0
      %v523 = vmax.f32 %v497, 0.0
      %v524 = vmax.f32 %v500, 0.0
      %v525 = vmax.f32 %v505, 0.0
      %v526 = vmax.f32 %v508, 0.0
      %v527 = vpack.c.bf16 %v512, %v511
      %v528 = vpack.c.bf16 %v514, %v513
      %v529 = vpack.c.bf16 %v516, %v515
      %v530 = vpack.c.bf16 %v518, %v517
      %v531 = vpack.c.bf16 %v520, %v519
      %v532 = vpack.c.bf16 %v522, %v521
      %v533 = vpack.c.bf16 %v524, %v523
      %v534 = vpack.c.bf16 %v526, %v525
      %v535 = vld [vmem:[%s3] sm:$0xf]
      %v536 = vld [vmem:[%s3 + $0x4] sm:$0xf]
      %v537 = vld [vmem:[%s3 + $0x8] sm:$0xf]
      %v538 = vld [vmem:[%s3 + $0xc] sm:$0xf]
      %v539 = vld [vmem:[%s3 + $0x10] sm:$0xf]
      %v540 = vld [vmem:[%s3 + $0x14] sm:$0xf]
      %v541 = vld [vmem:[%s3 + $0x18] sm:$0xf]
      %v542 = vld [vmem:[%s3 + $0x1c] sm:$0xf]
      %v543 = vld [vmem:[%s4] sm:$0x1]
      %v545 = vlaneseq
      %v546 = vshrl.u32 %v545, 7
      %v547 = vsub.s32 0, %v546
      %v548 = vrot.slane %v543, %v547
      %v558 = vunpack.c.l.b16 %v535
      %v559 = vunpack.c.l.b16 %v536
      %v560 = vunpack.c.l.b16 %v537
      %v561 = vunpack.c.l.b16 %v538
      %v562 = vunpack.c.l.b16 %v539
      %v563 = vunpack.c.l.b16 %v540
      %v564 = vunpack.c.l.b16 %v541
      %v565 = vunpack.c.l.b16 %v542
      %v566 = vpack.c.b16 %v559, %v558
      %v567 = vpack.c.b16 %v561, %v560
      %v568 = vpack.c.b16 %v563, %v562
      %v569 = vpack.c.b16 %v565, %v564
      %vm574 = vcmask 523264
      %v576 = vsel %vm574, %v527, 0
      %v579 = vsel %vm574, %v528, 0
      %v582 = vsel %vm574, %v529, 0
      %v585 = vsel %vm574, %v530, 0
      %v588 = vsel %vm574, %v531, 0
      %v591 = vsel %vm574, %v532, 0
      %v594 = vsel %vm574, %v533, 0
      %v597 = vsel %vm574, %v534, 0
      %599 = vmatprep.subr.bf16.mxu0 0
      %600 = vmatpush1.bf16.msra.mxu0 %v566
      %601 = vmatprep.subr.bf16.mxu0 0
      %602 = vmatpush1.bf16.msra.mxu0 %v567
      %603 = vmatprep.subr.bf16.mxu0 0
      %604 = vmatpush1.bf16.msra.mxu0 %v568
      %605 = vmatprep.subr.bf16.mxu0 0
      %606 = vmatpush1.bf16.msra.mxu0 %v569
      %607 = vmatprep.subr.bf16.mxu0 0
      %608 = vmatpush1.bf16.msra.mxu0 0
      %609 = vmatprep.subr.bf16.mxu0 0
      %610 = vmatpush1.bf16.msra.mxu0 0
      %611 = vmatprep.subr.bf16.mxu0 0
      %612 = vmatpush1.bf16.msra.mxu0 0
      %613 = vmatprep.subr.bf16.mxu0 0
      %614 = vmatpush1.bf16.msra.mxu0 0
      %615 = vmatprep.subr.bf16.mxu0 0
      %616 = vmatpush1.bf16.msra.mxu0 0
      %617 = vmatprep.subr.bf16.mxu0 0
      %618 = vmatpush1.bf16.msra.mxu0 0
      %619 = vmatprep.subr.bf16.mxu0 0
      %620 = vmatpush1.bf16.msra.mxu0 0
      %621 = vmatprep.subr.bf16.mxu0 0
      %622 = vmatpush1.bf16.msra.mxu0 0
      %623 = vmatprep.subr.bf16.mxu0 0
      %624 = vmatpush1.bf16.msra.mxu0 0
      %625 = vmatprep.subr.bf16.mxu0 0
      %626 = vmatpush1.bf16.msra.mxu0 0
      %627 = vmatprep.subr.bf16.mxu0 0
      %628 = vmatpush1.bf16.msra.mxu0 0
      %629 = vmatprep.subr.bf16.mxu0 0
      %630 = vmatpush1.bf16.msra.mxu0 0
      %631 = vmatprep.mubr.bf16.mxu0 0
      %632 = vmatmul.mubr.bf16.gmra.mrb[0].mxu0 %v576
      %v633 = vpop.f32.mrb[0].mxu0
      %v634 = vadd.f32 %v548, %v633
      %v635 = vpop.f32.mrb[0].mxu0
      %v636 = vpop.f32.mrb[0].mxu0
      %v637 = vadd.f32 %v548, %v636
      %v638 = vpop.f32.mrb[0].mxu0
      %639 = vmatprep.mubr.bf16.mxu0 0
      %640 = vmatmul.mubr.bf16.gmra.mrb[0].mxu0 %v579
      %v641 = vpop.f32.mrb[0].mxu0
      %v642 = vadd.f32 %v548, %v641
      %v643 = vpop.f32.mrb[0].mxu0
      %v644 = vpop.f32.mrb[0].mxu0
      %v645 = vadd.f32 %v548, %v644
      %v646 = vpop.f32.mrb[0].mxu0
      %647 = vmatprep.mubr.bf16.mxu0 0
      %648 = vmatmul.mubr.bf16.gmra.mrb[0].mxu0 %v582
      %v649 = vpop.f32.mrb[0].mxu0
      %v650 = vadd.f32 %v548, %v649
      %v651 = vpop.f32.mrb[0].mxu0
      %v652 = vpop.f32.mrb[0].mxu0
      %v653 = vadd.f32 %v548, %v652
      %v654 = vpop.f32.mrb[0].mxu0
      %655 = vmatprep.mubr.bf16.mxu0 0
      %656 = vmatmul.mubr.bf16.gmra.mrb[0].mxu0 %v585
      %v657 = vpop.f32.mrb[0].mxu0
      %v658 = vadd.f32 %v548, %v657
      %v659 = vpop.f32.mrb[0].mxu0
      %v660 = vpop.f32.mrb[0].mxu0
      %v661 = vadd.f32 %v548, %v660
      %v662 = vpop.f32.mrb[0].mxu0
      %663 = vmatprep.mubr.bf16.mxu0 0
      %664 = vmatmul.mubr.bf16.gmra.mrb[0].mxu0 %v588
      %v665 = vpop.f32.mrb[0].mxu0
      %v666 = vadd.f32 %v548, %v665
      %v667 = vpop.f32.mrb[0].mxu0
      %v668 = vpop.f32.mrb[0].mxu0
      %v669 = vadd.f32 %v548, %v668
      %v670 = vpop.f32.mrb[0].mxu0
      %671 = vmatprep.mubr.bf16.mxu0 0
      %672 = vmatmul.mubr.bf16.gmra.mrb[0].mxu0 %v591
      %v673 = vpop.f32.mrb[0].mxu0
      %v674 = vadd.f32 %v548, %v673
      %v675 = vpop.f32.mrb[0].mxu0
      %v676 = vpop.f32.mrb[0].mxu0
      %v677 = vadd.f32 %v548, %v676
      %v678 = vpop.f32.mrb[0].mxu0
      %679 = vmatprep.mubr.bf16.mxu0 0
      %680 = vmatmul.mubr.bf16.gmra.mrb[0].mxu0 %v594
      %v681 = vpop.f32.mrb[0].mxu0
      %v682 = vadd.f32 %v548, %v681
      %v683 = vpop.f32.mrb[0].mxu0
      %v684 = vpop.f32.mrb[0].mxu0
      %v685 = vadd.f32 %v548, %v684
      %v686 = vpop.f32.mrb[0].mxu0
      %687 = vmatprep.mubr.bf16.mxu0 0
      %688 = vmatmul.mubr.bf16.gmra.mrb[0].mxu0 %v597
      %v689 = vpop.f32.mrb[0].mxu0
      %v690 = vadd.f32 %v548, %v689
      %v691 = vpop.f32.mrb[0].mxu0
      %v692 = vpop.f32.mrb[0].mxu0
      %v693 = vadd.f32 %v548, %v692
      %v694 = vpop.f32.mrb[0].mxu0
      %695 = vdwg.mxu0
      %v696 = vmax.f32 %v634, 0.0
      %v697 = vmax.f32 %v637, 0.0
      %v698 = vmax.f32 %v642, 0.0
      %v699 = vmax.f32 %v645, 0.0
      %v700 = vmax.f32 %v650, 0.0
      %v701 = vmax.f32 %v653, 0.0
      %v702 = vmax.f32 %v658, 0.0
      %v703 = vmax.f32 %v661, 0.0
      %v704 = vmax.f32 %v666, 0.0
      %v705 = vmax.f32 %v669, 0.0
      %v706 = vmax.f32 %v674, 0.0
      %v707 = vmax.f32 %v677, 0.0
      %v708 = vmax.f32 %v682, 0.0
      %v709 = vmax.f32 %v685, 0.0
      %v710 = vmax.f32 %v690, 0.0
      %v711 = vmax.f32 %v693, 0.0
      %v712 = vpack.c.bf16 %v697, %v696
      %v713 = vpack.c.bf16 %v699, %v698
      %v714 = vpack.c.bf16 %v701, %v700
      %v715 = vpack.c.bf16 %v703, %v702
      %v716 = vpack.c.bf16 %v705, %v704
      %v717 = vpack.c.bf16 %v707, %v706
      %v718 = vpack.c.bf16 %v709, %v708
      %v719 = vpack.c.bf16 %v711, %v710
      %v720 = vld [vmem:[%s5] sm:$0xf]
      %v721 = vld [vmem:[%s5 + $0x4] sm:$0xf]
      %v722 = vld [vmem:[%s5 + $0x8] sm:$0xf]
      %v723 = vld [vmem:[%s5 + $0xc] sm:$0xf]
      %v724 = vld [vmem:[%s5 + $0x10] sm:$0xf]
      %v725 = vld [vmem:[%s5 + $0x14] sm:$0xf]
      %v726 = vld [vmem:[%s5 + $0x18] sm:$0xf]
      %v727 = vld [vmem:[%s5 + $0x1c] sm:$0xf]
      %v728 = vld [vmem:[%s6] sm:$0x1]
      %v730 = vlaneseq
      %v731 = vshrl.u32 %v730, 7
      %v732 = vsub.s32 0, %v731
      %v733 = vrot.slane %v728, %v732
      %v743 = vunpack.c.l.b16 %v720
      %v744 = vunpack.c.l.b16 %v721
      %v745 = vunpack.c.l.b16 %v722
      %v746 = vunpack.c.l.b16 %v723
      %v747 = vunpack.c.l.b16 %v724
      %v748 = vunpack.c.l.b16 %v725
      %v749 = vunpack.c.l.b16 %v726
      %v750 = vunpack.c.l.b16 %v727
      %v751 = vpack.c.b16 %v744, %v743
      %v752 = vpack.c.b16 %v746, %v745
      %v753 = vpack.c.b16 %v748, %v747
      %v754 = vpack.c.b16 %v750, %v749
      %v760 = vsel %vm574, %v712, 0
      %v763 = vsel %vm574, %v713, 0
      %v766 = vsel %vm574, %v714, 0
      %v769 = vsel %vm574, %v715, 0
      %v772 = vsel %vm574, %v716, 0
      %v775 = vsel %vm574, %v717, 0
      %v778 = vsel %vm574, %v718, 0
      %v781 = vsel %vm574, %v719, 0
      %783 = vmatprep.subr.bf16.mxu0 0
      %784 = vmatpush1.bf16.msra.mxu0 %v751
      %785 = vmatprep.subr.bf16.mxu0 0
      %786 = vmatpush1.bf16.msra.mxu0 %v752
      %787 = vmatprep.subr.bf16.mxu0 0
      %788 = vmatpush1.bf16.msra.mxu0 %v753
      %789 = vmatprep.subr.bf16.mxu0 0
      %790 = vmatpush1.bf16.msra.mxu0 %v754
      %791 = vmatprep.subr.bf16.mxu0 0
      %792 = vmatpush1.bf16.msra.mxu0 0
      %793 = vmatprep.subr.bf16.mxu0 0
      %794 = vmatpush1.bf16.msra.mxu0 0
      %795 = vmatprep.subr.bf16.mxu0 0
      %796 = vmatpush1.bf16.msra.mxu0 0
      %797 = vmatprep.subr.bf16.mxu0 0
      %798 = vmatpush1.bf16.msra.mxu0 0
      %799 = vmatprep.subr.bf16.mxu0 0
      %800 = vmatpush1.bf16.msra.mxu0 0
      %801 = vmatprep.subr.bf16.mxu0 0
      %802 = vmatpush1.bf16.msra.mxu0 0
      %803 = vmatprep.subr.bf16.mxu0 0
      %804 = vmatpush1.bf16.msra.mxu0 0
      %805 = vmatprep.subr.bf16.mxu0 0
      %806 = vmatpush1.bf16.msra.mxu0 0
      %807 = vmatprep.subr.bf16.mxu0 0
      %808 = vmatpush1.bf16.msra.mxu0 0
      %809 = vmatprep.subr.bf16.mxu0 0
      %810 = vmatpush1.bf16.msra.mxu0 0
      %811 = vmatprep.subr.bf16.mxu0 0
      %812 = vmatpush1.bf16.msra.mxu0 0
      %813 = vmatprep.subr.bf16.mxu0 0
      %814 = vmatpush1.bf16.msra.mxu0 0
      %815 = vmatprep.mubr.bf16.mxu0 0
      %816 = vmatmul.mubr.bf16.gmra.mrb[0].mxu0 %v760
      %v817 = vpop.f32.mrb[0].mxu0
      %v818 = vadd.f32 %v733, %v817
      %v819 = vpop.f32.mrb[0].mxu0
      %v820 = vpop.f32.mrb[0].mxu0
      %v821 = vadd.f32 %v733, %v820
      %v822 = vpop.f32.mrb[0].mxu0
      %823 = vmatprep.mubr.bf16.mxu0 0
      %824 = vmatmul.mubr.bf16.gmra.mrb[0].mxu0 %v763
      %v825 = vpop.f32.mrb[0].mxu0
      %v826 = vadd.f32 %v733, %v825
      %v827 = vpop.f32.mrb[0].mxu0
      %v828 = vpop.f32.mrb[0].mxu0
      %v829 = vadd.f32 %v733, %v828
      %v830 = vpop.f32.mrb[0].mxu0
      %831 = vmatprep.mubr.bf16.mxu0 0
      %832 = vmatmul.mubr.bf16.gmra.mrb[0].mxu0 %v766
      %v833 = vpop.f32.mrb[0].mxu0
      %v834 = vadd.f32 %v733, %v833
      %v835 = vpop.f32.mrb[0].mxu0
      %v836 = vpop.f32.mrb[0].mxu0
      %v837 = vadd.f32 %v733, %v836
      %v838 = vpop.f32.mrb[0].mxu0
      %839 = vmatprep.mubr.bf16.mxu0 0
      %840 = vmatmul.mubr.bf16.gmra.mrb[0].mxu0 %v769
      %v841 = vpop.f32.mrb[0].mxu0
      %v842 = vadd.f32 %v733, %v841
      %v843 = vpop.f32.mrb[0].mxu0
      %v844 = vpop.f32.mrb[0].mxu0
      %v845 = vadd.f32 %v733, %v844
      %v846 = vpop.f32.mrb[0].mxu0
      %847 = vmatprep.mubr.bf16.mxu0 0
      %848 = vmatmul.mubr.bf16.gmra.mrb[0].mxu0 %v772
      %v849 = vpop.f32.mrb[0].mxu0
      %v850 = vadd.f32 %v733, %v849
      %v851 = vpop.f32.mrb[0].mxu0
      %v852 = vpop.f32.mrb[0].mxu0
      %v853 = vadd.f32 %v733, %v852
      %v854 = vpop.f32.mrb[0].mxu0
      %855 = vmatprep.mubr.bf16.mxu0 0
      %856 = vmatmul.mubr.bf16.gmra.mrb[0].mxu0 %v775
      %v857 = vpop.f32.mrb[0].mxu0
      %v858 = vadd.f32 %v733, %v857
      %v859 = vpop.f32.mrb[0].mxu0
      %v860 = vpop.f32.mrb[0].mxu0
      %v861 = vadd.f32 %v733, %v860
      %v862 = vpop.f32.mrb[0].mxu0
      %863 = vmatprep.mubr.bf16.mxu0 0
      %864 = vmatmul.mubr.bf16.gmra.mrb[0].mxu0 %v778
      %v865 = vpop.f32.mrb[0].mxu0
      %v866 = vadd.f32 %v733, %v865
      %v867 = vpop.f32.mrb[0].mxu0
      %v868 = vpop.f32.mrb[0].mxu0
      %v869 = vadd.f32 %v733, %v868
      %v870 = vpop.f32.mrb[0].mxu0
      %871 = vmatprep.mubr.bf16.mxu0 0
      %872 = vmatmul.mubr.bf16.gmra.mrb[0].mxu0 %v781
      %v873 = vpop.f32.mrb[0].mxu0
      %v874 = vadd.f32 %v733, %v873
      %v875 = vpop.f32.mrb[0].mxu0
      %v876 = vpop.f32.mrb[0].mxu0
      %v877 = vadd.f32 %v733, %v876
      %v878 = vpop.f32.mrb[0].mxu0
      %879 = vdwg.mxu0
      %v880 = vmax.f32 %v818, 0.0
      %v881 = vmax.f32 %v821, 0.0
      %v882 = vmax.f32 %v826, 0.0
      %v883 = vmax.f32 %v829, 0.0
      %v884 = vmax.f32 %v834, 0.0
      %v885 = vmax.f32 %v837, 0.0
      %v886 = vmax.f32 %v842, 0.0
      %v887 = vmax.f32 %v845, 0.0
      %v888 = vmax.f32 %v850, 0.0
      %v889 = vmax.f32 %v853, 0.0
      %v890 = vmax.f32 %v858, 0.0
      %v891 = vmax.f32 %v861, 0.0
      %v892 = vmax.f32 %v866, 0.0
      %v893 = vmax.f32 %v869, 0.0
      %v894 = vmax.f32 %v874, 0.0
      %v895 = vmax.f32 %v877, 0.0
      %v896 = vrot.slane %v880, 4
      %v897 = vmax.f32 %v880, %v896
      %v898 = vrot.slane %v897, 2
      %v899 = vmax.f32 %v897, %v898
      %v900 = vrot.slane %v899, 1
      %v901 = vmax.f32 %v899, %v900
      %v902 = vrot.slane %v881, 4
      %v903 = vmax.f32 %v881, %v902
      %v904 = vrot.slane %v903, 2
      %v905 = vmax.f32 %v903, %v904
      %v906 = vrot.slane %v905, 1
      %v907 = vmax.f32 %v905, %v906
      %v908 = vrot.slane %v882, 4
      %v909 = vmax.f32 %v882, %v908
      %v910 = vrot.slane %v909, 2
      %v911 = vmax.f32 %v909, %v910
      %v912 = vrot.slane %v911, 1
      %v913 = vmax.f32 %v911, %v912
      %v914 = vrot.slane %v883, 4
      %v915 = vmax.f32 %v883, %v914
      %v916 = vrot.slane %v915, 2
      %v917 = vmax.f32 %v915, %v916
      %v918 = vrot.slane %v917, 1
      %v919 = vmax.f32 %v917, %v918
      %v920 = vrot.slane %v884, 4
      %v921 = vmax.f32 %v884, %v920
      %v922 = vrot.slane %v921, 2
      %v923 = vmax.f32 %v921, %v922
      %v924 = vrot.slane %v923, 1
      %v925 = vmax.f32 %v923, %v924
      %v926 = vrot.slane %v885, 4
      %v927 = vmax.f32 %v885, %v926
      %v928 = vrot.slane %v927, 2
      %v929 = vmax.f32 %v927, %v928
      %v930 = vrot.slane %v929, 1
      %v931 = vmax.f32 %v929, %v930
      %v932 = vrot.slane %v886, 4
      %v933 = vmax.f32 %v886, %v932
      %v934 = vrot.slane %v933, 2
      %v935 = vmax.f32 %v933, %v934
      %v936 = vrot.slane %v935, 1
      %v937 = vmax.f32 %v935, %v936
      %v938 = vrot.slane %v887, 4
      %v939 = vmax.f32 %v887, %v938
      %v940 = vrot.slane %v939, 2
      %v941 = vmax.f32 %v939, %v940
      %v942 = vrot.slane %v941, 1
      %v943 = vmax.f32 %v941, %v942
      %v944 = vrot.slane %v888, 4
      %v945 = vmax.f32 %v888, %v944
      %v946 = vrot.slane %v945, 2
      %v947 = vmax.f32 %v945, %v946
      %v948 = vrot.slane %v947, 1
      %v949 = vmax.f32 %v947, %v948
      %v950 = vrot.slane %v889, 4
      %v951 = vmax.f32 %v889, %v950
      %v952 = vrot.slane %v951, 2
      %v953 = vmax.f32 %v951, %v952
      %v954 = vrot.slane %v953, 1
      %v955 = vmax.f32 %v953, %v954
      %v956 = vrot.slane %v890, 4
      %v957 = vmax.f32 %v890, %v956
      %v958 = vrot.slane %v957, 2
      %v959 = vmax.f32 %v957, %v958
      %v960 = vrot.slane %v959, 1
      %v961 = vmax.f32 %v959, %v960
      %v962 = vrot.slane %v891, 4
      %v963 = vmax.f32 %v891, %v962
      %v964 = vrot.slane %v963, 2
      %v965 = vmax.f32 %v963, %v964
      %v966 = vrot.slane %v965, 1
      %v967 = vmax.f32 %v965, %v966
      %v968 = vrot.slane %v892, 4
      %v969 = vmax.f32 %v892, %v968
      %v970 = vrot.slane %v969, 2
      %v971 = vmax.f32 %v969, %v970
      %v972 = vrot.slane %v971, 1
      %v973 = vmax.f32 %v971, %v972
      %v974 = vrot.slane %v893, 4
      %v975 = vmax.f32 %v893, %v974
      %v976 = vrot.slane %v975, 2
      %v977 = vmax.f32 %v975, %v976
      %v978 = vrot.slane %v977, 1
      %v979 = vmax.f32 %v977, %v978
      %v980 = vrot.slane %v894, 4
      %v981 = vmax.f32 %v894, %v980
      %v982 = vrot.slane %v981, 2
      %v983 = vmax.f32 %v981, %v982
      %v984 = vrot.slane %v983, 1
      %v985 = vmax.f32 %v983, %v984
      %v986 = vrot.slane %v895, 4
      %v987 = vmax.f32 %v895, %v986
      %v988 = vrot.slane %v987, 2
      %v989 = vmax.f32 %v987, %v988
      %v990 = vrot.slane %v989, 1
      %v991 = vmax.f32 %v989, %v990
      %vm1008 = vcmask 1041409
      %v1009 = vsel %vm1008, %v907, %v901
      %vm1010 = vcmask 1042434
      %v1011 = vsel %vm1010, %v913, %v1009
      %vm1012 = vcmask 1043459
      %v1013 = vsel %vm1012, %v919, %v1011
      %vm1014 = vcmask 1044484
      %v1015 = vsel %vm1014, %v925, %v1013
      %vm1016 = vcmask 1045509
      %v1017 = vsel %vm1016, %v931, %v1015
      %vm1018 = vcmask 1046534
      %v1019 = vsel %vm1018, %v937, %v1017
      %vm1020 = vcmask 1047559
      %v1021 = vsel %vm1020, %v943, %v1019
      %v1022 = vsel %vm1008, %v955, %v949
      %v1023 = vsel %vm1010, %v961, %v1022
      %v1024 = vsel %vm1012, %v967, %v1023
      %v1025 = vsel %vm1014, %v973, %v1024
      %v1026 = vsel %vm1016, %v979, %v1025
      %v1027 = vsel %vm1018, %v985, %v1026
      %v1028 = vsel %vm1020, %v991, %v1027
      %1031 = vst [vmem:[%s280] sm:$0xff] %v1021
      %1032 = vst [vmem:[%s280 + $0x8] sm:$0xff] %v1028
      %s1033 = smul.u32 2, %s18
      %p1034 = scmp.lt.s32.totalorder %s1033, 3
      %s1035 = scalar_select %p1034, %s1033, 3
      %s1036 = smul.addr %s1035, 8
      %s1037 = scalar_lea.vmem %s7, %s1036
      // Predicated region
      $region49: #{pointnet2_forward.6} parent=47 // pred_check
        %p1038 = pneg %p188
      $region50: #{pointnet2_forward.6} parent=47 // pred_check_branch
        %1040 = sbr.rel (%p1038) target = $region52
      $region51: #{pointnet2_forward.6} parent=47 // pred_region
        %s1041 = smul.u32 2, %s18
      $region52: #{pointnet2_forward.6} parent=47 // pred_fallthru
        _
    $region48: #{pointnet2_forward.6} parent=5 // pred_fallthru
      _
    %p1042 = scmp.le.s32.totalorder 2, %s13
    // Predicated region
    $region53: #{pointnet2_forward.6} parent=5 // pred_check
      %p1043 = pneg %p1042
    $region54: #{pointnet2_forward.6} parent=5 // pred_check_branch
      %1045 = sbr.rel (%p1043) target = $region56
    $region55: #{pointnet2_forward.6} parent=5 // pred_region
      %s1046 = ssub.s32 %s13, 2
      // Predicated region
      $region57: #{pointnet2_forward.6} parent=55 // pred_check
        %p1047 = pneg %p194
      $region58: #{pointnet2_forward.6} parent=55 // pred_check_branch
        %1049 = sbr.rel (%p1047) target = $region60
      $region59: #{pointnet2_forward.6} parent=55 // pred_region
        %s1050 = smul.u32 2, %s19
        %p1051 = scmp.lt.s32.totalorder %s1050, 3
        %s1052 = scalar_select %p1051, %s1050, 3
        %s1053 = smul.addr %s1052, 8
        %s1054 = scalar_lea.vmem %s7, %s1053
      $region60: #{pointnet2_forward.6} parent=55 // pred_fallthru
        _
    $region56: #{pointnet2_forward.6} parent=5 // pred_fallthru
      _
  $region6: #{pointnet2_forward.6} parent=0 // loop_footer
    %s17 = sadd.s32 1, %s13
  $region7: #{pointnet2_forward.6} parent=0 // loop_footer_branch
    %12 = sbr.rel target = $region3
  $region8: #{pointnet2_forward.6} parent=0 // loop_exit
    _

// kernel: pointnet2_forward.7
$region0: #{pointnet2_forward.7}
  #allocation0 [shape = 'u32[]', space=smem, size = 0x4, offset = 0x4, fixed_abs, tag = 'smem constant byte address 0x4 - core index']
  #allocation1 [shape = 'u32[144,128]{1,0:T(1,128)}', space=vmem, size = 0x12000, scoped, tag = 'internal scratch']
  %s0 = inlined_call_operand.vmem [shape: bf16[32,67], index: 0, kind: input, shape index: {}]
  %s1 = inlined_call_operand.vmem [shape: bf16[67,1024], index: 1, kind: input, shape index: {}]
  %s2 = inlined_call_operand.vmem [shape: f32[1,1024], index: 2, kind: input, shape index: {}]
  %s3 = inlined_call_operand.vmem [shape: f32[2,1024], index: 3, kind: output, shape index: {}]
  %s4 = sld [smem:[#allocation0]]
  $region22: #{pointnet2_forward.7} parent=0
    _
  %s6 = ssub.s32 1, %s4
  %s7 = scalar_select 0, %s6, %s4
  // Predicated region
  $region2: #{pointnet2_forward.7} parent=0 // pred_check
    _
  $region3: #{pointnet2_forward.7} parent=0 // pred_check_branch
    %9 = sbr.rel (0) target = $region5
  $region4: #{pointnet2_forward.7} parent=0 // pred_region
    _
  $region5: #{pointnet2_forward.7} parent=0 // pred_fallthru
    _
  // Predicated region
  $region6: #{pointnet2_forward.7} parent=0 // pred_check
    _
  $region7: #{pointnet2_forward.7} parent=0 // pred_check_branch
    %11 = sbr.rel (0) target = $region9
  $region8: #{pointnet2_forward.7} parent=0 // pred_region
    _
  $region9: #{pointnet2_forward.7} parent=0 // pred_fallthru
    _
  // Predicated region
  $region10: #{pointnet2_forward.7} parent=0 // pred_check
    _
  $region11: #{pointnet2_forward.7} parent=0 // pred_check_branch
    %13 = sbr.rel (0) target = $region13
  $region12: #{pointnet2_forward.7} parent=0 // pred_region
    _
  $region13: #{pointnet2_forward.7} parent=0 // pred_fallthru
    _
  %v15 = vld [vmem:[%s0] sm:$0xf]
  %v16 = vld [vmem:[%s0 + $0x4] sm:$0xf]
  %v17 = vld [vmem:[%s0 + $0x8] sm:$0xf]
  %v18 = vld [vmem:[%s0 + $0xc] sm:$0xf]
  %v19 = vld [vmem:[%s1] sm:$0xff]
  %v20 = vld [vmem:[%s1 + $0x8] sm:$0xff]
  %v21 = vld [vmem:[%s1 + $0x10] sm:$0xff]
  %v22 = vld [vmem:[%s1 + $0x18] sm:$0xff]
  %v23 = vld [vmem:[%s1 + $0x20] sm:$0xff]
  %v24 = vld [vmem:[%s1 + $0x28] sm:$0xff]
  %v25 = vld [vmem:[%s1 + $0x30] sm:$0xff]
  %v26 = vld [vmem:[%s1 + $0x38] sm:$0xff]
  %v27 = vld [vmem:[%s1 + $0x40] sm:$0xff]
  %v28 = vld [vmem:[%s1 + $0x48] sm:$0xff]
  %v29 = vld [vmem:[%s1 + $0x50] sm:$0xff]
  %v30 = vld [vmem:[%s1 + $0x58] sm:$0xff]
  %v31 = vld [vmem:[%s1 + $0x60] sm:$0xff]
  %v32 = vld [vmem:[%s1 + $0x68] sm:$0xff]
  %v33 = vld [vmem:[%s1 + $0x70] sm:$0xff]
  %v34 = vld [vmem:[%s1 + $0x78] sm:$0xff]
  %v35 = vld [vmem:[%s1 + $0x80] sm:$0xff]
  %v36 = vld [vmem:[%s1 + $0x88] sm:$0xff]
  %v37 = vld [vmem:[%s1 + $0x90] sm:$0xff]
  %v38 = vld [vmem:[%s1 + $0x98] sm:$0xff]
  %v39 = vld [vmem:[%s1 + $0xa0] sm:$0xff]
  %v40 = vld [vmem:[%s1 + $0xa8] sm:$0xff]
  %v41 = vld [vmem:[%s1 + $0xb0] sm:$0xff]
  %v42 = vld [vmem:[%s1 + $0xb8] sm:$0xff]
  %v43 = vld [vmem:[%s1 + $0xc0] sm:$0xff]
  %v44 = vld [vmem:[%s1 + $0xc8] sm:$0xff]
  %v45 = vld [vmem:[%s1 + $0xd0] sm:$0xff]
  %v46 = vld [vmem:[%s1 + $0xd8] sm:$0xff]
  %v47 = vld [vmem:[%s1 + $0xe0] sm:$0xff]
  %v48 = vld [vmem:[%s1 + $0xe8] sm:$0xff]
  %v49 = vld [vmem:[%s1 + $0xf0] sm:$0xff]
  %v50 = vld [vmem:[%s1 + $0xf8] sm:$0xff]
  %v51 = vld [vmem:[%s1 + $0x100] sm:$0x33]
  %v52 = vld [vmem:[%s1 + $0x108] sm:$0x33]
  %v53 = vld [vmem:[%s1 + $0x110] sm:$0x33]
  %v54 = vld [vmem:[%s1 + $0x118] sm:$0x33]
  %v55 = vld [vmem:[%s2] sm:$0xff]
  %v57 = vlaneseq
  %v58 = vshrl.u32 %v57, 7
  %v59 = vsub.s32 0, %v58
  %v60 = vrot.slane %v55, %v59
  %v61 = vlaneseq
  %v62 = vshrl.u32 %v61, 7
  %v63 = vsub.s32 1, %v62
  %v64 = vrot.slane %v55, %v63
  %v65 = vlaneseq
  %v66 = vshrl.u32 %v65, 7
  %v67 = vsub.s32 2, %v66
  %v68 = vrot.slane %v55, %v67
  %v69 = vlaneseq
  %v70 = vshrl.u32 %v69, 7
  %v71 = vsub.s32 3, %v70
  %v72 = vrot.slane %v55, %v71
  %v73 = vlaneseq
  %v74 = vshrl.u32 %v73, 7
  %v75 = vsub.s32 4, %v74
  %v76 = vrot.slane %v55, %v75
  %v77 = vlaneseq
  %v78 = vshrl.u32 %v77, 7
  %v79 = vsub.s32 5, %v78
  %v80 = vrot.slane %v55, %v79
  %v81 = vlaneseq
  %v82 = vshrl.u32 %v81, 7
  %v83 = vsub.s32 6, %v82
  %v84 = vrot.slane %v55, %v83
  %v85 = vlaneseq
  %v86 = vshrl.u32 %v85, 7
  %v87 = vsub.s32 7, %v86
  %v88 = vrot.slane %v55, %v87
  %v101 = vunpack.c.l.b16 %v15
  %v102 = vunpack.c.l.b16 %v16
  %v103 = vunpack.c.l.b16 %v17
  %v104 = vunpack.c.l.b16 %v18
  %v105 = vpack.c.b16 %v102, %v101
  %v106 = vpack.c.b16 %v104, %v103
  %v143 = vunpack.c.l.b16 %v19
  %v144 = vunpack.c.h.b16 %v19
  %v145 = vunpack.c.l.b16 %v20
  %v146 = vunpack.c.h.b16 %v20
  %v147 = vunpack.c.l.b16 %v21
  %v148 = vunpack.c.h.b16 %v21
  %v149 = vunpack.c.l.b16 %v22
  %v150 = vunpack.c.h.b16 %v22
  %v151 = vunpack.c.l.b16 %v23
  %v152 = vunpack.c.h.b16 %v23
  %v153 = vunpack.c.l.b16 %v24
  %v154 = vunpack.c.h.b16 %v24
  %v155 = vunpack.c.l.b16 %v25
  %v156 = vunpack.c.h.b16 %v25
  %v157 = vunpack.c.l.b16 %v26
  %v158 = vunpack.c.h.b16 %v26
  %v159 = vunpack.c.l.b16 %v27
  %v160 = vunpack.c.h.b16 %v27
  %v161 = vunpack.c.l.b16 %v28
  %v162 = vunpack.c.h.b16 %v28
  %v163 = vunpack.c.l.b16 %v29
  %v164 = vunpack.c.h.b16 %v29
  %v165 = vunpack.c.l.b16 %v30
  %v166 = vunpack.c.h.b16 %v30
  %v167 = vunpack.c.l.b16 %v31
  %v168 = vunpack.c.h.b16 %v31
  %v169 = vunpack.c.l.b16 %v32
  %v170 = vunpack.c.h.b16 %v32
  %v171 = vunpack.c.l.b16 %v33
  %v172 = vunpack.c.h.b16 %v33
  %v173 = vunpack.c.l.b16 %v34
  %v174 = vunpack.c.h.b16 %v34
  %v175 = vunpack.c.l.b16 %v35
  %v176 = vunpack.c.h.b16 %v35
  %v177 = vunpack.c.l.b16 %v36
  %v178 = vunpack.c.h.b16 %v36
  %v179 = vunpack.c.l.b16 %v37
  %v180 = vunpack.c.h.b16 %v37
  %v181 = vunpack.c.l.b16 %v38
  %v182 = vunpack.c.h.b16 %v38
  %v183 = vunpack.c.l.b16 %v39
  %v184 = vunpack.c.h.b16 %v39
  %v185 = vunpack.c.l.b16 %v40
  %v186 = vunpack.c.h.b16 %v40
  %v187 = vunpack.c.l.b16 %v41
  %v188 = vunpack.c.h.b16 %v41
  %v189 = vunpack.c.l.b16 %v42
  %v190 = vunpack.c.h.b16 %v42
  %v191 = vunpack.c.l.b16 %v43
  %v192 = vunpack.c.h.b16 %v43
  %v193 = vunpack.c.l.b16 %v44
  %v194 = vunpack.c.h.b16 %v44
  %v195 = vunpack.c.l.b16 %v45
  %v196 = vunpack.c.h.b16 %v45
  %v197 = vunpack.c.l.b16 %v46
  %v198 = vunpack.c.h.b16 %v46
  %v199 = vunpack.c.l.b16 %v47
  %v200 = vunpack.c.h.b16 %v47
  %v201 = vunpack.c.l.b16 %v48
  %v202 = vunpack.c.h.b16 %v48
  %v203 = vunpack.c.l.b16 %v49
  %v204 = vunpack.c.h.b16 %v49
  %v205 = vunpack.c.l.b16 %v50
  %v206 = vunpack.c.h.b16 %v50
  %v207 = vunpack.c.l.b16 %v51
  %v208 = vunpack.c.h.b16 %v51
  %v209 = vunpack.c.l.b16 %v52
  %v210 = vunpack.c.h.b16 %v52
  %v211 = vunpack.c.l.b16 %v53
  %v212 = vunpack.c.h.b16 %v53
  %v213 = vunpack.c.l.b16 %v54
  %v214 = vunpack.c.h.b16 %v54
  %v215 = vpack.c.b16 %v151, %v143
  %v216 = vpack.c.b16 %v152, %v144
  %v217 = vpack.c.b16 %v153, %v145
  %v218 = vpack.c.b16 %v154, %v146
  %v219 = vpack.c.b16 %v155, %v147
  %v220 = vpack.c.b16 %v156, %v148
  %v221 = vpack.c.b16 %v157, %v149
  %v222 = vpack.c.b16 %v158, %v150
  %v223 = vpack.c.b16 %v167, %v159
  %v224 = vpack.c.b16 %v168, %v160
  %v225 = vpack.c.b16 %v169, %v161
  %v226 = vpack.c.b16 %v170, %v162
  %v227 = vpack.c.b16 %v171, %v163
  %v228 = vpack.c.b16 %v172, %v164
  %v229 = vpack.c.b16 %v173, %v165
  %v230 = vpack.c.b16 %v174, %v166
  %v231 = vpack.c.b16 %v183, %v175
  %v232 = vpack.c.b16 %v184, %v176
  %v233 = vpack.c.b16 %v185, %v177
  %v234 = vpack.c.b16 %v186, %v178
  %v235 = vpack.c.b16 %v187, %v179
  %v236 = vpack.c.b16 %v188, %v180
  %v237 = vpack.c.b16 %v189, %v181
  %v238 = vpack.c.b16 %v190, %v182
  %v239 = vpack.c.b16 %v199, %v191
  %v240 = vpack.c.b16 %v200, %v192
  %v241 = vpack.c.b16 %v201, %v193
  %v242 = vpack.c.b16 %v202, %v194
  %v243 = vpack.c.b16 %v203, %v195
  %v244 = vpack.c.b16 %v204, %v196
  %v245 = vpack.c.b16 %v205, %v197
  %v246 = vpack.c.b16 %v206, %v198
  %v247 = vpack.c.b16 %v207, %v207
  %v248 = vpack.c.b16 %v208, %v208
  %v249 = vpack.c.b16 %v209, %v209
  %v250 = vpack.c.b16 %v210, %v210
  %v251 = vpack.c.b16 %v211, %v211
  %v252 = vpack.c.b16 %v212, %v212
  %v253 = vpack.c.b16 %v213, %v213
  %v254 = vpack.c.b16 %v214, %v214
  %vm287 = vcmask 547840
  %v289 = vsel %vm287, %v105, 0
  %v292 = vsel %vm287, %v106, 0
  %vm294 = vcmask 1040384
  %vm295 = vcmask 1041408
  %v296 = vsel %vm294, 4294967295, 65535
  %v297 = vsel %vm295, %v296, 0
  %v299 = vand.u32 %v247, %v297
  %v302 = vand.u32 %v248, %v297
  %v305 = vand.u32 %v249, %v297
  %v308 = vand.u32 %v250, %v297
  %v311 = vand.u32 %v251, %v297
  %v314 = vand.u32 %v252, %v297
  %v317 = vand.u32 %v253, %v297
  %v320 = vand.u32 %v254, %v297
  %322 = vmatprep.subr.bf16.mxu0 %v216
  %323 = vmatpush1.bf16.msra.mxu0 %v215
  %324 = vmatprep.subr.bf16.mxu0 %v224
  %325 = vmatpush1.bf16.msra.mxu0 %v223
  %326 = vmatprep.subr.bf16.mxu0 %v232
  %327 = vmatpush1.bf16.msra.mxu0 %v231
  %328 = vmatprep.subr.bf16.mxu0 %v240
  %329 = vmatpush1.bf16.msra.mxu0 %v239
  %330 = vmatprep.subr.bf16.mxu0 %v302
  %331 = vmatpush1.bf16.msra.mxu0 %v299
  %332 = vmatprep.subr.bf16.mxu0 0
  %333 = vmatpush1.bf16.msra.mxu0 0
  %334 = vmatprep.subr.bf16.mxu0 0
  %335 = vmatpush1.bf16.msra.mxu0 0
  %336 = vmatprep.subr.bf16.mxu0 0
  %337 = vmatpush1.bf16.msra.mxu0 0
  %338 = vmatprep.subr.bf16.mxu0 0
  %339 = vmatpush1.bf16.msra.mxu0 0
  %340 = vmatprep.subr.bf16.mxu0 0
  %341 = vmatpush1.bf16.msra.mxu0 0
  %342 = vmatprep.subr.bf16.mxu0 0
  %343 = vmatpush1.bf16.msra.mxu0 0
  %344 = vmatprep.subr.bf16.mxu0 0
  %345 = vmatpush1.bf16.msra.mxu0 0
  %346 = vmatprep.subr.bf16.mxu0 0
  %347 = vmatpush1.bf16.msra.mxu0 0
  %348 = vmatprep.subr.bf16.mxu0 0
  %349 = vmatpush1.bf16.msra.mxu0 0
  %350 = vmatprep.subr.bf16.mxu0 0
  %351 = vmatpush1.bf16.msra.mxu0 0
  %352 = vmatprep.subr.bf16.mxu0 0
  %353 = vmatpush1.bf16.msra.mxu0 0
  %354 = vmatprep.mubr.bf16.mxu0 0
  %355 = vmatmul.mubr.bf16.gmra.mrb[0].mxu0 %v289
  %v356 = vpop.f32.mrb[0].mxu0
  %v357 = vadd.f32 %v60, %v356
  %v358 = vpop.f32.mrb[0].mxu0
  %v359 = vadd.f32 %v64, %v358
  %v360 = vpop.f32.mrb[0].mxu0
  %v361 = vadd.f32 %v60, %v360
  %v362 = vpop.f32.mrb[0].mxu0
  %v363 = vadd.f32 %v64, %v362
  %364 = vmatprep.mubr.bf16.mxu0 0
  %365 = vmatmul.mubr.bf16.gmra.mrb[0].mxu0 %v292
  %v366 = vpop.f32.mrb[0].mxu0
  %v367 = vadd.f32 %v60, %v366
  %v368 = vpop.f32.mrb[0].mxu0
  %v369 = vadd.f32 %v64, %v368
  %v370 = vpop.f32.mrb[0].mxu0
  %v371 = vadd.f32 %v60, %v370
  %v372 = vpop.f32.mrb[0].mxu0
  %v373 = vadd.f32 %v64, %v372
  %374 = vdwg.mxu0
  %375 = vmatprep.subr.bf16.mxu0 %v218
  %376 = vmatpush1.bf16.msra.mxu0 %v217
  %377 = vmatprep.subr.bf16.mxu0 %v226
  %378 = vmatpush1.bf16.msra.mxu0 %v225
  %379 = vmatprep.subr.bf16.mxu0 %v234
  %380 = vmatpush1.bf16.msra.mxu0 %v233
  %381 = vmatprep.subr.bf16.mxu0 %v242
  %382 = vmatpush1.bf16.msra.mxu0 %v241
  %383 = vmatprep.subr.bf16.mxu0 %v308
  %384 = vmatpush1.bf16.msra.mxu0 %v305
  %385 = vmatprep.subr.bf16.mxu0 0
  %386 = vmatpush1.bf16.msra.mxu0 0
  %387 = vmatprep.subr.bf16.mxu0 0
  %388 = vmatpush1.bf16.msra.mxu0 0
  %389 = vmatprep.subr.bf16.mxu0 0
  %390 = vmatpush1.bf16.msra.mxu0 0
  %391 = vmatprep.subr.bf16.mxu0 0
  %392 = vmatpush1.bf16.msra.mxu0 0
  %393 = vmatprep.subr.bf16.mxu0 0
  %394 = vmatpush1.bf16.msra.mxu0 0
  %395 = vmatprep.subr.bf16.mxu0 0
  %396 = vmatpush1.bf16.msra.mxu0 0
  %397 = vmatprep.subr.bf16.mxu0 0
  %398 = vmatpush1.bf16.msra.mxu0 0
  %399 = vmatprep.subr.bf16.mxu0 0
  %400 = vmatpush1.bf16.msra.mxu0 0
  %401 = vmatprep.subr.bf16.mxu0 0
  %402 = vmatpush1.bf16.msra.mxu0 0
  %403 = vmatprep.subr.bf16.mxu0 0
  %404 = vmatpush1.bf16.msra.mxu0 0
  %405 = vmatprep.subr.bf16.mxu0 0
  %406 = vmatpush1.bf16.msra.mxu0 0
  %407 = vmatprep.mubr.bf16.mxu0 0
  %408 = vmatmul.mubr.bf16.gmra.mrb[0].mxu0 %v289
  %v409 = vpop.f32.mrb[0].mxu0
  %v410 = vadd.f32 %v68, %v409
  %v411 = vpop.f32.mrb[0].mxu0
  %v412 = vadd.f32 %v72, %v411
  %v413 = vpop.f32.mrb[0].mxu0
  %v414 = vadd.f32 %v68, %v413
  %v415 = vpop.f32.mrb[0].mxu0
  %v416 = vadd.f32 %v72, %v415
  %417 = vmatprep.mubr.bf16.mxu0 0
  %418 = vmatmul.mubr.bf16.gmra.mrb[0].mxu0 %v292
  %v419 = vpop.f32.mrb[0].mxu0
  %v420 = vadd.f32 %v68, %v419
  %v421 = vpop.f32.mrb[0].mxu0
  %v422 = vadd.f32 %v72, %v421
  %v423 = vpop.f32.mrb[0].mxu0
  %v424 = vadd.f32 %v68, %v423
  %v425 = vpop.f32.mrb[0].mxu0
  %v426 = vadd.f32 %v72, %v425
  %427 = vdwg.mxu0
  %428 = vmatprep.subr.bf16.mxu0 %v220
  %429 = vmatpush1.bf16.msra.mxu0 %v219
  %430 = vmatprep.subr.bf16.mxu0 %v228
  %431 = vmatpush1.bf16.msra.mxu0 %v227
  %432 = vmatprep.subr.bf16.mxu0 %v236
  %433 = vmatpush1.bf16.msra.mxu0 %v235
  %434 = vmatprep.subr.bf16.mxu0 %v244
  %435 = vmatpush1.bf16.msra.mxu0 %v243
  %436 = vmatprep.subr.bf16.mxu0 %v314
  %437 = vmatpush1.bf16.msra.mxu0 %v311
  %438 = vmatprep.subr.bf16.mxu0 0
  %439 = vmatpush1.bf16.msra.mxu0 0
  %440 = vmatprep.subr.bf16.mxu0 0
  %441 = vmatpush1.bf16.msra.mxu0 0
  %442 = vmatprep.subr.bf16.mxu0 0
  %443 = vmatpush1.bf16.msra.mxu0 0
  %444 = vmatprep.subr.bf16.mxu0 0
  %445 = vmatpush1.bf16.msra.mxu0 0
  %446 = vmatprep.subr.bf16.mxu0 0
  %447 = vmatpush1.bf16.msra.mxu0 0
  %448 = vmatprep.subr.bf16.mxu0 0
  %449 = vmatpush1.bf16.msra.mxu0 0
  %450 = vmatprep.subr.bf16.mxu0 0
  %451 = vmatpush1.bf16.msra.mxu0 0
  %452 = vmatprep.subr.bf16.mxu0 0
  %453 = vmatpush1.bf16.msra.mxu0 0
  %454 = vmatprep.subr.bf16.mxu0 0
  %455 = vmatpush1.bf16.msra.mxu0 0
  %456 = vmatprep.subr.bf16.mxu0 0
  %457 = vmatpush1.bf16.msra.mxu0 0
  %458 = vmatprep.subr.bf16.mxu0 0
  %459 = vmatpush1.bf16.msra.mxu0 0
  %460 = vmatprep.mubr.bf16.mxu0 0
  %461 = vmatmul.mubr.bf16.gmra.mrb[0].mxu0 %v289
  %v462 = vpop.f32.mrb[0].mxu0
  %v463 = vadd.f32 %v76, %v462
  %v464 = vpop.f32.mrb[0].mxu0
  %v465 = vadd.f32 %v80, %v464
  %v466 = vpop.f32.mrb[0].mxu0
  %v467 = vadd.f32 %v76, %v466
  %v468 = vpop.f32.mrb[0].mxu0
  %v469 = vadd.f32 %v80, %v468
  %470 = vmatprep.mubr.bf16.mxu0 0
  %471 = vmatmul.mubr.bf16.gmra.mrb[0].mxu0 %v292
  %v472 = vpop.f32.mrb[0].mxu0
  %v473 = vadd.f32 %v76, %v472
  %v474 = vpop.f32.mrb[0].mxu0
  %v475 = vadd.f32 %v80, %v474
  %v476 = vpop.f32.mrb[0].mxu0
  %v477 = vadd.f32 %v76, %v476
  %v478 = vpop.f32.mrb[0].mxu0
  %v479 = vadd.f32 %v80, %v478
  %480 = vdwg.mxu0
  %481 = vmatprep.subr.bf16.mxu0 %v222
  %482 = vmatpush1.bf16.msra.mxu0 %v221
  %483 = vmatprep.subr.bf16.mxu0 %v230
  %484 = vmatpush1.bf16.msra.mxu0 %v229
  %485 = vmatprep.subr.bf16.mxu0 %v238
  %486 = vmatpush1.bf16.msra.mxu0 %v237
  %487 = vmatprep.subr.bf16.mxu0 %v246
  %488 = vmatpush1.bf16.msra.mxu0 %v245
  %489 = vmatprep.subr.bf16.mxu0 %v320
  %490 = vmatpush1.bf16.msra.mxu0 %v317
  %491 = vmatprep.subr.bf16.mxu0 0
  %492 = vmatpush1.bf16.msra.mxu0 0
  %493 = vmatprep.subr.bf16.mxu0 0
  %494 = vmatpush1.bf16.msra.mxu0 0
  %495 = vmatprep.subr.bf16.mxu0 0
  %496 = vmatpush1.bf16.msra.mxu0 0
  %497 = vmatprep.subr.bf16.mxu0 0
  %498 = vmatpush1.bf16.msra.mxu0 0
  %499 = vmatprep.subr.bf16.mxu0 0
  %500 = vmatpush1.bf16.msra.mxu0 0
  %501 = vmatprep.subr.bf16.mxu0 0
  %502 = vmatpush1.bf16.msra.mxu0 0
  %503 = vmatprep.subr.bf16.mxu0 0
  %504 = vmatpush1.bf16.msra.mxu0 0
  %505 = vmatprep.subr.bf16.mxu0 0
  %506 = vmatpush1.bf16.msra.mxu0 0
  %507 = vmatprep.subr.bf16.mxu0 0
  %508 = vmatpush1.bf16.msra.mxu0 0
  %509 = vmatprep.subr.bf16.mxu0 0
  %510 = vmatpush1.bf16.msra.mxu0 0
  %511 = vmatprep.subr.bf16.mxu0 0
  %512 = vmatpush1.bf16.msra.mxu0 0
  %513 = vmatprep.mubr.bf16.mxu0 0
  %514 = vmatmul.mubr.bf16.gmra.mrb[0].mxu0 %v289
  %v515 = vpop.f32.mrb[0].mxu0
  %v516 = vadd.f32 %v84, %v515
  %v517 = vpop.f32.mrb[0].mxu0
  %v518 = vadd.f32 %v88, %v517
  %v519 = vpop.f32.mrb[0].mxu0
  %v520 = vadd.f32 %v84, %v519
  %v521 = vpop.f32.mrb[0].mxu0
  %v522 = vadd.f32 %v88, %v521
  %523 = vmatprep.mubr.bf16.mxu0 0
  %524 = vmatmul.mubr.bf16.gmra.mrb[0].mxu0 %v292
  %v525 = vpop.f32.mrb[0].mxu0
  %v526 = vadd.f32 %v84, %v525
  %v527 = vpop.f32.mrb[0].mxu0
  %v528 = vadd.f32 %v88, %v527
  %v529 = vpop.f32.mrb[0].mxu0
  %v530 = vadd.f32 %v84, %v529
  %v531 = vpop.f32.mrb[0].mxu0
  %v532 = vadd.f32 %v88, %v531
  %533 = vdwg.mxu0
  %v534 = vmax.f32 %v357, 0.0
  %v535 = vmax.f32 %v359, 0.0
  %v536 = vmax.f32 %v410, 0.0
  %v537 = vmax.f32 %v412, 0.0
  %v538 = vmax.f32 %v463, 0.0
  %v539 = vmax.f32 %v465, 0.0
  %v540 = vmax.f32 %v516, 0.0
  %v541 = vmax.f32 %v518, 0.0
  %v542 = vmax.f32 %v361, 0.0
  %v543 = vmax.f32 %v363, 0.0
  %v544 = vmax.f32 %v414, 0.0
  %v545 = vmax.f32 %v416, 0.0
  %v546 = vmax.f32 %v467, 0.0
  %v547 = vmax.f32 %v469, 0.0
  %v548 = vmax.f32 %v520, 0.0
  %v549 = vmax.f32 %v522, 0.0
  %v550 = vmax.f32 %v367, 0.0
  %v551 = vmax.f32 %v369, 0.0
  %v552 = vmax.f32 %v420, 0.0
  %v553 = vmax.f32 %v422, 0.0
  %v554 = vmax.f32 %v473, 0.0
  %v555 = vmax.f32 %v475, 0.0
  %v556 = vmax.f32 %v526, 0.0
  %v557 = vmax.f32 %v528, 0.0
  %v558 = vmax.f32 %v371, 0.0
  %v559 = vmax.f32 %v373, 0.0
  %v560 = vmax.f32 %v424, 0.0
  %v561 = vmax.f32 %v426, 0.0
  %v562 = vmax.f32 %v477, 0.0
  %v563 = vmax.f32 %v479, 0.0
  %v564 = vmax.f32 %v530, 0.0
  %v565 = vmax.f32 %v532, 0.0
  %v566 = vmax.f32 %v534, %v542
  %v567 = vrot.slane %v566, 4
  %v568 = vmax.f32 %v566, %v567
  %v569 = vrot.slane %v568, 2
  %v570 = vmax.f32 %v568, %v569
  %v571 = vrot.slane %v570, 1
  %v572 = vmax.f32 %v570, %v571
  %v573 = vmax.f32 %v535, %v543
  %v574 = vrot.slane %v573, 4
  %v575 = vmax.f32 %v573, %v574
  %v576 = vrot.slane %v575, 2
  %v577 = vmax.f32 %v575, %v576
  %v578 = vrot.slane %v577, 1
  %v579 = vmax.f32 %v577, %v578
  %v580 = vmax.f32 %v536, %v544
  %v581 = vrot.slane %v580, 4
  %v582 = vmax.f32 %v580, %v581
  %v583 = vrot.slane %v582, 2
  %v584 = vmax.f32 %v582, %v583
  %v585 = vrot.slane %v584, 1
  %v586 = vmax.f32 %v584, %v585
  %v587 = vmax.f32 %v537, %v545
  %v588 = vrot.slane %v587, 4
  %v589 = vmax.f32 %v587, %v588
  %v590 = vrot.slane %v589, 2
  %v591 = vmax.f32 %v589, %v590
  %v592 = vrot.slane %v591, 1
  %v593 = vmax.f32 %v591, %v592
  %v594 = vmax.f32 %v538, %v546
  %v595 = vrot.slane %v594, 4
  %v596 = vmax.f32 %v594, %v595
  %v597 = vrot.slane %v596, 2
  %v598 = vmax.f32 %v596, %v597
  %v599 = vrot.slane %v598, 1
  %v600 = vmax.f32 %v598, %v599
  %v601 = vmax.f32 %v539, %v547
  %v602 = vrot.slane %v601, 4
  %v603 = vmax.f32 %v601, %v602
  %v604 = vrot.slane %v603, 2
  %v605 = vmax.f32 %v603, %v604
  %v606 = vrot.slane %v605, 1
  %v607 = vmax.f32 %v605, %v606
  %v608 = vmax.f32 %v540, %v548
  %v609 = vrot.slane %v608, 4
  %v610 = vmax.f32 %v608, %v609
  %v611 = vrot.slane %v610, 2
  %v612 = vmax.f32 %v610, %v611
  %v613 = vrot.slane %v612, 1
  %v614 = vmax.f32 %v612, %v613
  %v615 = vmax.f32 %v541, %v549
  %v616 = vrot.slane %v615, 4
  %v617 = vmax.f32 %v615, %v616
  %v618 = vrot.slane %v617, 2
  %v619 = vmax.f32 %v617, %v618
  %v620 = vrot.slane %v619, 1
  %v621 = vmax.f32 %v619, %v620
  %v622 = vmax.f32 %v550, %v558
  %v623 = vrot.slane %v622, 4
  %v624 = vmax.f32 %v622, %v623
  %v625 = vrot.slane %v624, 2
  %v626 = vmax.f32 %v624, %v625
  %v627 = vrot.slane %v626, 1
  %v628 = vmax.f32 %v626, %v627
  %v629 = vmax.f32 %v551, %v559
  %v630 = vrot.slane %v629, 4
  %v631 = vmax.f32 %v629, %v630
  %v632 = vrot.slane %v631, 2
  %v633 = vmax.f32 %v631, %v632
  %v634 = vrot.slane %v633, 1
  %v635 = vmax.f32 %v633, %v634
  %v636 = vmax.f32 %v552, %v560
  %v637 = vrot.slane %v636, 4
  %v638 = vmax.f32 %v636, %v637
  %v639 = vrot.slane %v638, 2
  %v640 = vmax.f32 %v638, %v639
  %v641 = vrot.slane %v640, 1
  %v642 = vmax.f32 %v640, %v641
  %v643 = vmax.f32 %v553, %v561
  %v644 = vrot.slane %v643, 4
  %v645 = vmax.f32 %v643, %v644
  %v646 = vrot.slane %v645, 2
  %v647 = vmax.f32 %v645, %v646
  %v648 = vrot.slane %v647, 1
  %v649 = vmax.f32 %v647, %v648
  %v650 = vmax.f32 %v554, %v562
  %v651 = vrot.slane %v650, 4
  %v652 = vmax.f32 %v650, %v651
  %v653 = vrot.slane %v652, 2
  %v654 = vmax.f32 %v652, %v653
  %v655 = vrot.slane %v654, 1
  %v656 = vmax.f32 %v654, %v655
  %v657 = vmax.f32 %v555, %v563
  %v658 = vrot.slane %v657, 4
  %v659 = vmax.f32 %v657, %v658
  %v660 = vrot.slane %v659, 2
  %v661 = vmax.f32 %v659, %v660
  %v662 = vrot.slane %v661, 1
  %v663 = vmax.f32 %v661, %v662
  %v664 = vmax.f32 %v556, %v564
  %v665 = vrot.slane %v664, 4
  %v666 = vmax.f32 %v664, %v665
  %v667 = vrot.slane %v666, 2
  %v668 = vmax.f32 %v666, %v667
  %v669 = vrot.slane %v668, 1
  %v670 = vmax.f32 %v668, %v669
  %v671 = vmax.f32 %v557, %v565
  %v672 = vrot.slane %v671, 4
  %v673 = vmax.f32 %v671, %v672
  %v674 = vrot.slane %v673, 2
  %v675 = vmax.f32 %v673, %v674
  %v676 = vrot.slane %v675, 1
  %v677 = vmax.f32 %v675, %v676
  %v694 = vcombine.low %v572, %v579
  %v695 = vcombine.low %v586, %v593
  %v697 = vunpack.c.l.s4 1983009808
  %v698 = vunpack.c.0.s8 %v697
  %v699 = vlaneseq
  %v700 = vshrl.u32 %v699, 7
  %v701 = vsub.s32 %v698, %v700
  %v702 = vrot.slane %v694, %v701
  %v704 = vunpack.c.l.s4 1983009808
  %v705 = vunpack.c.0.s8 %v704
  %v706 = vlaneseq
  %v707 = vshrl.u32 %v706, 7
  %v708 = vsub.s32 %v705, %v707
  %v709 = vrot.slane %v695, %v708
  %v710 = vcombine.low %v702, %v709
  %v711 = vcombine.low %v600, %v607
  %v712 = vcombine.low %v614, %v621
  %v714 = vunpack.c.l.s4 1983009808
  %v715 = vunpack.c.0.s8 %v714
  %v716 = vlaneseq
  %v717 = vshrl.u32 %v716, 7
  %v718 = vsub.s32 %v715, %v717
  %v719 = vrot.slane %v711, %v718
  %v721 = vunpack.c.l.s4 1983009808
  %v722 = vunpack.c.0.s8 %v721
  %v723 = vlaneseq
  %v724 = vshrl.u32 %v723, 7
  %v725 = vsub.s32 %v722, %v724
  %v726 = vrot.slane %v712, %v725
  %v727 = vcombine.low %v719, %v726
  %v728 = vcombine.low %v628, %v635
  %v729 = vcombine.low %v642, %v649
  %v731 = vunpack.c.l.s4 1983009808
  %v732 = vunpack.c.0.s8 %v731
  %v733 = vlaneseq
  %v734 = vshrl.u32 %v733, 7
  %v735 = vsub.s32 %v732, %v734
  %v736 = vrot.slane %v728, %v735
  %v738 = vunpack.c.l.s4 1983009808
  %v739 = vunpack.c.0.s8 %v738
  %v740 = vlaneseq
  %v741 = vshrl.u32 %v740, 7
  %v742 = vsub.s32 %v739, %v741
  %v743 = vrot.slane %v729, %v742
  %v744 = vcombine.low %v736, %v743
  %v745 = vcombine.low %v656, %v663
  %v746 = vcombine.low %v670, %v677
  %v748 = vunpack.c.l.s4 1983009808
  %v749 = vunpack.c.0.s8 %v748
  %v750 = vlaneseq
  %v751 = vshrl.u32 %v750, 7
  %v752 = vsub.s32 %v749, %v751
  %v753 = vrot.slane %v745, %v752
  %v755 = vunpack.c.l.s4 1983009808
  %v756 = vunpack.c.0.s8 %v755
  %v757 = vlaneseq
  %v758 = vshrl.u32 %v757, 7
  %v759 = vsub.s32 %v756, %v758
  %v760 = vrot.slane %v746, %v759
  %v761 = vcombine.low %v753, %v760
  %vm762 = vcmask 1044484
  %v763 = vsel %vm762, %v710, %v710
  %vm764 = vcmask 1046534
  %v765 = vsel %vm764, %v710, %v763
  %v766 = vrot.slane %v744, 7
  %vm767 = vcmask 1041409
  %v768 = vsel %vm767, %v766, %v765
  %vm769 = vcmask 1043459
  %v770 = vsel %vm769, %v766, %v768
  %vm771 = vcmask 1045509
  %v772 = vsel %vm771, %v766, %v770
  %vm773 = vcmask 1047559
  %v774 = vsel %vm773, %v766, %v772
  %v775 = vsel %vm762, %v727, %v727
  %v776 = vsel %vm764, %v727, %v775
  %v777 = vrot.slane %v761, 7
  %v778 = vsel %vm767, %v777, %v776
  %v779 = vsel %vm769, %v777, %v778
  %v780 = vsel %vm771, %v777, %v779
  %v781 = vsel %vm773, %v777, %v780
  %784 = vst [vmem:[%s3] sm:$0xff] %v774
  %785 = vst [vmem:[%s3 + $0x8] sm:$0xff] %v781
  // Predicated region
  $region14: #{pointnet2_forward.7} parent=0 // pred_check
    _
  $region15: #{pointnet2_forward.7} parent=0 // pred_check_branch
    %787 = sbr.rel (0) target = $region17
  $region16: #{pointnet2_forward.7} parent=0 // pred_region
    _
  $region17: #{pointnet2_forward.7} parent=0 // pred_fallthru
    _
  // Predicated region
  $region18: #{pointnet2_forward.7} parent=0 // pred_check
    _
  $region19: #{pointnet2_forward.7} parent=0 // pred_check_branch
    %789 = sbr.rel (0) target = $region21
  $region20: #{pointnet2_forward.7} parent=0 // pred_region
    _
  $region21: #{pointnet2_forward.7} parent=0 // pred_fallthru
    _

</llo_original>
